<compile_context>
chip_gen: v5e
topology: v5e:2x2
jax: 0.10.0
libtpu: 0.0.40
codegen_flags: <defaults>
</compile_context>

<pallas_src>
import functools
import math

import jax
import jax.numpy as jnp
from jax import lax
from jax.experimental import pallas as pl
from jax.experimental.pallas import tpu as pltpu


def _cdiv(a, b):
    return -(-a // b)


def _round_up(x, m):
    return _cdiv(x, m) * m


def _choose_row_tile(n_rows, row_bytes, *, vmem_budget=8 << 20, max_rows=4096,
                     min_grid=2):
    """Largest multiple-of-8 row tile fitting ~4 double-buffered buffers in
    `vmem_budget`, while keeping at least `min_grid` grid steps when possible
    (so v7x's two TensorCores both get work)."""
    t = vmem_budget // (4 * row_bytes)
    t = max(8, (t // 8) * 8)
    t = min(t, max_rows)
    t = min(t, _round_up(n_rows, 8))
    if n_rows > 8 * min_grid:
        t = min(t, _round_up(_cdiv(n_rows, min_grid), 8))
    return max(8, t)


# ----------------------------------------------------------------------------
# Kernel 1: LayerNorm over the channel dim, tiled over rows.
# ----------------------------------------------------------------------------
def _layernorm_kernel(x_ref, g_ref, b_ref, o_ref, *, eps):
    x = x_ref[...].astype(jnp.float32)
    mean = jnp.mean(x, axis=-1, keepdims=True)
    xc = x - mean
    var = jnp.mean(xc * xc, axis=-1, keepdims=True)
    inv = lax.rsqrt(var + eps)
    y = xc * inv * g_ref[...].astype(jnp.float32) + b_ref[...].astype(jnp.float32)
    o_ref[...] = y.astype(o_ref.dtype)


def layernorm_rows(x2d, gamma, beta, *, eps=1e-5):
    R, C = x2d.shape
    tr = _choose_row_tile(R, C * 4)
    Rp = _round_up(R, tr)
    if Rp != R:
        x2d = jnp.pad(x2d, ((0, Rp - R), (0, 0)))
    out = pl.pallas_call(
        functools.partial(_layernorm_kernel, eps=eps),
        out_shape=jax.ShapeDtypeStruct((Rp, C), x2d.dtype),
        grid=(Rp // tr,),
        in_specs=[
            pl.BlockSpec((tr, C), lambda i: (i, 0)),
            pl.BlockSpec((1, C), lambda i: (0, 0)),
            pl.BlockSpec((1, C), lambda i: (0, 0)),
        ],
        out_specs=pl.BlockSpec((tr, C), lambda i: (i, 0)),
        compiler_params=pltpu.CompilerParams(
            dimension_semantics=("parallel",),
            vmem_limit_bytes=32 * 1024 * 1024,
        ),
        cost_estimate=pl.CostEstimate(
            flops=8 * Rp * C,
            transcendentals=Rp,
            bytes_accessed=2 * Rp * C * 4 + 2 * C * 4,
        ),
    )(x2d, gamma.reshape(1, C), beta.reshape(1, C))
    return out[:R] if Rp != R else out


# ----------------------------------------------------------------------------
# Kernel 2: conv-as-im2col matmul + bias on the MXU (lane-dense output).
# ----------------------------------------------------------------------------
def _matmul_bias_kernel(p_ref, w_ref, b_ref, o_ref):
    acc = jnp.dot(p_ref[...], w_ref[...], preferred_element_type=jnp.float32)
    acc = acc + b_ref[...].astype(jnp.float32)
    o_ref[...] = acc.astype(o_ref.dtype)


def matmul_bias(patches, wmat, bias):
    N, K = patches.shape
    _, E = wmat.shape
    tm = _choose_row_tile(N, (K + E) * 4)
    Np = _round_up(N, tm)
    if Np != N:
        patches = jnp.pad(patches, ((0, Np - N), (0, 0)))
    out = pl.pallas_call(
        _matmul_bias_kernel,
        out_shape=jax.ShapeDtypeStruct((Np, E), patches.dtype),
        grid=(Np // tm,),
        in_specs=[
            pl.BlockSpec((tm, K), lambda i: (i, 0)),
            pl.BlockSpec((K, E), lambda i: (0, 0)),
            pl.BlockSpec((1, E), lambda i: (0, 0)),
        ],
        out_specs=pl.BlockSpec((tm, E), lambda i: (i, 0)),
        compiler_params=pltpu.CompilerParams(
            dimension_semantics=("parallel",),
            vmem_limit_bytes=32 * 1024 * 1024,
        ),
        cost_estimate=pl.CostEstimate(
            flops=2 * Np * K * E,
            transcendentals=0,
            bytes_accessed=(Np * K + K * E + Np * E) * 4,
        ),
    )(patches, wmat, bias.reshape(1, E))
    return out[:N] if Np != N else out


# ----------------------------------------------------------------------------
# Full WordAggregation forward.
# ----------------------------------------------------------------------------
def word_aggregation_forward(x, gamma, beta, conv_w, conv_b, *,
                             H_out, W_out, H_in, W_in, stride=2, eps=1e-5):
    B_N, M, C = x.shape
    assert M == H_in * W_in and B_N % (H_out * W_out) == 0
    B = B_N // (H_out * W_out)
    E = conv_w.shape[0]
    k = 2 * stride - 1
    pad = stride - 1

    # 1) LayerNorm over C (Pallas kernel).
    xn = layernorm_rows(x.reshape(B_N * M, C), gamma, beta, eps=eps)
    xn = xn.reshape(B, H_out, W_out, H_in, W_in, C)

    # 2) 2x2 window-merge shuffle (pure indexing, JAX glue; channels stay last).
    # TODO(synk): this rearrangement + im2col is data movement only; it is done
    # as XLA glue rather than inside Pallas.
    if (H_out % 2) or (W_out % 2):
        xn = jnp.pad(xn, ((0, 0), (0, H_out % 2), (0, W_out % 2),
                          (0, 0), (0, 0), (0, 0)))
    Ho2 = (H_out + H_out % 2) // 2
    Wo2 = (W_out + W_out % 2) // 2
    x1 = xn[:, 0::2, 0::2]
    x2 = xn[:, 1::2, 0::2]
    x3 = xn[:, 0::2, 1::2]
    x4 = xn[:, 1::2, 1::2]
    merged = jnp.concatenate(
        [jnp.concatenate([x1, x2], axis=3), jnp.concatenate([x3, x4], axis=3)],
        axis=4)
    B2 = B * Ho2 * Wo2
    Hm, Wm = 2 * H_in, 2 * W_in
    merged = merged.reshape(B2, Hm, Wm, C)          # NHWC, no NCHW pass

    # 3) im2col for the k x k, stride-s conv (indexing only).
    OH = (Hm + 2 * pad - k) // stride + 1
    OW = (Wm + 2 * pad - k) // stride + 1
    ypad = jnp.pad(merged, ((0, 0), (pad, pad), (pad, pad), (0, 0)))
    taps = []
    for kh in range(k):
        for kw in range(k):
            taps.append(lax.slice(
                ypad,
                (0, kh, kw, 0),
                (B2, kh + (OH - 1) * stride + 1, kw + (OW - 1) * stride + 1, C),
                (1, stride, stride, 1)))
    patches = jnp.concatenate(taps, axis=-1).reshape(B2 * OH * OW, k * k * C)

    # 4) Conv = one big MXU matmul + bias (Pallas kernel).
    wmat = jnp.transpose(conv_w, (2, 3, 1, 0)).reshape(k * k * C, E)
    out = matmul_bias(patches, wmat, conv_b)

    return out.reshape(B2, OH * OW, E)              # == [B', M, dim_out] for stride=2


# ----------------------------------------------------------------------------
# Pure-JAX reference (LayerNorm + lax.conv) for correctness checking.
# ----------------------------------------------------------------------------
def reference_forward(x, gamma, beta, conv_w, conv_b, *,
                      H_out, W_out, H_in, W_in, stride=2, eps=1e-5):
    B_N, M, C = x.shape
    B = B_N // (H_out * W_out)
    E = conv_w.shape[0]
    k = 2 * stride - 1
    pad = stride - 1
    mean = jnp.mean(x, axis=-1, keepdims=True)
    var = jnp.mean((x - mean) ** 2, axis=-1, keepdims=True)
    xn = (x - mean) / jnp.sqrt(var + eps) * gamma + beta
    xn = xn.reshape(B, H_out, W_out, H_in, W_in, C)
    if (H_out % 2) or (W_out % 2):
        xn = jnp.pad(xn, ((0, 0), (0, H_out % 2), (0, W_out % 2),
                          (0, 0), (0, 0), (0, 0)))
    x1 = xn[:, 0::2, 0::2]
    x2 = xn[:, 1::2, 0::2]
    x3 = xn[:, 0::2, 1::2]
    x4 = xn[:, 1::2, 1::2]
    merged = jnp.concatenate(
        [jnp.concatenate([x1, x2], axis=3), jnp.concatenate([x3, x4], axis=3)],
        axis=4)
    merged = merged.reshape(-1, 2 * H_in, 2 * W_in, C).transpose(0, 3, 1, 2)
    y = lax.conv_general_dilated(
        merged, conv_w, window_strides=(stride, stride),
        padding=((pad, pad), (pad, pad)),
        dimension_numbers=("NCHW", "OIHW", "NCHW"),
        precision=lax.Precision.HIGHEST)
    y = y + conv_b.reshape(1, E, 1, 1)
    B2 = y.shape[0]
    return y.reshape(B2, E, -1).transpose(0, 2, 1)


if __name__ == "__main__":
    # Small shapes consistent with the module (stride=2 default).
    dim_in, dim_out, stride = 64, 128, 2
    B, H_out, W_out, H_in, W_in = 2, 4, 4, 8, 8
    M = H_in * W_in
    B_N = B * H_out * W_out
    k = 2 * stride - 1

    key = jax.random.PRNGKey(0)
    kx, kg, kb, kw, kc = jax.random.split(key, 5)

    x = jax.random.normal(kx, (B_N, M, dim_in), dtype=jnp.float32)
    gamma = 1.0 + 0.1 * jax.random.normal(kg, (dim_in,), dtype=jnp.float32)
    beta = 0.1 * jax.random.normal(kb, (dim_in,), dtype=jnp.float32)

    bound = 1.0 / math.sqrt(dim_in * k * k)   # torch Conv2d default init bound
    conv_w = jax.random.uniform(kw, (dim_out, dim_in, k, k),
                                minval=-bound, maxval=bound, dtype=jnp.float32)
    conv_b = jax.random.uniform(kc, (dim_out,),
                                minval=-bound, maxval=bound, dtype=jnp.float32)

    fwd = jax.jit(functools.partial(
        word_aggregation_forward,
        H_out=H_out, W_out=W_out, H_in=H_in, W_in=W_in, stride=stride, eps=1e-5))

    out = fwd(x, gamma, beta, conv_w, conv_b)
    out = jax.block_until_ready(out)

    ref = reference_forward(x, gamma, beta, conv_w, conv_b,
                            H_out=H_out, W_out=W_out, H_in=H_in, W_in=W_in,
                            stride=stride, eps=1e-5)

    B2 = B * ((H_out + H_out % 2) // 2) * ((W_out + W_out % 2) // 2)
    assert out.shape == (B2, M, dim_out), out.shape
    assert jnp.allclose(out, ref, atol=2e-2, rtol=2e-2), "mismatch vs reference"

    print("KERNEL_OK")
</pallas_src>

<mosaic_0001>
module attributes {stable_mosaic.version = 11 : i64} {
  func.func @_layernorm_kernel(%arg0: i32, %arg1: memref<1024x64xf32, #tpu.memory_space<vmem>>, %arg2: memref<1x64xf32, #tpu.memory_space<vmem>>, %arg3: memref<1x64xf32, #tpu.memory_space<vmem>>, %arg4: memref<1024x64xf32, #tpu.memory_space<vmem>>) attributes {dimension_semantics = [#tpu.dimension_semantics<parallel>], iteration_bounds = array<i64: 2>, scalar_prefetch = 0 : i64, scratch_operands = 0 : i64, tpu.core_type = #tpu.core_type<tc>, window_params = [{transform_indices = @transform_0, window_bounds = array<i64: 1024, 64>}, {pipeline_mode = #tpu.pipeline_mode<synchronous>, transform_indices = @transform_1, window_bounds = array<i64: 1, 64>}, {pipeline_mode = #tpu.pipeline_mode<synchronous>, transform_indices = @transform_2, window_bounds = array<i64: 1, 64>}, {transform_indices = @transform_3, window_bounds = array<i64: 1024, 64>}]} {
    %c0 = arith.constant 0 : index
    %c0_0 = arith.constant 0 : index
    %0 = vector.load %arg1[%c0, %c0_0] : memref<1024x64xf32, #tpu.memory_space<vmem>>, vector<1024x64xf32>
    %cst = arith.constant dense<0.000000e+00> : vector<1024xf32>
    %1 = vector.multi_reduction <add>, %0, %cst [1] : vector<1024x64xf32> to vector<1024xf32>
    %2 = vector.shape_cast %1 : vector<1024xf32> to vector<1024x1xf32>
    %cst_1 = arith.constant 6.400000e+01 : f32
    %3 = vector.broadcast %cst_1 : f32 to vector<1024x1xf32>
    %4 = arith.divf %2, %3 : vector<1024x1xf32>
    %5 = vector.broadcast %4 : vector<1024x1xf32> to vector<1024x64xf32>
    %6 = arith.subf %0, %5 : vector<1024x64xf32>
    %7 = arith.mulf %6, %6 : vector<1024x64xf32>
    %cst_2 = arith.constant dense<0.000000e+00> : vector<1024xf32>
    %8 = vector.multi_reduction <add>, %7, %cst_2 [1] : vector<1024x64xf32> to vector<1024xf32>
    %9 = vector.shape_cast %8 : vector<1024xf32> to vector<1024x1xf32>
    %cst_3 = arith.constant 6.400000e+01 : f32
    %10 = vector.broadcast %cst_3 : f32 to vector<1024x1xf32>
    %11 = arith.divf %9, %10 : vector<1024x1xf32>
    %cst_4 = arith.constant 9.99999974E-6 : f32
    %12 = vector.broadcast %cst_4 : f32 to vector<1024x1xf32>
    %13 = arith.addf %11, %12 : vector<1024x1xf32>
    %14 = math.rsqrt %13 : vector<1024x1xf32>
    %15 = vector.broadcast %14 : vector<1024x1xf32> to vector<1024x64xf32>
    %16 = arith.mulf %6, %15 : vector<1024x64xf32>
    %c0_5 = arith.constant 0 : index
    %c0_6 = arith.constant 0 : index
    %17 = vector.load %arg2[%c0_5, %c0_6] : memref<1x64xf32, #tpu.memory_space<vmem>>, vector<1x64xf32>
    %18 = vector.broadcast %17 : vector<1x64xf32> to vector<1024x64xf32>
    %19 = arith.mulf %16, %18 : vector<1024x64xf32>
    %c0_7 = arith.constant 0 : index
    %c0_8 = arith.constant 0 : index
    %20 = vector.load %arg3[%c0_7, %c0_8] : memref<1x64xf32, #tpu.memory_space<vmem>>, vector<1x64xf32>
    %21 = vector.broadcast %20 : vector<1x64xf32> to vector<1024x64xf32>
    %22 = arith.addf %19, %21 : vector<1024x64xf32>
    %c0_9 = arith.constant 0 : index
    %c0_10 = arith.constant 0 : index
    %23 = vector.load %arg4[%c0_9, %c0_10] : memref<1024x64xf32, #tpu.memory_space<vmem>>, vector<1024x64xf32>
    tpu.vector_store %arg4[%c0_9, %c0_10], %22 {strides = array<i32>} : memref<1024x64xf32, #tpu.memory_space<vmem>>, vector<1024x64xf32>,
    return
  }
  func.func @transform_0(%arg0: i32) -> (i32, i32) {
    %c0_i32 = arith.constant 0 : i32
    %c0_i32_0 = arith.constant 0 : i32
    return %arg0, %c0_i32 : i32, i32
  }
  func.func @transform_1(%arg0: i32) -> (i32, i32) {
    %c0_i32 = arith.constant 0 : i32
    %c0_i32_0 = arith.constant 0 : i32
    %c0_i32_1 = arith.constant 0 : i32
    return %c0_i32, %c0_i32_0 : i32, i32
  }
  func.func @transform_2(%arg0: i32) -> (i32, i32) {
    %c0_i32 = arith.constant 0 : i32
    %c0_i32_0 = arith.constant 0 : i32
    %c0_i32_1 = arith.constant 0 : i32
    return %c0_i32, %c0_i32_0 : i32, i32
  }
  func.func @transform_3(%arg0: i32) -> (i32, i32) {
    %c0_i32 = arith.constant 0 : i32
    %c0_i32_0 = arith.constant 0 : i32
    return %arg0, %c0_i32 : i32, i32
  }
}

module attributes {stable_mosaic.version = 11 : i64} {
  func.func @_matmul_bias_kernel(%arg0: i32, %arg1: memref<256x576xf32, #tpu.memory_space<vmem>>, %arg2: memref<576x128xf32, #tpu.memory_space<vmem>>, %arg3: memref<1x128xf32, #tpu.memory_space<vmem>>, %arg4: memref<256x128xf32, #tpu.memory_space<vmem>>) attributes {dimension_semantics = [#tpu.dimension_semantics<parallel>], iteration_bounds = array<i64: 2>, scalar_prefetch = 0 : i64, scratch_operands = 0 : i64, tpu.core_type = #tpu.core_type<tc>, window_params = [{transform_indices = @transform_0, window_bounds = array<i64: 256, 576>}, {pipeline_mode = #tpu.pipeline_mode<synchronous>, transform_indices = @transform_1, window_bounds = array<i64: 576, 128>}, {pipeline_mode = #tpu.pipeline_mode<synchronous>, transform_indices = @transform_2, window_bounds = array<i64: 1, 128>}, {transform_indices = @transform_3, window_bounds = array<i64: 256, 128>}]} {
    %c0 = arith.constant 0 : index
    %c0_0 = arith.constant 0 : index
    %0 = vector.load %arg1[%c0, %c0_0] : memref<256x576xf32, #tpu.memory_space<vmem>>, vector<256x576xf32>
    %c0_1 = arith.constant 0 : index
    %c0_2 = arith.constant 0 : index
    %1 = vector.load %arg2[%c0_1, %c0_2] : memref<576x128xf32, #tpu.memory_space<vmem>>, vector<576x128xf32>
    %cst = arith.constant dense<0.000000e+00> : vector<256x128xf32>
    %2 = tpu.matmul %0, %1, %cst {dimension_numbers = #tpu.dot_dimension_numbers<[1], [0], [0], [1], [0, 0, 1, 1], [], []>} : vector<256x576xf32>, vector<576x128xf32>, vector<256x128xf32> -> vector<256x128xf32>
    %c0_3 = arith.constant 0 : index
    %c0_4 = arith.constant 0 : index
    %3 = vector.load %arg3[%c0_3, %c0_4] : memref<1x128xf32, #tpu.memory_space<vmem>>, vector<1x128xf32>
    %4 = vector.broadcast %3 : vector<1x128xf32> to vector<256x128xf32>
    %5 = arith.addf %2, %4 : vector<256x128xf32>
    %c0_5 = arith.constant 0 : index
    %c0_6 = arith.constant 0 : index
    %6 = vector.load %arg4[%c0_5, %c0_6] : memref<256x128xf32, #tpu.memory_space<vmem>>, vector<256x128xf32>
    tpu.vector_store %arg4[%c0_5, %c0_6], %5 {strides = array<i32>} : memref<256x128xf32, #tpu.memory_space<vmem>>, vector<256x128xf32>,
    return
  }
  func.func @transform_0(%arg0: i32) -> (i32, i32) {
    %c0_i32 = arith.constant 0 : i32
    %c0_i32_0 = arith.constant 0 : i32
    return %arg0, %c0_i32 : i32, i32
  }
  func.func @transform_1(%arg0: i32) -> (i32, i32) {
    %c0_i32 = arith.constant 0 : i32
    %c0_i32_0 = arith.constant 0 : i32
    %c0_i32_1 = arith.constant 0 : i32
    return %c0_i32, %c0_i32_0 : i32, i32
  }
  func.func @transform_2(%arg0: i32) -> (i32, i32) {
    %c0_i32 = arith.constant 0 : i32
    %c0_i32_0 = arith.constant 0 : i32
    %c0_i32_1 = arith.constant 0 : i32
    return %c0_i32, %c0_i32_0 : i32, i32
  }
  func.func @transform_3(%arg0: i32) -> (i32, i32) {
    %c0_i32 = arith.constant 0 : i32
    %c0_i32_0 = arith.constant 0 : i32
    return %arg0, %c0_i32 : i32, i32
  }
}

</mosaic_0001>

<llo_original>
// kernel: word_aggregation_forward.3
$region0: #{word_aggregation_forward.3}
  #allocation0 [shape = 'u32[]', space=smem, size = 0x4, offset = 0x4, fixed_abs, tag = 'smem constant byte address 0x4 - core index']
  #allocation1 [shape = 'u32[72,128]{1,0:T(1,128)}', space=vmem, size = 0x9000, scoped, tag = 'internal scratch']
  %s0 = inlined_call_operand.vmem [shape: f32[512,576], index: 0, kind: input, shape index: {}]
  %s1 = inlined_call_operand.vmem [shape: f32[576,128], index: 1, kind: input, shape index: {}]
  %s2 = inlined_call_operand.vmem [shape: f32[1,128], index: 2, kind: input, shape index: {}]
  %s3 = inlined_call_operand.hbm [shape: f32[512,128], index: 3, kind: output, shape index: {}]
  %s4 = sld [smem:[#allocation0]]
  $region45: #{word_aggregation_forward.3} parent=0
    _
  %s6 = ssub.s32 1, %s4
  %s7 = scalar_select 0, %s6, %s4
  $region1: #{word_aggregation_forward.3} parent=0
    #allocation2 [shape = 'u8[262144]{0}', space=vmem, size = 0x40000, scoped, tag = 'output window, operand 0']
    #allocation3 [shape = 's32[2]{0}', space=sflag, size = 0x8, scoped, tag = 'scoped memory for word_aggregation_forward.3']
    %8 = vsyncpa [#allocation3], 0
    %s9 = scalar_lea.sflag [#allocation3], 1
    %10 = vsyncpa %s9, 0
    loop: start=0, step=1, limit=4
    $region2: #{word_aggregation_forward.3} parent=1 // loop_pre_header
      _
    $region3: #{word_aggregation_forward.3} parent=1 // loop_header
      %s12 = sphi 0, %s16
      %p13 = scmp.ge.s32.totalorder %s12, 4
      %s22 = sphi 0, %s24
      %s25 = sphi 0, %s22
      %s26 = sphi 0, %s25
      %s42 = sphi 0, %s26
      %s46 = sphi 0, %s46
      %s48 = sphi 0, %s46
      %s49 = sphi 0, %s48
      %s63 = sphi 0, %s49
      %s67 = sphi 0, %s67
      %s69 = sphi 0, %s67
      %s70 = sphi 0, %s69
      %s84 = sphi 0, %s70
      %s90 = sphi 0, %s92
      %s93 = sphi 0, %s90
      %s94 = sphi 0, %s93
      %s110 = sphi 0, %s94
    $region4: #{word_aggregation_forward.3} parent=1 // loop_header_branch
      %15 = sbr.rel (%p13) target = $region8
    $region5: #{word_aggregation_forward.3} parent=1 // loop_body
      %s17 = ssub.s32 %s12, 1
      %s18 = ssub.s32 %s12, 2
      %s19 = sadd.s32 %s12, 1
      %s20 = ssub.s32 %s12, %s19
      %p21 = scmp.eq.s32.totalorder %s20, 0
      %s23 = sadd.s32 %s22, 1
      %s24 = scalar_select %p21, %s22, %s23
      %p27 = pneg %p21
      %p28 = scmp.eq.s32.totalorder %s12, 1
      %p29 = por %p27, %p28
      %p30 = scmp.ne.s32.totalorder %s22, %s25
      %p31 = scmp.eq.s32.totalorder %s12, 0
      %p32 = por %p30, %p31
      %p33 = scmp.ne.s32.totalorder %s22, %s25
      %p34 = scmp.eq.s32.totalorder %s17, 1
      %p35 = por %p33, %p34
      %p36 = scmp.ne.s32.totalorder %s25, %s26
      %p37 = scmp.eq.s32.totalorder %s17, 0
      %p38 = por %p36, %p37
      %p39 = scmp.ne.s32.totalorder %s25, %s26
      %p40 = scmp.eq.s32.totalorder %s18, 1
      %p41 = por %p39, %p40
      %p43 = scmp.ne.s32.totalorder %s26, %s42
      %p44 = scmp.eq.s32.totalorder %s18, 0
      %p45 = por %p43, %p44
      %s47 = sadd.s32 %s46, 1
      %p50 = scmp.eq.s32.totalorder %s12, 1
      %p51 = scmp.ne.s32.totalorder %s46, %s48
      %p52 = scmp.eq.s32.totalorder %s12, 0
      %p53 = por %p51, %p52
      %p54 = scmp.ne.s32.totalorder %s46, %s48
      %p55 = scmp.eq.s32.totalorder %s17, 1
      %p56 = por %p54, %p55
      %p57 = scmp.ne.s32.totalorder %s48, %s49
      %p58 = scmp.eq.s32.totalorder %s17, 0
      %p59 = por %p57, %p58
      %p60 = scmp.ne.s32.totalorder %s48, %s49
      %p61 = scmp.eq.s32.totalorder %s18, 1
      %p62 = por %p60, %p61
      %p64 = scmp.ne.s32.totalorder %s49, %s63
      %p65 = scmp.eq.s32.totalorder %s18, 0
      %p66 = por %p64, %p65
      %s68 = sadd.s32 %s67, 1
      %p71 = scmp.eq.s32.totalorder %s12, 1
      %p72 = scmp.ne.s32.totalorder %s67, %s69
      %p73 = scmp.eq.s32.totalorder %s12, 0
      %p74 = por %p72, %p73
      %p75 = scmp.ne.s32.totalorder %s67, %s69
      %p76 = scmp.eq.s32.totalorder %s17, 1
      %p77 = por %p75, %p76
      %p78 = scmp.ne.s32.totalorder %s69, %s70
      %p79 = scmp.eq.s32.totalorder %s17, 0
      %p80 = por %p78, %p79
      %p81 = scmp.ne.s32.totalorder %s69, %s70
      %p82 = scmp.eq.s32.totalorder %s18, 1
      %p83 = por %p81, %p82
      %p85 = scmp.ne.s32.totalorder %s70, %s84
      %p86 = scmp.eq.s32.totalorder %s18, 0
      %p87 = por %p85, %p86
      %s88 = ssub.s32 %s12, %s19
      %p89 = scmp.eq.s32.totalorder %s88, 0
      %s91 = sadd.s32 %s90, 1
      %s92 = scalar_select %p89, %s90, %s91
      %p95 = pneg %p89
      %p96 = scmp.eq.s32.totalorder %s12, 1
      %p97 = por %p95, %p96
      %p98 = scmp.ne.s32.totalorder %s90, %s93
      %p99 = scmp.eq.s32.totalorder %s12, 0
      %p100 = por %p98, %p99
      %p101 = scmp.ne.s32.totalorder %s90, %s93
      %p102 = scmp.eq.s32.totalorder %s17, 1
      %p103 = por %p101, %p102
      %p104 = scmp.ne.s32.totalorder %s93, %s94
      %p105 = scmp.eq.s32.totalorder %s17, 0
      %p106 = por %p104, %p105
      %p107 = scmp.ne.s32.totalorder %s93, %s94
      %p108 = scmp.eq.s32.totalorder %s18, 1
      %p109 = por %p107, %p108
      %p111 = scmp.ne.s32.totalorder %s94, %s110
      %p112 = scmp.eq.s32.totalorder %s18, 0
      %p113 = por %p111, %p112
      %p114 = scmp.le.s32.totalorder 1, %s12
      %p115 = scmp.lt.s32.totalorder %s12, 3
      %p116 = pnand %p114, %p115
      %p117 = pneg %p116
      // Predicated region
      $region9: #{word_aggregation_forward.3} parent=5 // pred_check
        _
      $region10: #{word_aggregation_forward.3} parent=5 // pred_check_branch
        %119 = sbr.rel (%p116) target = $region12
      $region11: #{word_aggregation_forward.3} parent=5 // pred_region
        %s120 = ssub.s32 %s12, 1
        // Predicated region
        $region13: #{word_aggregation_forward.3} parent=11 // pred_check
          %p121 = pneg %p59
        $region14: #{word_aggregation_forward.3} parent=11 // pred_check_branch
          %123 = sbr.rel (%p121) target = $region16
        $region15: #{word_aggregation_forward.3} parent=11 // pred_region
          _
        $region16: #{word_aggregation_forward.3} parent=11 // pred_fallthru
          _
        // Predicated region
        $region17: #{word_aggregation_forward.3} parent=11 // pred_check
          %p124 = pneg %p80
        $region18: #{word_aggregation_forward.3} parent=11 // pred_check_branch
          %126 = sbr.rel (%p124) target = $region20
        $region19: #{word_aggregation_forward.3} parent=11 // pred_region
          _
        $region20: #{word_aggregation_forward.3} parent=11 // pred_fallthru
          _
      $region12: #{word_aggregation_forward.3} parent=5 // pred_fallthru
        _
      %p127 = scmp.lt.s32.totalorder %s12, 2
      // Predicated region
      $region21: #{word_aggregation_forward.3} parent=5 // pred_check
        %p128 = pneg %p127
      $region22: #{word_aggregation_forward.3} parent=5 // pred_check_branch
        %130 = sbr.rel (%p128) target = $region24
      $region23: #{word_aggregation_forward.3} parent=5 // pred_region
        // Predicated region
        $region25: #{word_aggregation_forward.3} parent=23 // pred_check
          %p131 = pneg %p32
        $region26: #{word_aggregation_forward.3} parent=23 // pred_check_branch
          %133 = sbr.rel (%p131) target = $region28
        $region27: #{word_aggregation_forward.3} parent=23 // pred_region
          %s134 = smul.u32 32, %s12
          %p135 = scmp.lt.s32.totalorder %s134, 63
          %s136 = scalar_select %p135, %s134, 63
          %s137 = smul.addr %s136, 5
          %s138 = smul.addr %s137, 8
          %s139 = scalar_lea.vmem %s0, %s138
          %s140 = smul.u32 32, %s12
        $region28: #{word_aggregation_forward.3} parent=23 // pred_fallthru
          _
      $region24: #{word_aggregation_forward.3} parent=5 // pred_fallthru
        _
      %p141 = scmp.le.s32.totalorder 1, %s12
      %p142 = scmp.lt.s32.totalorder %s12, 3
      %p143 = pnand %p141, %p142
      %p144 = pneg %p143
      // Predicated region
      $region29: #{word_aggregation_forward.3} parent=5 // pred_check
        _
      $region30: #{word_aggregation_forward.3} parent=5 // pred_check_branch
        %146 = sbr.rel (%p143) target = $region32
      $region31: #{word_aggregation_forward.3} parent=5 // pred_region
        %s147 = ssub.s32 %s12, 1
        %s148 = smul.u32 32, %s17
        %p149 = scmp.lt.s32.totalorder %s148, 63
        %s150 = scalar_select %p149, %s148, 63
        %s151 = smul.addr %s150, 5
        %s152 = smul.addr %s151, 8
        %s153 = scalar_lea.vmem %s0, %s152
        %p154 = pneg %p38
        %p155 = pneg %p35
        %p156 = pneg %p59
        %p157 = pneg %p56
        %p158 = pneg %p80
        %p159 = pneg %p77
        %p160 = pneg %p106
        %p161 = pneg %p103
        %s162 = sand.u32 %s93, 1
        %s163 = scalar_lea.sflag [#allocation3], %s162
        %s164 = sand.u32 %s93, 1
        %s165 = smul.addr %s164, 256
        %s166 = scalar_lea.vmem [#allocation2], %s165
        %s167 = smul.u32 32, %s17
        %p168 = scmp.lt.s32.totalorder %s167, 63
        %s169 = scalar_select %p168, %s167, 63
        %s170 = smul.addr %s169, 5
        %s171 = smul.addr %s170, 8
        %s172 = scalar_lea.vmem %s0, %s171
        %s173 = smul.u32 32, %s17
        %s174 = smul.u32 32, %s17
        %v175 = vld [vmem:[%s172] sm:$0xff]
        %v176 = vld [vmem:[%s172 + $0x8] sm:$0xff]
        %v177 = vld [vmem:[%s172 + $0x10] sm:$0xff]
        %v178 = vld [vmem:[%s172 + $0x18] sm:$0xff]
        %v179 = vld [vmem:[%s172 + $0x20] sm:$0xff]
        %v180 = vld [vmem:[%s172 + $0x28] sm:$0xff]
        %v181 = vld [vmem:[%s172 + $0x30] sm:$0xff]
        %v182 = vld [vmem:[%s172 + $0x38] sm:$0xff]
        %v183 = vld [vmem:[%s172 + $0x40] sm:$0xff]
        %v184 = vld [vmem:[%s172 + $0x48] sm:$0xff]
        %v185 = vld [vmem:[%s172 + $0x50] sm:$0xff]
        %v186 = vld [vmem:[%s172 + $0x58] sm:$0xff]
        %v187 = vld [vmem:[%s172 + $0x60] sm:$0xff]
        %v188 = vld [vmem:[%s172 + $0x68] sm:$0xff]
        %v189 = vld [vmem:[%s172 + $0x70] sm:$0xff]
        %v190 = vld [vmem:[%s172 + $0x78] sm:$0xff]
        %v191 = vld [vmem:[%s172 + $0x80] sm:$0xff]
        %v192 = vld [vmem:[%s172 + $0x88] sm:$0xff]
        %v193 = vld [vmem:[%s172 + $0x90] sm:$0xff]
        %v194 = vld [vmem:[%s172 + $0x98] sm:$0xff]
        %v195 = vld [vmem:[%s172 + $0xa0] sm:$0xff]
        %v196 = vld [vmem:[%s172 + $0xa8] sm:$0xff]
        %v197 = vld [vmem:[%s172 + $0xb0] sm:$0xff]
        %v198 = vld [vmem:[%s172 + $0xb8] sm:$0xff]
        %v199 = vld [vmem:[%s172 + $0xc0] sm:$0xff]
        %v200 = vld [vmem:[%s172 + $0xc8] sm:$0xff]
        %v201 = vld [vmem:[%s172 + $0xd0] sm:$0xff]
        %v202 = vld [vmem:[%s172 + $0xd8] sm:$0xff]
        %v203 = vld [vmem:[%s172 + $0xe0] sm:$0xff]
        %v204 = vld [vmem:[%s172 + $0xe8] sm:$0xff]
        %v205 = vld [vmem:[%s172 + $0xf0] sm:$0xff]
        %v206 = vld [vmem:[%s172 + $0xf8] sm:$0xff]
        %v207 = vld [vmem:[%s172 + $0x100] sm:$0xff]
        %v208 = vld [vmem:[%s172 + $0x108] sm:$0xff]
        %v209 = vld [vmem:[%s172 + $0x110] sm:$0xff]
        %v210 = vld [vmem:[%s172 + $0x118] sm:$0xff]
        %v211 = vld [vmem:[%s172 + $0x120] sm:$0xff]
        %v212 = vld [vmem:[%s172 + $0x128] sm:$0xff]
        %v213 = vld [vmem:[%s172 + $0x130] sm:$0xff]
        %v214 = vld [vmem:[%s172 + $0x138] sm:$0xff]
        %v215 = vld [vmem:[%s172 + $0x140] sm:$0xff]
        %v216 = vld [vmem:[%s172 + $0x148] sm:$0xff]
        %v217 = vld [vmem:[%s172 + $0x150] sm:$0xff]
        %v218 = vld [vmem:[%s172 + $0x158] sm:$0xff]
        %v219 = vld [vmem:[%s172 + $0x160] sm:$0xff]
        %v220 = vld [vmem:[%s172 + $0x168] sm:$0xff]
        %v221 = vld [vmem:[%s172 + $0x170] sm:$0xff]
        %v222 = vld [vmem:[%s172 + $0x178] sm:$0xff]
        %v223 = vld [vmem:[%s172 + $0x180] sm:$0xff]
        %v224 = vld [vmem:[%s172 + $0x188] sm:$0xff]
        %v225 = vld [vmem:[%s172 + $0x190] sm:$0xff]
        %v226 = vld [vmem:[%s172 + $0x198] sm:$0xff]
        %v227 = vld [vmem:[%s172 + $0x1a0] sm:$0xff]
        %v228 = vld [vmem:[%s172 + $0x1a8] sm:$0xff]
        %v229 = vld [vmem:[%s172 + $0x1b0] sm:$0xff]
        %v230 = vld [vmem:[%s172 + $0x1b8] sm:$0xff]
        %v231 = vld [vmem:[%s172 + $0x1c0] sm:$0xff]
        %v232 = vld [vmem:[%s172 + $0x1c8] sm:$0xff]
        %v233 = vld [vmem:[%s172 + $0x1d0] sm:$0xff]
        %v234 = vld [vmem:[%s172 + $0x1d8] sm:$0xff]
        %v235 = vld [vmem:[%s172 + $0x1e0] sm:$0xff]
        %v236 = vld [vmem:[%s172 + $0x1e8] sm:$0xff]
        %v237 = vld [vmem:[%s172 + $0x1f0] sm:$0xff]
        %v238 = vld [vmem:[%s172 + $0x1f8] sm:$0xff]
        %v239 = vld [vmem:[%s172 + $0x200] sm:$0xff]
        %v240 = vld [vmem:[%s172 + $0x208] sm:$0xff]
        %v241 = vld [vmem:[%s172 + $0x210] sm:$0xff]
        %v242 = vld [vmem:[%s172 + $0x218] sm:$0xff]
        %v243 = vld [vmem:[%s172 + $0x220] sm:$0xff]
        %v244 = vld [vmem:[%s172 + $0x228] sm:$0xff]
        %v245 = vld [vmem:[%s172 + $0x230] sm:$0xff]
        %v246 = vld [vmem:[%s172 + $0x238] sm:$0xff]
        %v247 = vld [vmem:[%s172 + $0x240] sm:$0xff]
        %v248 = vld [vmem:[%s172 + $0x248] sm:$0xff]
        %v249 = vld [vmem:[%s172 + $0x250] sm:$0xff]
        %v250 = vld [vmem:[%s172 + $0x258] sm:$0xff]
        %v251 = vld [vmem:[%s172 + $0x260] sm:$0xff]
        %v252 = vld [vmem:[%s172 + $0x268] sm:$0xff]
        %v253 = vld [vmem:[%s172 + $0x270] sm:$0xff]
        %v254 = vld [vmem:[%s172 + $0x278] sm:$0xff]
        %v255 = vld [vmem:[%s172 + $0x280] sm:$0xff]
        %v256 = vld [vmem:[%s172 + $0x288] sm:$0xff]
        %v257 = vld [vmem:[%s172 + $0x290] sm:$0xff]
        %v258 = vld [vmem:[%s172 + $0x298] sm:$0xff]
        %v259 = vld [vmem:[%s172 + $0x2a0] sm:$0xff]
        %v260 = vld [vmem:[%s172 + $0x2a8] sm:$0xff]
        %v261 = vld [vmem:[%s172 + $0x2b0] sm:$0xff]
        %v262 = vld [vmem:[%s172 + $0x2b8] sm:$0xff]
        %v263 = vld [vmem:[%s172 + $0x2c0] sm:$0xff]
        %v264 = vld [vmem:[%s172 + $0x2c8] sm:$0xff]
        %v265 = vld [vmem:[%s172 + $0x2d0] sm:$0xff]
        %v266 = vld [vmem:[%s172 + $0x2d8] sm:$0xff]
        %v267 = vld [vmem:[%s172 + $0x2e0] sm:$0xff]
        %v268 = vld [vmem:[%s172 + $0x2e8] sm:$0xff]
        %v269 = vld [vmem:[%s172 + $0x2f0] sm:$0xff]
        %v270 = vld [vmem:[%s172 + $0x2f8] sm:$0xff]
        %v271 = vld [vmem:[%s172 + $0x300] sm:$0xff]
        %v272 = vld [vmem:[%s172 + $0x308] sm:$0xff]
        %v273 = vld [vmem:[%s172 + $0x310] sm:$0xff]
        %v274 = vld [vmem:[%s172 + $0x318] sm:$0xff]
        %v275 = vld [vmem:[%s172 + $0x320] sm:$0xff]
        %v276 = vld [vmem:[%s172 + $0x328] sm:$0xff]
        %v277 = vld [vmem:[%s172 + $0x330] sm:$0xff]
        %v278 = vld [vmem:[%s172 + $0x338] sm:$0xff]
        %v279 = vld [vmem:[%s172 + $0x340] sm:$0xff]
        %v280 = vld [vmem:[%s172 + $0x348] sm:$0xff]
        %v281 = vld [vmem:[%s172 + $0x350] sm:$0xff]
        %v282 = vld [vmem:[%s172 + $0x358] sm:$0xff]
        %v283 = vld [vmem:[%s172 + $0x360] sm:$0xff]
        %v284 = vld [vmem:[%s172 + $0x368] sm:$0xff]
        %v285 = vld [vmem:[%s172 + $0x370] sm:$0xff]
        %v286 = vld [vmem:[%s172 + $0x378] sm:$0xff]
        %v287 = vld [vmem:[%s172 + $0x380] sm:$0xff]
        %v288 = vld [vmem:[%s172 + $0x388] sm:$0xff]
        %v289 = vld [vmem:[%s172 + $0x390] sm:$0xff]
        %v290 = vld [vmem:[%s172 + $0x398] sm:$0xff]
        %v291 = vld [vmem:[%s172 + $0x3a0] sm:$0xff]
        %v292 = vld [vmem:[%s172 + $0x3a8] sm:$0xff]
        %v293 = vld [vmem:[%s172 + $0x3b0] sm:$0xff]
        %v294 = vld [vmem:[%s172 + $0x3b8] sm:$0xff]
        %v295 = vld [vmem:[%s172 + $0x3c0] sm:$0xff]
        %v296 = vld [vmem:[%s172 + $0x3c8] sm:$0xff]
        %v297 = vld [vmem:[%s172 + $0x3d0] sm:$0xff]
        %v298 = vld [vmem:[%s172 + $0x3d8] sm:$0xff]
        %v299 = vld [vmem:[%s172 + $0x3e0] sm:$0xff]
        %v300 = vld [vmem:[%s172 + $0x3e8] sm:$0xff]
        %v301 = vld [vmem:[%s172 + $0x3f0] sm:$0xff]
        %v302 = vld [vmem:[%s172 + $0x3f8] sm:$0xff]
        %v303 = vld [vmem:[%s172 + $0x400] sm:$0xff]
        %v304 = vld [vmem:[%s172 + $0x408] sm:$0xff]
        %v305 = vld [vmem:[%s172 + $0x410] sm:$0xff]
        %v306 = vld [vmem:[%s172 + $0x418] sm:$0xff]
        %v307 = vld [vmem:[%s172 + $0x420] sm:$0xff]
        %v308 = vld [vmem:[%s172 + $0x428] sm:$0xff]
        %v309 = vld [vmem:[%s172 + $0x430] sm:$0xff]
        %v310 = vld [vmem:[%s172 + $0x438] sm:$0xff]
        %v311 = vld [vmem:[%s172 + $0x440] sm:$0xff]
        %v312 = vld [vmem:[%s172 + $0x448] sm:$0xff]
        %v313 = vld [vmem:[%s172 + $0x450] sm:$0xff]
        %v314 = vld [vmem:[%s172 + $0x458] sm:$0xff]
        %v315 = vld [vmem:[%s172 + $0x460] sm:$0xff]
        %v316 = vld [vmem:[%s172 + $0x468] sm:$0xff]
        %v317 = vld [vmem:[%s172 + $0x470] sm:$0xff]
        %v318 = vld [vmem:[%s172 + $0x478] sm:$0xff]
        %v319 = vld [vmem:[%s172 + $0x480] sm:$0xff]
        %v320 = vld [vmem:[%s172 + $0x488] sm:$0xff]
        %v321 = vld [vmem:[%s172 + $0x490] sm:$0xff]
        %v322 = vld [vmem:[%s172 + $0x498] sm:$0xff]
        %v323 = vld [vmem:[%s172 + $0x4a0] sm:$0xff]
        %v324 = vld [vmem:[%s172 + $0x4a8] sm:$0xff]
        %v325 = vld [vmem:[%s172 + $0x4b0] sm:$0xff]
        %v326 = vld [vmem:[%s172 + $0x4b8] sm:$0xff]
        %v327 = vld [vmem:[%s172 + $0x4c0] sm:$0xff]
        %v328 = vld [vmem:[%s172 + $0x4c8] sm:$0xff]
        %v329 = vld [vmem:[%s172 + $0x4d0] sm:$0xff]
        %v330 = vld [vmem:[%s172 + $0x4d8] sm:$0xff]
        %v331 = vld [vmem:[%s172 + $0x4e0] sm:$0xff]
        %v332 = vld [vmem:[%s172 + $0x4e8] sm:$0xff]
        %v333 = vld [vmem:[%s172 + $0x4f0] sm:$0xff]
        %v334 = vld [vmem:[%s172 + $0x4f8] sm:$0xff]
        %v335 = vld [vmem:[%s1] sm:$0xff]
        %v336 = vld [vmem:[%s1 + $0x8] sm:$0xff]
        %v337 = vld [vmem:[%s1 + $0x10] sm:$0xff]
        %v338 = vld [vmem:[%s1 + $0x18] sm:$0xff]
        %v339 = vld [vmem:[%s1 + $0x20] sm:$0xff]
        %v340 = vld [vmem:[%s1 + $0x28] sm:$0xff]
        %v341 = vld [vmem:[%s1 + $0x30] sm:$0xff]
        %v342 = vld [vmem:[%s1 + $0x38] sm:$0xff]
        %v343 = vld [vmem:[%s1 + $0x40] sm:$0xff]
        %v344 = vld [vmem:[%s1 + $0x48] sm:$0xff]
        %v345 = vld [vmem:[%s1 + $0x50] sm:$0xff]
        %v346 = vld [vmem:[%s1 + $0x58] sm:$0xff]
        %v347 = vld [vmem:[%s1 + $0x60] sm:$0xff]
        %v348 = vld [vmem:[%s1 + $0x68] sm:$0xff]
        %v349 = vld [vmem:[%s1 + $0x70] sm:$0xff]
        %v350 = vld [vmem:[%s1 + $0x78] sm:$0xff]
        %v351 = vld [vmem:[%s1 + $0x80] sm:$0xff]
        %v352 = vld [vmem:[%s1 + $0x88] sm:$0xff]
        %v353 = vld [vmem:[%s1 + $0x90] sm:$0xff]
        %v354 = vld [vmem:[%s1 + $0x98] sm:$0xff]
        %v355 = vld [vmem:[%s1 + $0xa0] sm:$0xff]
        %v356 = vld [vmem:[%s1 + $0xa8] sm:$0xff]
        %v357 = vld [vmem:[%s1 + $0xb0] sm:$0xff]
        %v358 = vld [vmem:[%s1 + $0xb8] sm:$0xff]
        %v359 = vld [vmem:[%s1 + $0xc0] sm:$0xff]
        %v360 = vld [vmem:[%s1 + $0xc8] sm:$0xff]
        %v361 = vld [vmem:[%s1 + $0xd0] sm:$0xff]
        %v362 = vld [vmem:[%s1 + $0xd8] sm:$0xff]
        %v363 = vld [vmem:[%s1 + $0xe0] sm:$0xff]
        %v364 = vld [vmem:[%s1 + $0xe8] sm:$0xff]
        %v365 = vld [vmem:[%s1 + $0xf0] sm:$0xff]
        %v366 = vld [vmem:[%s1 + $0xf8] sm:$0xff]
        %v367 = vld [vmem:[%s1 + $0x100] sm:$0xff]
        %v368 = vld [vmem:[%s1 + $0x108] sm:$0xff]
        %v369 = vld [vmem:[%s1 + $0x110] sm:$0xff]
        %v370 = vld [vmem:[%s1 + $0x118] sm:$0xff]
        %v371 = vld [vmem:[%s1 + $0x120] sm:$0xff]
        %v372 = vld [vmem:[%s1 + $0x128] sm:$0xff]
        %v373 = vld [vmem:[%s1 + $0x130] sm:$0xff]
        %v374 = vld [vmem:[%s1 + $0x138] sm:$0xff]
        %v375 = vld [vmem:[%s1 + $0x140] sm:$0xff]
        %v376 = vld [vmem:[%s1 + $0x148] sm:$0xff]
        %v377 = vld [vmem:[%s1 + $0x150] sm:$0xff]
        %v378 = vld [vmem:[%s1 + $0x158] sm:$0xff]
        %v379 = vld [vmem:[%s1 + $0x160] sm:$0xff]
        %v380 = vld [vmem:[%s1 + $0x168] sm:$0xff]
        %v381 = vld [vmem:[%s1 + $0x170] sm:$0xff]
        %v382 = vld [vmem:[%s1 + $0x178] sm:$0xff]
        %v383 = vld [vmem:[%s1 + $0x180] sm:$0xff]
        %v384 = vld [vmem:[%s1 + $0x188] sm:$0xff]
        %v385 = vld [vmem:[%s1 + $0x190] sm:$0xff]
        %v386 = vld [vmem:[%s1 + $0x198] sm:$0xff]
        %v387 = vld [vmem:[%s1 + $0x1a0] sm:$0xff]
        %v388 = vld [vmem:[%s1 + $0x1a8] sm:$0xff]
        %v389 = vld [vmem:[%s1 + $0x1b0] sm:$0xff]
        %v390 = vld [vmem:[%s1 + $0x1b8] sm:$0xff]
        %v391 = vld [vmem:[%s1 + $0x1c0] sm:$0xff]
        %v392 = vld [vmem:[%s1 + $0x1c8] sm:$0xff]
        %v393 = vld [vmem:[%s1 + $0x1d0] sm:$0xff]
        %v394 = vld [vmem:[%s1 + $0x1d8] sm:$0xff]
        %v395 = vld [vmem:[%s1 + $0x1e0] sm:$0xff]
        %v396 = vld [vmem:[%s1 + $0x1e8] sm:$0xff]
        %v397 = vld [vmem:[%s1 + $0x1f0] sm:$0xff]
        %v398 = vld [vmem:[%s1 + $0x1f8] sm:$0xff]
        %v399 = vld [vmem:[%s1 + $0x200] sm:$0xff]
        %v400 = vld [vmem:[%s1 + $0x208] sm:$0xff]
        %v401 = vld [vmem:[%s1 + $0x210] sm:$0xff]
        %v402 = vld [vmem:[%s1 + $0x218] sm:$0xff]
        %v403 = vld [vmem:[%s1 + $0x220] sm:$0xff]
        %v404 = vld [vmem:[%s1 + $0x228] sm:$0xff]
        %v405 = vld [vmem:[%s1 + $0x230] sm:$0xff]
        %v406 = vld [vmem:[%s1 + $0x238] sm:$0xff]
        %v407 = vld [vmem:[%s2] sm:$0x1]
        %v409 = vperm.slane %v407, 0
        %vm411 = vcmask 523264
        %v413 = vsel %vm411, %v179, 0
        %v416 = vsel %vm411, %v184, 0
        %v419 = vsel %vm411, %v189, 0
        %v422 = vsel %vm411, %v194, 0
        %v425 = vsel %vm411, %v199, 0
        %v428 = vsel %vm411, %v204, 0
        %v431 = vsel %vm411, %v209, 0
        %v434 = vsel %vm411, %v214, 0
        %v437 = vsel %vm411, %v219, 0
        %v440 = vsel %vm411, %v224, 0
        %v443 = vsel %vm411, %v229, 0
        %v446 = vsel %vm411, %v234, 0
        %v449 = vsel %vm411, %v239, 0
        %v452 = vsel %vm411, %v244, 0
        %v455 = vsel %vm411, %v249, 0
        %v458 = vsel %vm411, %v254, 0
        %v461 = vsel %vm411, %v259, 0
        %v464 = vsel %vm411, %v264, 0
        %v467 = vsel %vm411, %v269, 0
        %v470 = vsel %vm411, %v274, 0
        %v473 = vsel %vm411, %v279, 0
        %v476 = vsel %vm411, %v284, 0
        %v479 = vsel %vm411, %v289, 0
        %v482 = vsel %vm411, %v294, 0
        %v485 = vsel %vm411, %v299, 0
        %v488 = vsel %vm411, %v304, 0
        %v491 = vsel %vm411, %v309, 0
        %v494 = vsel %vm411, %v314, 0
        %v497 = vsel %vm411, %v319, 0
        %v500 = vsel %vm411, %v324, 0
        %v503 = vsel %vm411, %v329, 0
        %v506 = vsel %vm411, %v334, 0
        %508 = vmatpush.msra.mxu0 %v350
        %509 = vmatpush.msra.mxu0 %v349
        %510 = vmatpush.msra.mxu0 %v348
        %511 = vmatpush.msra.mxu0 %v347
        %512 = vmatpush.msra.mxu0 %v346
        %513 = vmatpush.msra.mxu0 %v345
        %514 = vmatpush.msra.mxu0 %v344
        %515 = vmatpush.msra.mxu0 %v343
        %516 = vmatpush.msra.mxu0 %v342
        %517 = vmatpush.msra.mxu0 %v341
        %518 = vmatpush.msra.mxu0 %v340
        %519 = vmatpush.msra.mxu0 %v339
        %520 = vmatpush.msra.mxu0 %v338
        %521 = vmatpush.msra.mxu0 %v337
        %522 = vmatpush.msra.mxu0 %v336
        %523 = vmatpush.msra.mxu0 %v335
        %524 = vmatmul.f32.gmra.mxu0 %v175
        %v525 = vpop.f32.mrf.mxu0
        %v526 = vadd.f32 %v409, %v525
        %527 = vmatmul.f32.gmra.mxu0 %v180
        %v528 = vpop.f32.mrf.mxu0
        %v529 = vadd.f32 %v409, %v528
        %530 = vmatmul.f32.gmra.mxu0 %v185
        %v531 = vpop.f32.mrf.mxu0
        %v532 = vadd.f32 %v409, %v531
        %533 = vmatmul.f32.gmra.mxu0 %v190
        %v534 = vpop.f32.mrf.mxu0
        %v535 = vadd.f32 %v409, %v534
        %536 = vmatmul.f32.gmra.mxu0 %v195
        %v537 = vpop.f32.mrf.mxu0
        %v538 = vadd.f32 %v409, %v537
        %539 = vmatmul.f32.gmra.mxu0 %v200
        %v540 = vpop.f32.mrf.mxu0
        %v541 = vadd.f32 %v409, %v540
        %542 = vmatmul.f32.gmra.mxu0 %v205
        %v543 = vpop.f32.mrf.mxu0
        %v544 = vadd.f32 %v409, %v543
        %545 = vmatmul.f32.gmra.mxu0 %v210
        %v546 = vpop.f32.mrf.mxu0
        %v547 = vadd.f32 %v409, %v546
        %548 = vmatmul.f32.gmra.mxu0 %v215
        %v549 = vpop.f32.mrf.mxu0
        %v550 = vadd.f32 %v409, %v549
        %551 = vmatmul.f32.gmra.mxu0 %v220
        %v552 = vpop.f32.mrf.mxu0
        %v553 = vadd.f32 %v409, %v552
        %554 = vmatmul.f32.gmra.mxu0 %v225
        %v555 = vpop.f32.mrf.mxu0
        %v556 = vadd.f32 %v409, %v555
        %557 = vmatmul.f32.gmra.mxu0 %v230
        %v558 = vpop.f32.mrf.mxu0
        %v559 = vadd.f32 %v409, %v558
        %560 = vmatmul.f32.gmra.mxu0 %v235
        %v561 = vpop.f32.mrf.mxu0
        %v562 = vadd.f32 %v409, %v561
        %563 = vmatmul.f32.gmra.mxu0 %v240
        %v564 = vpop.f32.mrf.mxu0
        %v565 = vadd.f32 %v409, %v564
        %566 = vmatmul.f32.gmra.mxu0 %v245
        %v567 = vpop.f32.mrf.mxu0
        %v568 = vadd.f32 %v409, %v567
        %569 = vmatmul.f32.gmra.mxu0 %v250
        %v570 = vpop.f32.mrf.mxu0
        %v571 = vadd.f32 %v409, %v570
        %572 = vmatmul.f32.gmra.mxu0 %v255
        %v573 = vpop.f32.mrf.mxu0
        %v574 = vadd.f32 %v409, %v573
        %575 = vmatmul.f32.gmra.mxu0 %v260
        %v576 = vpop.f32.mrf.mxu0
        %v577 = vadd.f32 %v409, %v576
        %578 = vmatmul.f32.gmra.mxu0 %v265
        %v579 = vpop.f32.mrf.mxu0
        %v580 = vadd.f32 %v409, %v579
        %581 = vmatmul.f32.gmra.mxu0 %v270
        %v582 = vpop.f32.mrf.mxu0
        %v583 = vadd.f32 %v409, %v582
        %584 = vmatmul.f32.gmra.mxu0 %v275
        %v585 = vpop.f32.mrf.mxu0
        %v586 = vadd.f32 %v409, %v585
        %587 = vmatmul.f32.gmra.mxu0 %v280
        %v588 = vpop.f32.mrf.mxu0
        %v589 = vadd.f32 %v409, %v588
        %590 = vmatmul.f32.gmra.mxu0 %v285
        %v591 = vpop.f32.mrf.mxu0
        %v592 = vadd.f32 %v409, %v591
        %593 = vmatmul.f32.gmra.mxu0 %v290
        %v594 = vpop.f32.mrf.mxu0
        %v595 = vadd.f32 %v409, %v594
        %596 = vmatmul.f32.gmra.mxu0 %v295
        %v597 = vpop.f32.mrf.mxu0
        %v598 = vadd.f32 %v409, %v597
        %599 = vmatmul.f32.gmra.mxu0 %v300
        %v600 = vpop.f32.mrf.mxu0
        %v601 = vadd.f32 %v409, %v600
        %602 = vmatmul.f32.gmra.mxu0 %v305
        %v603 = vpop.f32.mrf.mxu0
        %v604 = vadd.f32 %v409, %v603
        %605 = vmatmul.f32.gmra.mxu0 %v310
        %v606 = vpop.f32.mrf.mxu0
        %v607 = vadd.f32 %v409, %v606
        %608 = vmatmul.f32.gmra.mxu0 %v315
        %v609 = vpop.f32.mrf.mxu0
        %v610 = vadd.f32 %v409, %v609
        %611 = vmatmul.f32.gmra.mxu0 %v320
        %v612 = vpop.f32.mrf.mxu0
        %v613 = vadd.f32 %v409, %v612
        %614 = vmatmul.f32.gmra.mxu0 %v325
        %v615 = vpop.f32.mrf.mxu0
        %v616 = vadd.f32 %v409, %v615
        %617 = vmatmul.f32.gmra.mxu0 %v330
        %v618 = vpop.f32.mrf.mxu0
        %v619 = vadd.f32 %v409, %v618
        %620 = vdwg.mxu0
        %621 = vmatpush.msra.mxu0 %v366
        %622 = vmatpush.msra.mxu0 %v365
        %623 = vmatpush.msra.mxu0 %v364
        %624 = vmatpush.msra.mxu0 %v363
        %625 = vmatpush.msra.mxu0 %v362
        %626 = vmatpush.msra.mxu0 %v361
        %627 = vmatpush.msra.mxu0 %v360
        %628 = vmatpush.msra.mxu0 %v359
        %629 = vmatpush.msra.mxu0 %v358
        %630 = vmatpush.msra.mxu0 %v357
        %631 = vmatpush.msra.mxu0 %v356
        %632 = vmatpush.msra.mxu0 %v355
        %633 = vmatpush.msra.mxu0 %v354
        %634 = vmatpush.msra.mxu0 %v353
        %635 = vmatpush.msra.mxu0 %v352
        %636 = vmatpush.msra.mxu0 %v351
        %637 = vmatmul.f32.gmra.mxu0 %v176
        %v638 = vpop.f32.mrf.mxu0
        %v639 = vadd.f32 %v526, %v638
        %640 = vmatmul.f32.gmra.mxu0 %v181
        %v641 = vpop.f32.mrf.mxu0
        %v642 = vadd.f32 %v529, %v641
        %643 = vmatmul.f32.gmra.mxu0 %v186
        %v644 = vpop.f32.mrf.mxu0
        %v645 = vadd.f32 %v532, %v644
        %646 = vmatmul.f32.gmra.mxu0 %v191
        %v647 = vpop.f32.mrf.mxu0
        %v648 = vadd.f32 %v535, %v647
        %649 = vmatmul.f32.gmra.mxu0 %v196
        %v650 = vpop.f32.mrf.mxu0
        %v651 = vadd.f32 %v538, %v650
        %652 = vmatmul.f32.gmra.mxu0 %v201
        %v653 = vpop.f32.mrf.mxu0
        %v654 = vadd.f32 %v541, %v653
        %655 = vmatmul.f32.gmra.mxu0 %v206
        %v656 = vpop.f32.mrf.mxu0
        %v657 = vadd.f32 %v544, %v656
        %658 = vmatmul.f32.gmra.mxu0 %v211
        %v659 = vpop.f32.mrf.mxu0
        %v660 = vadd.f32 %v547, %v659
        %661 = vmatmul.f32.gmra.mxu0 %v216
        %v662 = vpop.f32.mrf.mxu0
        %v663 = vadd.f32 %v550, %v662
        %664 = vmatmul.f32.gmra.mxu0 %v221
        %v665 = vpop.f32.mrf.mxu0
        %v666 = vadd.f32 %v553, %v665
        %667 = vmatmul.f32.gmra.mxu0 %v226
        %v668 = vpop.f32.mrf.mxu0
        %v669 = vadd.f32 %v556, %v668
        %670 = vmatmul.f32.gmra.mxu0 %v231
        %v671 = vpop.f32.mrf.mxu0
        %v672 = vadd.f32 %v559, %v671
        %673 = vmatmul.f32.gmra.mxu0 %v236
        %v674 = vpop.f32.mrf.mxu0
        %v675 = vadd.f32 %v562, %v674
        %676 = vmatmul.f32.gmra.mxu0 %v241
        %v677 = vpop.f32.mrf.mxu0
        %v678 = vadd.f32 %v565, %v677
        %679 = vmatmul.f32.gmra.mxu0 %v246
        %v680 = vpop.f32.mrf.mxu0
        %v681 = vadd.f32 %v568, %v680
        %682 = vmatmul.f32.gmra.mxu0 %v251
        %v683 = vpop.f32.mrf.mxu0
        %v684 = vadd.f32 %v571, %v683
        %685 = vmatmul.f32.gmra.mxu0 %v256
        %v686 = vpop.f32.mrf.mxu0
        %v687 = vadd.f32 %v574, %v686
        %688 = vmatmul.f32.gmra.mxu0 %v261
        %v689 = vpop.f32.mrf.mxu0
        %v690 = vadd.f32 %v577, %v689
        %691 = vmatmul.f32.gmra.mxu0 %v266
        %v692 = vpop.f32.mrf.mxu0
        %v693 = vadd.f32 %v580, %v692
        %694 = vmatmul.f32.gmra.mxu0 %v271
        %v695 = vpop.f32.mrf.mxu0
        %v696 = vadd.f32 %v583, %v695
        %697 = vmatmul.f32.gmra.mxu0 %v276
        %v698 = vpop.f32.mrf.mxu0
        %v699 = vadd.f32 %v586, %v698
        %700 = vmatmul.f32.gmra.mxu0 %v281
        %v701 = vpop.f32.mrf.mxu0
        %v702 = vadd.f32 %v589, %v701
        %703 = vmatmul.f32.gmra.mxu0 %v286
        %v704 = vpop.f32.mrf.mxu0
        %v705 = vadd.f32 %v592, %v704
        %706 = vmatmul.f32.gmra.mxu0 %v291
        %v707 = vpop.f32.mrf.mxu0
        %v708 = vadd.f32 %v595, %v707
        %709 = vmatmul.f32.gmra.mxu0 %v296
        %v710 = vpop.f32.mrf.mxu0
        %v711 = vadd.f32 %v598, %v710
        %712 = vmatmul.f32.gmra.mxu0 %v301
        %v713 = vpop.f32.mrf.mxu0
        %v714 = vadd.f32 %v601, %v713
        %715 = vmatmul.f32.gmra.mxu0 %v306
        %v716 = vpop.f32.mrf.mxu0
        %v717 = vadd.f32 %v604, %v716
        %718 = vmatmul.f32.gmra.mxu0 %v311
        %v719 = vpop.f32.mrf.mxu0
        %v720 = vadd.f32 %v607, %v719
        %721 = vmatmul.f32.gmra.mxu0 %v316
        %v722 = vpop.f32.mrf.mxu0
        %v723 = vadd.f32 %v610, %v722
        %724 = vmatmul.f32.gmra.mxu0 %v321
        %v725 = vpop.f32.mrf.mxu0
        %v726 = vadd.f32 %v613, %v725
        %727 = vmatmul.f32.gmra.mxu0 %v326
        %v728 = vpop.f32.mrf.mxu0
        %v729 = vadd.f32 %v616, %v728
        %730 = vmatmul.f32.gmra.mxu0 %v331
        %v731 = vpop.f32.mrf.mxu0
        %v732 = vadd.f32 %v619, %v731
        %733 = vdwg.mxu0
        %734 = vmatpush.msra.mxu0 %v382
        %735 = vmatpush.msra.mxu0 %v381
        %736 = vmatpush.msra.mxu0 %v380
        %737 = vmatpush.msra.mxu0 %v379
        %738 = vmatpush.msra.mxu0 %v378
        %739 = vmatpush.msra.mxu0 %v377
        %740 = vmatpush.msra.mxu0 %v376
        %741 = vmatpush.msra.mxu0 %v375
        %742 = vmatpush.msra.mxu0 %v374
        %743 = vmatpush.msra.mxu0 %v373
        %744 = vmatpush.msra.mxu0 %v372
        %745 = vmatpush.msra.mxu0 %v371
        %746 = vmatpush.msra.mxu0 %v370
        %747 = vmatpush.msra.mxu0 %v369
        %748 = vmatpush.msra.mxu0 %v368
        %749 = vmatpush.msra.mxu0 %v367
        %750 = vmatmul.f32.gmra.mxu0 %v177
        %v751 = vpop.f32.mrf.mxu0
        %v752 = vadd.f32 %v639, %v751
        %753 = vmatmul.f32.gmra.mxu0 %v182
        %v754 = vpop.f32.mrf.mxu0
        %v755 = vadd.f32 %v642, %v754
        %756 = vmatmul.f32.gmra.mxu0 %v187
        %v757 = vpop.f32.mrf.mxu0
        %v758 = vadd.f32 %v645, %v757
        %759 = vmatmul.f32.gmra.mxu0 %v192
        %v760 = vpop.f32.mrf.mxu0
        %v761 = vadd.f32 %v648, %v760
        %762 = vmatmul.f32.gmra.mxu0 %v197
        %v763 = vpop.f32.mrf.mxu0
        %v764 = vadd.f32 %v651, %v763
        %765 = vmatmul.f32.gmra.mxu0 %v202
        %v766 = vpop.f32.mrf.mxu0
        %v767 = vadd.f32 %v654, %v766
        %768 = vmatmul.f32.gmra.mxu0 %v207
        %v769 = vpop.f32.mrf.mxu0
        %v770 = vadd.f32 %v657, %v769
        %771 = vmatmul.f32.gmra.mxu0 %v212
        %v772 = vpop.f32.mrf.mxu0
        %v773 = vadd.f32 %v660, %v772
        %774 = vmatmul.f32.gmra.mxu0 %v217
        %v775 = vpop.f32.mrf.mxu0
        %v776 = vadd.f32 %v663, %v775
        %777 = vmatmul.f32.gmra.mxu0 %v222
        %v778 = vpop.f32.mrf.mxu0
        %v779 = vadd.f32 %v666, %v778
        %780 = vmatmul.f32.gmra.mxu0 %v227
        %v781 = vpop.f32.mrf.mxu0
        %v782 = vadd.f32 %v669, %v781
        %783 = vmatmul.f32.gmra.mxu0 %v232
        %v784 = vpop.f32.mrf.mxu0
        %v785 = vadd.f32 %v672, %v784
        %786 = vmatmul.f32.gmra.mxu0 %v237
        %v787 = vpop.f32.mrf.mxu0
        %v788 = vadd.f32 %v675, %v787
        %789 = vmatmul.f32.gmra.mxu0 %v242
        %v790 = vpop.f32.mrf.mxu0
        %v791 = vadd.f32 %v678, %v790
        %792 = vmatmul.f32.gmra.mxu0 %v247
        %v793 = vpop.f32.mrf.mxu0
        %v794 = vadd.f32 %v681, %v793
        %795 = vmatmul.f32.gmra.mxu0 %v252
        %v796 = vpop.f32.mrf.mxu0
        %v797 = vadd.f32 %v684, %v796
        %798 = vmatmul.f32.gmra.mxu0 %v257
        %v799 = vpop.f32.mrf.mxu0
        %v800 = vadd.f32 %v687, %v799
        %801 = vmatmul.f32.gmra.mxu0 %v262
        %v802 = vpop.f32.mrf.mxu0
        %v803 = vadd.f32 %v690, %v802
        %804 = vmatmul.f32.gmra.mxu0 %v267
        %v805 = vpop.f32.mrf.mxu0
        %v806 = vadd.f32 %v693, %v805
        %807 = vmatmul.f32.gmra.mxu0 %v272
        %v808 = vpop.f32.mrf.mxu0
        %v809 = vadd.f32 %v696, %v808
        %810 = vmatmul.f32.gmra.mxu0 %v277
        %v811 = vpop.f32.mrf.mxu0
        %v812 = vadd.f32 %v699, %v811
        %813 = vmatmul.f32.gmra.mxu0 %v282
        %v814 = vpop.f32.mrf.mxu0
        %v815 = vadd.f32 %v702, %v814
        %816 = vmatmul.f32.gmra.mxu0 %v287
        %v817 = vpop.f32.mrf.mxu0
        %v818 = vadd.f32 %v705, %v817
        %819 = vmatmul.f32.gmra.mxu0 %v292
        %v820 = vpop.f32.mrf.mxu0
        %v821 = vadd.f32 %v708, %v820
        %822 = vmatmul.f32.gmra.mxu0 %v297
        %v823 = vpop.f32.mrf.mxu0
        %v824 = vadd.f32 %v711, %v823
        %825 = vmatmul.f32.gmra.mxu0 %v302
        %v826 = vpop.f32.mrf.mxu0
        %v827 = vadd.f32 %v714, %v826
        %828 = vmatmul.f32.gmra.mxu0 %v307
        %v829 = vpop.f32.mrf.mxu0
        %v830 = vadd.f32 %v717, %v829
        %831 = vmatmul.f32.gmra.mxu0 %v312
        %v832 = vpop.f32.mrf.mxu0
        %v833 = vadd.f32 %v720, %v832
        %834 = vmatmul.f32.gmra.mxu0 %v317
        %v835 = vpop.f32.mrf.mxu0
        %v836 = vadd.f32 %v723, %v835
        %837 = vmatmul.f32.gmra.mxu0 %v322
        %v838 = vpop.f32.mrf.mxu0
        %v839 = vadd.f32 %v726, %v838
        %840 = vmatmul.f32.gmra.mxu0 %v327
        %v841 = vpop.f32.mrf.mxu0
        %v842 = vadd.f32 %v729, %v841
        %843 = vmatmul.f32.gmra.mxu0 %v332
        %v844 = vpop.f32.mrf.mxu0
        %v845 = vadd.f32 %v732, %v844
        %846 = vdwg.mxu0
        %847 = vmatpush.msra.mxu0 %v398
        %848 = vmatpush.msra.mxu0 %v397
        %849 = vmatpush.msra.mxu0 %v396
        %850 = vmatpush.msra.mxu0 %v395
        %851 = vmatpush.msra.mxu0 %v394
        %852 = vmatpush.msra.mxu0 %v393
        %853 = vmatpush.msra.mxu0 %v392
        %854 = vmatpush.msra.mxu0 %v391
        %855 = vmatpush.msra.mxu0 %v390
        %856 = vmatpush.msra.mxu0 %v389
        %857 = vmatpush.msra.mxu0 %v388
        %858 = vmatpush.msra.mxu0 %v387
        %859 = vmatpush.msra.mxu0 %v386
        %860 = vmatpush.msra.mxu0 %v385
        %861 = vmatpush.msra.mxu0 %v384
        %862 = vmatpush.msra.mxu0 %v383
        %863 = vmatmul.f32.gmra.mxu0 %v178
        %v864 = vpop.f32.mrf.mxu0
        %v865 = vadd.f32 %v752, %v864
        %866 = vmatmul.f32.gmra.mxu0 %v183
        %v867 = vpop.f32.mrf.mxu0
        %v868 = vadd.f32 %v755, %v867
        %869 = vmatmul.f32.gmra.mxu0 %v188
        %v870 = vpop.f32.mrf.mxu0
        %v871 = vadd.f32 %v758, %v870
        %872 = vmatmul.f32.gmra.mxu0 %v193
        %v873 = vpop.f32.mrf.mxu0
        %v874 = vadd.f32 %v761, %v873
        %875 = vmatmul.f32.gmra.mxu0 %v198
        %v876 = vpop.f32.mrf.mxu0
        %v877 = vadd.f32 %v764, %v876
        %878 = vmatmul.f32.gmra.mxu0 %v203
        %v879 = vpop.f32.mrf.mxu0
        %v880 = vadd.f32 %v767, %v879
        %881 = vmatmul.f32.gmra.mxu0 %v208
        %v882 = vpop.f32.mrf.mxu0
        %v883 = vadd.f32 %v770, %v882
        %884 = vmatmul.f32.gmra.mxu0 %v213
        %v885 = vpop.f32.mrf.mxu0
        %v886 = vadd.f32 %v773, %v885
        %887 = vmatmul.f32.gmra.mxu0 %v218
        %v888 = vpop.f32.mrf.mxu0
        %v889 = vadd.f32 %v776, %v888
        %890 = vmatmul.f32.gmra.mxu0 %v223
        %v891 = vpop.f32.mrf.mxu0
        %v892 = vadd.f32 %v779, %v891
        %893 = vmatmul.f32.gmra.mxu0 %v228
        %v894 = vpop.f32.mrf.mxu0
        %v895 = vadd.f32 %v782, %v894
        %896 = vmatmul.f32.gmra.mxu0 %v233
        %v897 = vpop.f32.mrf.mxu0
        %v898 = vadd.f32 %v785, %v897
        %899 = vmatmul.f32.gmra.mxu0 %v238
        %v900 = vpop.f32.mrf.mxu0
        %v901 = vadd.f32 %v788, %v900
        %902 = vmatmul.f32.gmra.mxu0 %v243
        %v903 = vpop.f32.mrf.mxu0
        %v904 = vadd.f32 %v791, %v903
        %905 = vmatmul.f32.gmra.mxu0 %v248
        %v906 = vpop.f32.mrf.mxu0
        %v907 = vadd.f32 %v794, %v906
        %908 = vmatmul.f32.gmra.mxu0 %v253
        %v909 = vpop.f32.mrf.mxu0
        %v910 = vadd.f32 %v797, %v909
        %911 = vmatmul.f32.gmra.mxu0 %v258
        %v912 = vpop.f32.mrf.mxu0
        %v913 = vadd.f32 %v800, %v912
        %914 = vmatmul.f32.gmra.mxu0 %v263
        %v915 = vpop.f32.mrf.mxu0
        %v916 = vadd.f32 %v803, %v915
        %917 = vmatmul.f32.gmra.mxu0 %v268
        %v918 = vpop.f32.mrf.mxu0
        %v919 = vadd.f32 %v806, %v918
        %920 = vmatmul.f32.gmra.mxu0 %v273
        %v921 = vpop.f32.mrf.mxu0
        %v922 = vadd.f32 %v809, %v921
        %923 = vmatmul.f32.gmra.mxu0 %v278
        %v924 = vpop.f32.mrf.mxu0
        %v925 = vadd.f32 %v812, %v924
        %926 = vmatmul.f32.gmra.mxu0 %v283
        %v927 = vpop.f32.mrf.mxu0
        %v928 = vadd.f32 %v815, %v927
        %929 = vmatmul.f32.gmra.mxu0 %v288
        %v930 = vpop.f32.mrf.mxu0
        %v931 = vadd.f32 %v818, %v930
        %932 = vmatmul.f32.gmra.mxu0 %v293
        %v933 = vpop.f32.mrf.mxu0
        %v934 = vadd.f32 %v821, %v933
        %935 = vmatmul.f32.gmra.mxu0 %v298
        %v936 = vpop.f32.mrf.mxu0
        %v937 = vadd.f32 %v824, %v936
        %938 = vmatmul.f32.gmra.mxu0 %v303
        %v939 = vpop.f32.mrf.mxu0
        %v940 = vadd.f32 %v827, %v939
        %941 = vmatmul.f32.gmra.mxu0 %v308
        %v942 = vpop.f32.mrf.mxu0
        %v943 = vadd.f32 %v830, %v942
        %944 = vmatmul.f32.gmra.mxu0 %v313
        %v945 = vpop.f32.mrf.mxu0
        %v946 = vadd.f32 %v833, %v945
        %947 = vmatmul.f32.gmra.mxu0 %v318
        %v948 = vpop.f32.mrf.mxu0
        %v949 = vadd.f32 %v836, %v948
        %950 = vmatmul.f32.gmra.mxu0 %v323
        %v951 = vpop.f32.mrf.mxu0
        %v952 = vadd.f32 %v839, %v951
        %953 = vmatmul.f32.gmra.mxu0 %v328
        %v954 = vpop.f32.mrf.mxu0
        %v955 = vadd.f32 %v842, %v954
        %956 = vmatmul.f32.gmra.mxu0 %v333
        %v957 = vpop.f32.mrf.mxu0
        %v958 = vadd.f32 %v845, %v957
        %959 = vdwg.mxu0
        %960 = vmatpush.msra.mxu0 0.0
        %961 = vmatpush.msra.mxu0 0.0
        %962 = vmatpush.msra.mxu0 0.0
        %963 = vmatpush.msra.mxu0 0.0
        %964 = vmatpush.msra.mxu0 0.0
        %965 = vmatpush.msra.mxu0 0.0
        %966 = vmatpush.msra.mxu0 0.0
        %967 = vmatpush.msra.mxu0 0.0
        %968 = vmatpush.msra.mxu0 %v406
        %969 = vmatpush.msra.mxu0 %v405
        %970 = vmatpush.msra.mxu0 %v404
        %971 = vmatpush.msra.mxu0 %v403
        %972 = vmatpush.msra.mxu0 %v402
        %973 = vmatpush.msra.mxu0 %v401
        %974 = vmatpush.msra.mxu0 %v400
        %975 = vmatpush.msra.mxu0 %v399
        %976 = vmatmul.f32.gmra.mxu0 %v413
        %v977 = vpop.f32.mrf.mxu0
        %v978 = vadd.f32 %v865, %v977
        %979 = vmatmul.f32.gmra.mxu0 %v416
        %v980 = vpop.f32.mrf.mxu0
        %v981 = vadd.f32 %v868, %v980
        %982 = vmatmul.f32.gmra.mxu0 %v419
        %v983 = vpop.f32.mrf.mxu0
        %v984 = vadd.f32 %v871, %v983
        %985 = vmatmul.f32.gmra.mxu0 %v422
        %v986 = vpop.f32.mrf.mxu0
        %v987 = vadd.f32 %v874, %v986
        %988 = vmatmul.f32.gmra.mxu0 %v425
        %v989 = vpop.f32.mrf.mxu0
        %v990 = vadd.f32 %v877, %v989
        %991 = vmatmul.f32.gmra.mxu0 %v428
        %v992 = vpop.f32.mrf.mxu0
        %v993 = vadd.f32 %v880, %v992
        %994 = vmatmul.f32.gmra.mxu0 %v431
        %v995 = vpop.f32.mrf.mxu0
        %v996 = vadd.f32 %v883, %v995
        %997 = vmatmul.f32.gmra.mxu0 %v434
        %v998 = vpop.f32.mrf.mxu0
        %v999 = vadd.f32 %v886, %v998
        %1000 = vmatmul.f32.gmra.mxu0 %v437
        %v1001 = vpop.f32.mrf.mxu0
        %v1002 = vadd.f32 %v889, %v1001
        %1003 = vmatmul.f32.gmra.mxu0 %v440
        %v1004 = vpop.f32.mrf.mxu0
        %v1005 = vadd.f32 %v892, %v1004
        %1006 = vmatmul.f32.gmra.mxu0 %v443
        %v1007 = vpop.f32.mrf.mxu0
        %v1008 = vadd.f32 %v895, %v1007
        %1009 = vmatmul.f32.gmra.mxu0 %v446
        %v1010 = vpop.f32.mrf.mxu0
        %v1011 = vadd.f32 %v898, %v1010
        %1012 = vmatmul.f32.gmra.mxu0 %v449
        %v1013 = vpop.f32.mrf.mxu0
        %v1014 = vadd.f32 %v901, %v1013
        %1015 = vmatmul.f32.gmra.mxu0 %v452
        %v1016 = vpop.f32.mrf.mxu0
        %v1017 = vadd.f32 %v904, %v1016
        %1018 = vmatmul.f32.gmra.mxu0 %v455
        %v1019 = vpop.f32.mrf.mxu0
        %v1020 = vadd.f32 %v907, %v1019
        %1021 = vmatmul.f32.gmra.mxu0 %v458
        %v1022 = vpop.f32.mrf.mxu0
        %v1023 = vadd.f32 %v910, %v1022
        %1024 = vmatmul.f32.gmra.mxu0 %v461
        %v1025 = vpop.f32.mrf.mxu0
        %v1026 = vadd.f32 %v913, %v1025
        %1027 = vmatmul.f32.gmra.mxu0 %v464
        %v1028 = vpop.f32.mrf.mxu0
        %v1029 = vadd.f32 %v916, %v1028
        %1030 = vmatmul.f32.gmra.mxu0 %v467
        %v1031 = vpop.f32.mrf.mxu0
        %v1032 = vadd.f32 %v919, %v1031
        %1033 = vmatmul.f32.gmra.mxu0 %v470
        %v1034 = vpop.f32.mrf.mxu0
        %v1035 = vadd.f32 %v922, %v1034
        %1036 = vmatmul.f32.gmra.mxu0 %v473
        %v1037 = vpop.f32.mrf.mxu0
        %v1038 = vadd.f32 %v925, %v1037
        %1039 = vmatmul.f32.gmra.mxu0 %v476
        %v1040 = vpop.f32.mrf.mxu0
        %v1041 = vadd.f32 %v928, %v1040
        %1042 = vmatmul.f32.gmra.mxu0 %v479
        %v1043 = vpop.f32.mrf.mxu0
        %v1044 = vadd.f32 %v931, %v1043
        %1045 = vmatmul.f32.gmra.mxu0 %v482
        %v1046 = vpop.f32.mrf.mxu0
        %v1047 = vadd.f32 %v934, %v1046
        %1048 = vmatmul.f32.gmra.mxu0 %v485
        %v1049 = vpop.f32.mrf.mxu0
        %v1050 = vadd.f32 %v937, %v1049
        %1051 = vmatmul.f32.gmra.mxu0 %v488
        %v1052 = vpop.f32.mrf.mxu0
        %v1053 = vadd.f32 %v940, %v1052
        %1054 = vmatmul.f32.gmra.mxu0 %v491
        %v1055 = vpop.f32.mrf.mxu0
        %v1056 = vadd.f32 %v943, %v1055
        %1057 = vmatmul.f32.gmra.mxu0 %v494
        %v1058 = vpop.f32.mrf.mxu0
        %v1059 = vadd.f32 %v946, %v1058
        %1060 = vmatmul.f32.gmra.mxu0 %v497
        %v1061 = vpop.f32.mrf.mxu0
        %v1062 = vadd.f32 %v949, %v1061
        %1063 = vmatmul.f32.gmra.mxu0 %v500
        %v1064 = vpop.f32.mrf.mxu0
        %v1065 = vadd.f32 %v952, %v1064
        %1066 = vmatmul.f32.gmra.mxu0 %v503
        %v1067 = vpop.f32.mrf.mxu0
        %v1068 = vadd.f32 %v955, %v1067
        %1069 = vmatmul.f32.gmra.mxu0 %v506
        %v1070 = vpop.f32.mrf.mxu0
        %v1071 = vadd.f32 %v958, %v1070
        %1072 = vdwg.mxu0
        %1073 = vst [vmem:[%s166] sm:$0xff] %v978
        %1074 = vst [vmem:[%s166 + $0x8] sm:$0xff] %v981
        %1075 = vst [vmem:[%s166 + $0x10] sm:$0xff] %v984
        %1076 = vst [vmem:[%s166 + $0x18] sm:$0xff] %v987
        %1077 = vst [vmem:[%s166 + $0x20] sm:$0xff] %v990
        %1078 = vst [vmem:[%s166 + $0x28] sm:$0xff] %v993
        %1079 = vst [vmem:[%s166 + $0x30] sm:$0xff] %v996
        %1080 = vst [vmem:[%s166 + $0x38] sm:$0xff] %v999
        %1081 = vst [vmem:[%s166 + $0x40] sm:$0xff] %v1002
        %1082 = vst [vmem:[%s166 + $0x48] sm:$0xff] %v1005
        %1083 = vst [vmem:[%s166 + $0x50] sm:$0xff] %v1008
        %1084 = vst [vmem:[%s166 + $0x58] sm:$0xff] %v1011
        %1085 = vst [vmem:[%s166 + $0x60] sm:$0xff] %v1014
        %1086 = vst [vmem:[%s166 + $0x68] sm:$0xff] %v1017
        %1087 = vst [vmem:[%s166 + $0x70] sm:$0xff] %v1020
        %1088 = vst [vmem:[%s166 + $0x78] sm:$0xff] %v1023
        %1089 = vst [vmem:[%s166 + $0x80] sm:$0xff] %v1026
        %1090 = vst [vmem:[%s166 + $0x88] sm:$0xff] %v1029
        %1091 = vst [vmem:[%s166 + $0x90] sm:$0xff] %v1032
        %1092 = vst [vmem:[%s166 + $0x98] sm:$0xff] %v1035
        %1093 = vst [vmem:[%s166 + $0xa0] sm:$0xff] %v1038
        %1094 = vst [vmem:[%s166 + $0xa8] sm:$0xff] %v1041
        %1095 = vst [vmem:[%s166 + $0xb0] sm:$0xff] %v1044
        %1096 = vst [vmem:[%s166 + $0xb8] sm:$0xff] %v1047
        %1097 = vst [vmem:[%s166 + $0xc0] sm:$0xff] %v1050
        %1098 = vst [vmem:[%s166 + $0xc8] sm:$0xff] %v1053
        %1099 = vst [vmem:[%s166 + $0xd0] sm:$0xff] %v1056
        %1100 = vst [vmem:[%s166 + $0xd8] sm:$0xff] %v1059
        %1101 = vst [vmem:[%s166 + $0xe0] sm:$0xff] %v1062
        %1102 = vst [vmem:[%s166 + $0xe8] sm:$0xff] %v1065
        %1103 = vst [vmem:[%s166 + $0xf0] sm:$0xff] %v1068
        %1104 = vst [vmem:[%s166 + $0xf8] sm:$0xff] %v1071
        %s1105 = sand.u32 %s93, 1
        %s1106 = scalar_lea.sflag [#allocation3], %s1105
        %s1107 = sand.u32 %s93, 1
        %s1108 = smul.addr %s1107, 256
        %s1109 = scalar_lea.vmem [#allocation2], %s1108
        // Predicated region
        $region33: #{word_aggregation_forward.3} parent=31 // pred_check
          %p1110 = pneg %p103
        $region34: #{word_aggregation_forward.3} parent=31 // pred_check_branch
          %1112 = sbr.rel (%p1110) target = $region36
        $region35: #{word_aggregation_forward.3} parent=31 // pred_region
          %s1113 = smul.u32 32, %s17
          %1115 = vsyncadd %s1106, 0
          %s1116 = smul.addr %s1113, 8
          %s1117 = scalar_lea.hbm %s3, %s1116
          %s1118 = sshll.u32 %s1109, 4
          %s1119 = int_to_ptr.vmem [resolvable:$true] %s1118
          %s1120 = sshll.u32 %s1117, 4
          %s1121 = int_to_ptr.hbm [resolvable:$true] %s1120
          %1126 = dma.vmem_to_hbm [thread:$0]  %s1119, 4096, %s1121, %s1106, 128, 128, 8
        $region36: #{word_aggregation_forward.3} parent=31 // pred_fallthru
          _
      $region32: #{word_aggregation_forward.3} parent=5 // pred_fallthru
        _
      %p1127 = scmp.le.s32.totalorder 2, %s12
      // Predicated region
      $region37: #{word_aggregation_forward.3} parent=5 // pred_check
        %p1128 = pneg %p1127
      $region38: #{word_aggregation_forward.3} parent=5 // pred_check_branch
        %1130 = sbr.rel (%p1128) target = $region40
      $region39: #{word_aggregation_forward.3} parent=5 // pred_region
        %s1131 = ssub.s32 %s12, 2
        // Predicated region
        $region41: #{word_aggregation_forward.3} parent=39 // pred_check
          %p1132 = pneg %p109
        $region42: #{word_aggregation_forward.3} parent=39 // pred_check_branch
          %1134 = sbr.rel (%p1132) target = $region44
        $region43: #{word_aggregation_forward.3} parent=39 // pred_region
          %s1135 = sand.u32 %s94, 1
          %s1136 = scalar_lea.sflag [#allocation3], %s1135
          %s1137 = sand.u32 %s94, 1
          %s1138 = smul.addr %s1137, 256
          %s1139 = scalar_lea.vmem [#allocation2], %s1138
          %1141 = dma.done %s1136, 4096
        $region44: #{word_aggregation_forward.3} parent=39 // pred_fallthru
          _
      $region40: #{word_aggregation_forward.3} parent=5 // pred_fallthru
        _
    $region6: #{word_aggregation_forward.3} parent=1 // loop_footer
      %s16 = sadd.s32 1, %s12
    $region7: #{word_aggregation_forward.3} parent=1 // loop_footer_branch
      %11 = sbr.rel target = $region3
    $region8: #{word_aggregation_forward.3} parent=1 // loop_exit
      _
    %1142 = vsyncpa [#allocation3], 1
    %s1143 = scalar_lea.sflag [#allocation3], 1
    %1144 = vsyncpa %s1143, 1

// kernel: word_aggregation_forward.2
$region0: #{word_aggregation_forward.2}
  #allocation0 [shape = 'u32[]', space=smem, size = 0x4, offset = 0x4, fixed_abs, tag = 'smem constant byte address 0x4 - core index']
  #allocation1 [shape = 'u32[72,128]{1,0:T(1,128)}', space=vmem, size = 0x9000, scoped, tag = 'internal scratch']
  %s0 = inlined_call_operand.hbm [shape: f32[2048,64], index: 0, kind: input, shape index: {}]
  %s1 = inlined_call_operand.hbm [shape: f32[1,64], index: 1, kind: input, shape index: {}]
  %s2 = inlined_call_operand.hbm [shape: f32[1,64], index: 2, kind: input, shape index: {}]
  %s3 = inlined_call_operand.vmem [shape: f32[2048,64], index: 3, kind: output, shape index: {}]
  %s4 = sld [smem:[#allocation0]]
  $region57: #{word_aggregation_forward.2} parent=0
    _
  %s6 = ssub.s32 1, %s4
  %s7 = scalar_select 0, %s6, %s4
  $region1: #{word_aggregation_forward.2} parent=0
    #allocation2 [shape = 'u8[1048576]{0}', space=vmem, size = 0x100000, scoped, tag = 'input window, operand 0']
    #allocation3 [shape = 's32[2]{0}', space=sflag, size = 0x8, scoped, tag = 'scoped memory for word_aggregation_forward.2']
    #allocation4 [shape = 'u8[512]{0}', space=vmem, size = 0x400, scoped, tag = 'input window, operand 1, single buffered']
    #allocation5 [shape = 's32[1]{0}', space=sflag, size = 0x4, scoped, tag = 'scoped memory for word_aggregation_forward.2']
    #allocation6 [shape = 'u8[512]{0}', space=vmem, size = 0x400, scoped, tag = 'input window, operand 2, single buffered']
    %8 = vsyncpa [#allocation3], 0
    %s9 = scalar_lea.sflag [#allocation3], 1
    %10 = vsyncpa %s9, 0
    %11 = vsyncpa [#allocation5], 0
    loop: start=0, step=1, limit=4
    $region2: #{word_aggregation_forward.2} parent=1 // loop_pre_header
      _
    $region3: #{word_aggregation_forward.2} parent=1 // loop_header
      %s13 = sphi 0, %s17
      %p14 = scmp.ge.s32.totalorder %s13, 4
      %s23 = sphi 0, %s25
      %s26 = sphi 0, %s23
      %s27 = sphi 0, %s26
      %s43 = sphi 0, %s27
      %s47 = sphi 0, %s47
      %s49 = sphi 0, %s47
      %s50 = sphi 0, %s49
      %s64 = sphi 0, %s50
      %s68 = sphi 0, %s68
      %s70 = sphi 0, %s68
      %s71 = sphi 0, %s70
      %s85 = sphi 0, %s71
      %s91 = sphi 0, %s93
      %s94 = sphi 0, %s91
      %s95 = sphi 0, %s94
      %s111 = sphi 0, %s95
    $region4: #{word_aggregation_forward.2} parent=1 // loop_header_branch
      %16 = sbr.rel (%p14) target = $region8
    $region5: #{word_aggregation_forward.2} parent=1 // loop_body
      %s18 = ssub.s32 %s13, 1
      %s19 = ssub.s32 %s13, 2
      %s20 = sadd.s32 %s13, 1
      %s21 = ssub.s32 %s13, %s20
      %p22 = scmp.eq.s32.totalorder %s21, 0
      %s24 = sadd.s32 %s23, 1
      %s25 = scalar_select %p22, %s23, %s24
      %p28 = pneg %p22
      %p29 = scmp.eq.s32.totalorder %s13, 1
      %p30 = por %p28, %p29
      %p31 = scmp.ne.s32.totalorder %s23, %s26
      %p32 = scmp.eq.s32.totalorder %s13, 0
      %p33 = por %p31, %p32
      %p34 = scmp.ne.s32.totalorder %s23, %s26
      %p35 = scmp.eq.s32.totalorder %s18, 1
      %p36 = por %p34, %p35
      %p37 = scmp.ne.s32.totalorder %s26, %s27
      %p38 = scmp.eq.s32.totalorder %s18, 0
      %p39 = por %p37, %p38
      %p40 = scmp.ne.s32.totalorder %s26, %s27
      %p41 = scmp.eq.s32.totalorder %s19, 1
      %p42 = por %p40, %p41
      %p44 = scmp.ne.s32.totalorder %s27, %s43
      %p45 = scmp.eq.s32.totalorder %s19, 0
      %p46 = por %p44, %p45
      %s48 = sadd.s32 %s47, 1
      %p51 = scmp.eq.s32.totalorder %s13, 1
      %p52 = scmp.ne.s32.totalorder %s47, %s49
      %p53 = scmp.eq.s32.totalorder %s13, 0
      %p54 = por %p52, %p53
      %p55 = scmp.ne.s32.totalorder %s47, %s49
      %p56 = scmp.eq.s32.totalorder %s18, 1
      %p57 = por %p55, %p56
      %p58 = scmp.ne.s32.totalorder %s49, %s50
      %p59 = scmp.eq.s32.totalorder %s18, 0
      %p60 = por %p58, %p59
      %p61 = scmp.ne.s32.totalorder %s49, %s50
      %p62 = scmp.eq.s32.totalorder %s19, 1
      %p63 = por %p61, %p62
      %p65 = scmp.ne.s32.totalorder %s50, %s64
      %p66 = scmp.eq.s32.totalorder %s19, 0
      %p67 = por %p65, %p66
      %s69 = sadd.s32 %s68, 1
      %p72 = scmp.eq.s32.totalorder %s13, 1
      %p73 = scmp.ne.s32.totalorder %s68, %s70
      %p74 = scmp.eq.s32.totalorder %s13, 0
      %p75 = por %p73, %p74
      %p76 = scmp.ne.s32.totalorder %s68, %s70
      %p77 = scmp.eq.s32.totalorder %s18, 1
      %p78 = por %p76, %p77
      %p79 = scmp.ne.s32.totalorder %s70, %s71
      %p80 = scmp.eq.s32.totalorder %s18, 0
      %p81 = por %p79, %p80
      %p82 = scmp.ne.s32.totalorder %s70, %s71
      %p83 = scmp.eq.s32.totalorder %s19, 1
      %p84 = por %p82, %p83
      %p86 = scmp.ne.s32.totalorder %s71, %s85
      %p87 = scmp.eq.s32.totalorder %s19, 0
      %p88 = por %p86, %p87
      %s89 = ssub.s32 %s13, %s20
      %p90 = scmp.eq.s32.totalorder %s89, 0
      %s92 = sadd.s32 %s91, 1
      %s93 = scalar_select %p90, %s91, %s92
      %p96 = pneg %p90
      %p97 = scmp.eq.s32.totalorder %s13, 1
      %p98 = por %p96, %p97
      %p99 = scmp.ne.s32.totalorder %s91, %s94
      %p100 = scmp.eq.s32.totalorder %s13, 0
      %p101 = por %p99, %p100
      %p102 = scmp.ne.s32.totalorder %s91, %s94
      %p103 = scmp.eq.s32.totalorder %s18, 1
      %p104 = por %p102, %p103
      %p105 = scmp.ne.s32.totalorder %s94, %s95
      %p106 = scmp.eq.s32.totalorder %s18, 0
      %p107 = por %p105, %p106
      %p108 = scmp.ne.s32.totalorder %s94, %s95
      %p109 = scmp.eq.s32.totalorder %s19, 1
      %p110 = por %p108, %p109
      %p112 = scmp.ne.s32.totalorder %s95, %s111
      %p113 = scmp.eq.s32.totalorder %s19, 0
      %p114 = por %p112, %p113
      %p115 = scmp.le.s32.totalorder 1, %s13
      %p116 = scmp.lt.s32.totalorder %s13, 3
      %p117 = pnand %p115, %p116
      %p118 = pneg %p117
      // Predicated region
      $region9: #{word_aggregation_forward.2} parent=5 // pred_check
        _
      $region10: #{word_aggregation_forward.2} parent=5 // pred_check_branch
        %120 = sbr.rel (%p117) target = $region12
      $region11: #{word_aggregation_forward.2} parent=5 // pred_region
        %s121 = ssub.s32 %s13, 1
        // Predicated region
        $region13: #{word_aggregation_forward.2} parent=11 // pred_check
          %p122 = pneg %p60
        $region14: #{word_aggregation_forward.2} parent=11 // pred_check_branch
          %124 = sbr.rel (%p122) target = $region16
        $region15: #{word_aggregation_forward.2} parent=11 // pred_region
          %126 = vsyncadd [#allocation5], 0
          %s128 = sshll.u32 %s1, 4
          %s129 = int_to_ptr.hbm [resolvable:$true] %s128
          %s130 = sshll.u32 [#allocation4], 4
          %s131 = int_to_ptr.vmem [resolvable:$true] %s130
          %133 = dma.hbm_to_vmem [thread:$0]  %s129, 16, %s131, [#allocation5]
        $region16: #{word_aggregation_forward.2} parent=11 // pred_fallthru
          _
        // Predicated region
        $region17: #{word_aggregation_forward.2} parent=11 // pred_check
          %p134 = pneg %p81
        $region18: #{word_aggregation_forward.2} parent=11 // pred_check_branch
          %136 = sbr.rel (%p134) target = $region20
        $region19: #{word_aggregation_forward.2} parent=11 // pred_region
          %138 = vsyncadd [#allocation5], 0
          %s140 = sshll.u32 %s2, 4
          %s141 = int_to_ptr.hbm [resolvable:$true] %s140
          %s142 = sshll.u32 [#allocation6], 4
          %s143 = int_to_ptr.vmem [resolvable:$true] %s142
          %145 = dma.hbm_to_vmem [thread:$0]  %s141, 16, %s143, [#allocation5]
        $region20: #{word_aggregation_forward.2} parent=11 // pred_fallthru
          _
      $region12: #{word_aggregation_forward.2} parent=5 // pred_fallthru
        _
      %p146 = scmp.lt.s32.totalorder %s13, 2
      // Predicated region
      $region21: #{word_aggregation_forward.2} parent=5 // pred_check
        %p147 = pneg %p146
      $region22: #{word_aggregation_forward.2} parent=5 // pred_check_branch
        %149 = sbr.rel (%p147) target = $region24
      $region23: #{word_aggregation_forward.2} parent=5 // pred_region
        // Predicated region
        $region25: #{word_aggregation_forward.2} parent=23 // pred_check
          %p150 = pneg %p33
        $region26: #{word_aggregation_forward.2} parent=23 // pred_check_branch
          %152 = sbr.rel (%p150) target = $region28
        $region27: #{word_aggregation_forward.2} parent=23 // pred_region
          %s153 = sand.u32 %s23, 1
          %s154 = scalar_lea.sflag [#allocation3], %s153
          %s155 = sand.u32 %s23, 1
          %s156 = smul.addr %s155, 1024
          %s157 = scalar_lea.vmem [#allocation2], %s156
          %s158 = smul.u32 128, %s13
          %160 = vsyncadd %s154, 0
          %s161 = smul.addr %s158, 8
          %s162 = scalar_lea.hbm %s0, %s161
          %s163 = sshll.u32 %s162, 4
          %s164 = int_to_ptr.hbm [resolvable:$true] %s163
          %s165 = sshll.u32 %s157, 4
          %s166 = int_to_ptr.vmem [resolvable:$true] %s165
          %171 = dma.hbm_to_vmem [thread:$0]  %s164, 16384, %s166, %s154, 128, 128, 8
        $region28: #{word_aggregation_forward.2} parent=23 // pred_fallthru
          _
      $region24: #{word_aggregation_forward.2} parent=5 // pred_fallthru
        _
      %p172 = scmp.le.s32.totalorder 1, %s13
      %p173 = scmp.lt.s32.totalorder %s13, 3
      %p174 = pnand %p172, %p173
      %p175 = pneg %p174
      // Predicated region
      $region29: #{word_aggregation_forward.2} parent=5 // pred_check
        _
      $region30: #{word_aggregation_forward.2} parent=5 // pred_check_branch
        %177 = sbr.rel (%p174) target = $region32
      $region31: #{word_aggregation_forward.2} parent=5 // pred_region
        %s178 = ssub.s32 %s13, 1
        %s179 = sand.u32 %s26, 1
        %s180 = scalar_lea.sflag [#allocation3], %s179
        %s181 = sand.u32 %s26, 1
        %s182 = smul.addr %s181, 1024
        %s183 = scalar_lea.vmem [#allocation2], %s182
        // Predicated region
        $region33: #{word_aggregation_forward.2} parent=31 // pred_check
          %p184 = pneg %p39
        $region34: #{word_aggregation_forward.2} parent=31 // pred_check_branch
          %186 = sbr.rel (%p184) target = $region36
        $region35: #{word_aggregation_forward.2} parent=31 // pred_region
          %188 = dma.done %s180, 16384
        $region36: #{word_aggregation_forward.2} parent=31 // pred_fallthru
          _
        // Predicated region
        $region37: #{word_aggregation_forward.2} parent=31 // pred_check
          %p189 = pneg %p60
        $region38: #{word_aggregation_forward.2} parent=31 // pred_check_branch
          %191 = sbr.rel (%p189) target = $region40
        $region39: #{word_aggregation_forward.2} parent=31 // pred_region
          %193 = dma.done [#allocation5], 16
        $region40: #{word_aggregation_forward.2} parent=31 // pred_fallthru
          _
        // Predicated region
        $region41: #{word_aggregation_forward.2} parent=31 // pred_check
          %p194 = pneg %p81
        $region42: #{word_aggregation_forward.2} parent=31 // pred_check_branch
          %196 = sbr.rel (%p194) target = $region44
        $region43: #{word_aggregation_forward.2} parent=31 // pred_region
          %198 = dma.done [#allocation5], 16
        $region44: #{word_aggregation_forward.2} parent=31 // pred_fallthru
          _
        %s199 = sand.u32 %s26, 1
        %s200 = scalar_lea.sflag [#allocation3], %s199
        %s201 = sand.u32 %s26, 1
        %s202 = smul.addr %s201, 1024
        %s203 = scalar_lea.vmem [#allocation2], %s202
        %p204 = pneg %p39
        %p205 = pneg %p36
        %p206 = pneg %p60
        %p207 = pneg %p57
        %p208 = pneg %p81
        %p209 = pneg %p78
        %p210 = pneg %p107
        %p211 = pneg %p104
        %s212 = smul.u32 128, %s18
        %p213 = scmp.lt.s32.totalorder %s212, 255
        %s214 = scalar_select %p213, %s212, 255
        %s215 = smul.addr %s214, 8
        %s216 = scalar_lea.vmem %s3, %s215
        %s217 = smul.u32 128, %s18
        %s218 = smul.u32 128, %s18
        %p219 = scmp.lt.s32.totalorder %s218, 255
        %s220 = scalar_select %p219, %s218, 255
        %s221 = smul.addr %s220, 8
        %s222 = scalar_lea.vmem %s3, %s221
        %s223 = smul.u32 128, %s18
        %v224 = vld [vmem:[%s183] sm:$0xff]
        %v225 = vld [vmem:[%s183 + $0x8] sm:$0xff]
        %v226 = vld [vmem:[%s183 + $0x10] sm:$0xff]
        %v227 = vld [vmem:[%s183 + $0x18] sm:$0xff]
        %v228 = vld [vmem:[%s183 + $0x20] sm:$0xff]
        %v229 = vld [vmem:[%s183 + $0x28] sm:$0xff]
        %v230 = vld [vmem:[%s183 + $0x30] sm:$0xff]
        %v231 = vld [vmem:[%s183 + $0x38] sm:$0xff]
        %v232 = vld [vmem:[%s183 + $0x40] sm:$0xff]
        %v233 = vld [vmem:[%s183 + $0x48] sm:$0xff]
        %v234 = vld [vmem:[%s183 + $0x50] sm:$0xff]
        %v235 = vld [vmem:[%s183 + $0x58] sm:$0xff]
        %v236 = vld [vmem:[%s183 + $0x60] sm:$0xff]
        %v237 = vld [vmem:[%s183 + $0x68] sm:$0xff]
        %v238 = vld [vmem:[%s183 + $0x70] sm:$0xff]
        %v239 = vld [vmem:[%s183 + $0x78] sm:$0xff]
        %v240 = vld [vmem:[%s183 + $0x80] sm:$0xff]
        %v241 = vld [vmem:[%s183 + $0x88] sm:$0xff]
        %v242 = vld [vmem:[%s183 + $0x90] sm:$0xff]
        %v243 = vld [vmem:[%s183 + $0x98] sm:$0xff]
        %v244 = vld [vmem:[%s183 + $0xa0] sm:$0xff]
        %v245 = vld [vmem:[%s183 + $0xa8] sm:$0xff]
        %v246 = vld [vmem:[%s183 + $0xb0] sm:$0xff]
        %v247 = vld [vmem:[%s183 + $0xb8] sm:$0xff]
        %v248 = vld [vmem:[%s183 + $0xc0] sm:$0xff]
        %v249 = vld [vmem:[%s183 + $0xc8] sm:$0xff]
        %v250 = vld [vmem:[%s183 + $0xd0] sm:$0xff]
        %v251 = vld [vmem:[%s183 + $0xd8] sm:$0xff]
        %v252 = vld [vmem:[%s183 + $0xe0] sm:$0xff]
        %v253 = vld [vmem:[%s183 + $0xe8] sm:$0xff]
        %v254 = vld [vmem:[%s183 + $0xf0] sm:$0xff]
        %v255 = vld [vmem:[%s183 + $0xf8] sm:$0xff]
        %v256 = vld [vmem:[%s183 + $0x100] sm:$0xff]
        %v257 = vld [vmem:[%s183 + $0x108] sm:$0xff]
        %v258 = vld [vmem:[%s183 + $0x110] sm:$0xff]
        %v259 = vld [vmem:[%s183 + $0x118] sm:$0xff]
        %v260 = vld [vmem:[%s183 + $0x120] sm:$0xff]
        %v261 = vld [vmem:[%s183 + $0x128] sm:$0xff]
        %v262 = vld [vmem:[%s183 + $0x130] sm:$0xff]
        %v263 = vld [vmem:[%s183 + $0x138] sm:$0xff]
        %v264 = vld [vmem:[%s183 + $0x140] sm:$0xff]
        %v265 = vld [vmem:[%s183 + $0x148] sm:$0xff]
        %v266 = vld [vmem:[%s183 + $0x150] sm:$0xff]
        %v267 = vld [vmem:[%s183 + $0x158] sm:$0xff]
        %v268 = vld [vmem:[%s183 + $0x160] sm:$0xff]
        %v269 = vld [vmem:[%s183 + $0x168] sm:$0xff]
        %v270 = vld [vmem:[%s183 + $0x170] sm:$0xff]
        %v271 = vld [vmem:[%s183 + $0x178] sm:$0xff]
        %v272 = vld [vmem:[%s183 + $0x180] sm:$0xff]
        %v273 = vld [vmem:[%s183 + $0x188] sm:$0xff]
        %v274 = vld [vmem:[%s183 + $0x190] sm:$0xff]
        %v275 = vld [vmem:[%s183 + $0x198] sm:$0xff]
        %v276 = vld [vmem:[%s183 + $0x1a0] sm:$0xff]
        %v277 = vld [vmem:[%s183 + $0x1a8] sm:$0xff]
        %v278 = vld [vmem:[%s183 + $0x1b0] sm:$0xff]
        %v279 = vld [vmem:[%s183 + $0x1b8] sm:$0xff]
        %v280 = vld [vmem:[%s183 + $0x1c0] sm:$0xff]
        %v281 = vld [vmem:[%s183 + $0x1c8] sm:$0xff]
        %v282 = vld [vmem:[%s183 + $0x1d0] sm:$0xff]
        %v283 = vld [vmem:[%s183 + $0x1d8] sm:$0xff]
        %v284 = vld [vmem:[%s183 + $0x1e0] sm:$0xff]
        %v285 = vld [vmem:[%s183 + $0x1e8] sm:$0xff]
        %v286 = vld [vmem:[%s183 + $0x1f0] sm:$0xff]
        %v287 = vld [vmem:[%s183 + $0x1f8] sm:$0xff]
        %v288 = vld [vmem:[%s183 + $0x200] sm:$0xff]
        %v289 = vld [vmem:[%s183 + $0x208] sm:$0xff]
        %v290 = vld [vmem:[%s183 + $0x210] sm:$0xff]
        %v291 = vld [vmem:[%s183 + $0x218] sm:$0xff]
        %v292 = vld [vmem:[%s183 + $0x220] sm:$0xff]
        %v293 = vld [vmem:[%s183 + $0x228] sm:$0xff]
        %v294 = vld [vmem:[%s183 + $0x230] sm:$0xff]
        %v295 = vld [vmem:[%s183 + $0x238] sm:$0xff]
        %v296 = vld [vmem:[%s183 + $0x240] sm:$0xff]
        %v297 = vld [vmem:[%s183 + $0x248] sm:$0xff]
        %v298 = vld [vmem:[%s183 + $0x250] sm:$0xff]
        %v299 = vld [vmem:[%s183 + $0x258] sm:$0xff]
        %v300 = vld [vmem:[%s183 + $0x260] sm:$0xff]
        %v301 = vld [vmem:[%s183 + $0x268] sm:$0xff]
        %v302 = vld [vmem:[%s183 + $0x270] sm:$0xff]
        %v303 = vld [vmem:[%s183 + $0x278] sm:$0xff]
        %v304 = vld [vmem:[%s183 + $0x280] sm:$0xff]
        %v305 = vld [vmem:[%s183 + $0x288] sm:$0xff]
        %v306 = vld [vmem:[%s183 + $0x290] sm:$0xff]
        %v307 = vld [vmem:[%s183 + $0x298] sm:$0xff]
        %v308 = vld [vmem:[%s183 + $0x2a0] sm:$0xff]
        %v309 = vld [vmem:[%s183 + $0x2a8] sm:$0xff]
        %v310 = vld [vmem:[%s183 + $0x2b0] sm:$0xff]
        %v311 = vld [vmem:[%s183 + $0x2b8] sm:$0xff]
        %v312 = vld [vmem:[%s183 + $0x2c0] sm:$0xff]
        %v313 = vld [vmem:[%s183 + $0x2c8] sm:$0xff]
        %v314 = vld [vmem:[%s183 + $0x2d0] sm:$0xff]
        %v315 = vld [vmem:[%s183 + $0x2d8] sm:$0xff]
        %v316 = vld [vmem:[%s183 + $0x2e0] sm:$0xff]
        %v317 = vld [vmem:[%s183 + $0x2e8] sm:$0xff]
        %v318 = vld [vmem:[%s183 + $0x2f0] sm:$0xff]
        %v319 = vld [vmem:[%s183 + $0x2f8] sm:$0xff]
        %v320 = vld [vmem:[%s183 + $0x300] sm:$0xff]
        %v321 = vld [vmem:[%s183 + $0x308] sm:$0xff]
        %v322 = vld [vmem:[%s183 + $0x310] sm:$0xff]
        %v323 = vld [vmem:[%s183 + $0x318] sm:$0xff]
        %v324 = vld [vmem:[%s183 + $0x320] sm:$0xff]
        %v325 = vld [vmem:[%s183 + $0x328] sm:$0xff]
        %v326 = vld [vmem:[%s183 + $0x330] sm:$0xff]
        %v327 = vld [vmem:[%s183 + $0x338] sm:$0xff]
        %v328 = vld [vmem:[%s183 + $0x340] sm:$0xff]
        %v329 = vld [vmem:[%s183 + $0x348] sm:$0xff]
        %v330 = vld [vmem:[%s183 + $0x350] sm:$0xff]
        %v331 = vld [vmem:[%s183 + $0x358] sm:$0xff]
        %v332 = vld [vmem:[%s183 + $0x360] sm:$0xff]
        %v333 = vld [vmem:[%s183 + $0x368] sm:$0xff]
        %v334 = vld [vmem:[%s183 + $0x370] sm:$0xff]
        %v335 = vld [vmem:[%s183 + $0x378] sm:$0xff]
        %v336 = vld [vmem:[%s183 + $0x380] sm:$0xff]
        %v337 = vld [vmem:[%s183 + $0x388] sm:$0xff]
        %v338 = vld [vmem:[%s183 + $0x390] sm:$0xff]
        %v339 = vld [vmem:[%s183 + $0x398] sm:$0xff]
        %v340 = vld [vmem:[%s183 + $0x3a0] sm:$0xff]
        %v341 = vld [vmem:[%s183 + $0x3a8] sm:$0xff]
        %v342 = vld [vmem:[%s183 + $0x3b0] sm:$0xff]
        %v343 = vld [vmem:[%s183 + $0x3b8] sm:$0xff]
        %v344 = vld [vmem:[%s183 + $0x3c0] sm:$0xff]
        %v345 = vld [vmem:[%s183 + $0x3c8] sm:$0xff]
        %v346 = vld [vmem:[%s183 + $0x3d0] sm:$0xff]
        %v347 = vld [vmem:[%s183 + $0x3d8] sm:$0xff]
        %v348 = vld [vmem:[%s183 + $0x3e0] sm:$0xff]
        %v349 = vld [vmem:[%s183 + $0x3e8] sm:$0xff]
        %v350 = vld [vmem:[%s183 + $0x3f0] sm:$0xff]
        %v351 = vld [vmem:[%s183 + $0x3f8] sm:$0xff]
        %vm352 = vcmask 523264
        %v353 = vsel %vm352, %v224, 0.0
        %354 = vadd.xlane.f32.xlu0 %v353
        %v355 = vpop.xlane.xlu0 %354
        %v356 = vsel %vm352, %v225, 0.0
        %357 = vadd.xlane.f32.xlu0 %v356
        %v358 = vpop.xlane.xlu0 %357
        %v359 = vsel %vm352, %v226, 0.0
        %360 = vadd.xlane.f32.xlu0 %v359
        %v361 = vpop.xlane.xlu0 %360
        %v362 = vsel %vm352, %v227, 0.0
        %363 = vadd.xlane.f32.xlu0 %v362
        %v364 = vpop.xlane.xlu0 %363
        %v365 = vsel %vm352, %v228, 0.0
        %366 = vadd.xlane.f32.xlu0 %v365
        %v367 = vpop.xlane.xlu0 %366
        %v368 = vsel %vm352, %v229, 0.0
        %369 = vadd.xlane.f32.xlu0 %v368
        %v370 = vpop.xlane.xlu0 %369
        %v371 = vsel %vm352, %v230, 0.0
        %372 = vadd.xlane.f32.xlu0 %v371
        %v373 = vpop.xlane.xlu0 %372
        %v374 = vsel %vm352, %v231, 0.0
        %375 = vadd.xlane.f32.xlu0 %v374
        %v376 = vpop.xlane.xlu0 %375
        %v377 = vsel %vm352, %v232, 0.0
        %378 = vadd.xlane.f32.xlu0 %v377
        %v379 = vpop.xlane.xlu0 %378
        %v380 = vsel %vm352, %v233, 0.0
        %381 = vadd.xlane.f32.xlu0 %v380
        %v382 = vpop.xlane.xlu0 %381
        %v383 = vsel %vm352, %v234, 0.0
        %384 = vadd.xlane.f32.xlu0 %v383
        %v385 = vpop.xlane.xlu0 %384
        %v386 = vsel %vm352, %v235, 0.0
        %387 = vadd.xlane.f32.xlu0 %v386
        %v388 = vpop.xlane.xlu0 %387
        %v389 = vsel %vm352, %v236, 0.0
        %390 = vadd.xlane.f32.xlu0 %v389
        %v391 = vpop.xlane.xlu0 %390
        %v392 = vsel %vm352, %v237, 0.0
        %393 = vadd.xlane.f32.xlu0 %v392
        %v394 = vpop.xlane.xlu0 %393
        %v395 = vsel %vm352, %v238, 0.0
        %396 = vadd.xlane.f32.xlu0 %v395
        %v397 = vpop.xlane.xlu0 %396
        %v398 = vsel %vm352, %v239, 0.0
        %399 = vadd.xlane.f32.xlu0 %v398
        %v400 = vpop.xlane.xlu0 %399
        %v401 = vsel %vm352, %v240, 0.0
        %402 = vadd.xlane.f32.xlu0 %v401
        %v403 = vpop.xlane.xlu0 %402
        %v404 = vsel %vm352, %v241, 0.0
        %405 = vadd.xlane.f32.xlu0 %v404
        %v406 = vpop.xlane.xlu0 %405
        %v407 = vsel %vm352, %v242, 0.0
        %408 = vadd.xlane.f32.xlu0 %v407
        %v409 = vpop.xlane.xlu0 %408
        %v410 = vsel %vm352, %v243, 0.0
        %411 = vadd.xlane.f32.xlu0 %v410
        %v412 = vpop.xlane.xlu0 %411
        %v413 = vsel %vm352, %v244, 0.0
        %414 = vadd.xlane.f32.xlu0 %v413
        %v415 = vpop.xlane.xlu0 %414
        %v416 = vsel %vm352, %v245, 0.0
        %417 = vadd.xlane.f32.xlu0 %v416
        %v418 = vpop.xlane.xlu0 %417
        %v419 = vsel %vm352, %v246, 0.0
        %420 = vadd.xlane.f32.xlu0 %v419
        %v421 = vpop.xlane.xlu0 %420
        %v422 = vsel %vm352, %v247, 0.0
        %423 = vadd.xlane.f32.xlu0 %v422
        %v424 = vpop.xlane.xlu0 %423
        %v425 = vsel %vm352, %v248, 0.0
        %426 = vadd.xlane.f32.xlu0 %v425
        %v427 = vpop.xlane.xlu0 %426
        %v428 = vsel %vm352, %v249, 0.0
        %429 = vadd.xlane.f32.xlu0 %v428
        %v430 = vpop.xlane.xlu0 %429
        %v431 = vsel %vm352, %v250, 0.0
        %432 = vadd.xlane.f32.xlu0 %v431
        %v433 = vpop.xlane.xlu0 %432
        %v434 = vsel %vm352, %v251, 0.0
        %435 = vadd.xlane.f32.xlu0 %v434
        %v436 = vpop.xlane.xlu0 %435
        %v437 = vsel %vm352, %v252, 0.0
        %438 = vadd.xlane.f32.xlu0 %v437
        %v439 = vpop.xlane.xlu0 %438
        %v440 = vsel %vm352, %v253, 0.0
        %441 = vadd.xlane.f32.xlu0 %v440
        %v442 = vpop.xlane.xlu0 %441
        %v443 = vsel %vm352, %v254, 0.0
        %444 = vadd.xlane.f32.xlu0 %v443
        %v445 = vpop.xlane.xlu0 %444
        %v446 = vsel %vm352, %v255, 0.0
        %447 = vadd.xlane.f32.xlu0 %v446
        %v448 = vpop.xlane.xlu0 %447
        %v449 = vsel %vm352, %v256, 0.0
        %450 = vadd.xlane.f32.xlu0 %v449
        %v451 = vpop.xlane.xlu0 %450
        %v452 = vsel %vm352, %v257, 0.0
        %453 = vadd.xlane.f32.xlu0 %v452
        %v454 = vpop.xlane.xlu0 %453
        %v455 = vsel %vm352, %v258, 0.0
        %456 = vadd.xlane.f32.xlu0 %v455
        %v457 = vpop.xlane.xlu0 %456
        %v458 = vsel %vm352, %v259, 0.0
        %459 = vadd.xlane.f32.xlu0 %v458
        %v460 = vpop.xlane.xlu0 %459
        %v461 = vsel %vm352, %v260, 0.0
        %462 = vadd.xlane.f32.xlu0 %v461
        %v463 = vpop.xlane.xlu0 %462
        %v464 = vsel %vm352, %v261, 0.0
        %465 = vadd.xlane.f32.xlu0 %v464
        %v466 = vpop.xlane.xlu0 %465
        %v467 = vsel %vm352, %v262, 0.0
        %468 = vadd.xlane.f32.xlu0 %v467
        %v469 = vpop.xlane.xlu0 %468
        %v470 = vsel %vm352, %v263, 0.0
        %471 = vadd.xlane.f32.xlu0 %v470
        %v472 = vpop.xlane.xlu0 %471
        %v473 = vsel %vm352, %v264, 0.0
        %474 = vadd.xlane.f32.xlu0 %v473
        %v475 = vpop.xlane.xlu0 %474
        %v476 = vsel %vm352, %v265, 0.0
        %477 = vadd.xlane.f32.xlu0 %v476
        %v478 = vpop.xlane.xlu0 %477
        %v479 = vsel %vm352, %v266, 0.0
        %480 = vadd.xlane.f32.xlu0 %v479
        %v481 = vpop.xlane.xlu0 %480
        %v482 = vsel %vm352, %v267, 0.0
        %483 = vadd.xlane.f32.xlu0 %v482
        %v484 = vpop.xlane.xlu0 %483
        %v485 = vsel %vm352, %v268, 0.0
        %486 = vadd.xlane.f32.xlu0 %v485
        %v487 = vpop.xlane.xlu0 %486
        %v488 = vsel %vm352, %v269, 0.0
        %489 = vadd.xlane.f32.xlu0 %v488
        %v490 = vpop.xlane.xlu0 %489
        %v491 = vsel %vm352, %v270, 0.0
        %492 = vadd.xlane.f32.xlu0 %v491
        %v493 = vpop.xlane.xlu0 %492
        %v494 = vsel %vm352, %v271, 0.0
        %495 = vadd.xlane.f32.xlu0 %v494
        %v496 = vpop.xlane.xlu0 %495
        %v497 = vsel %vm352, %v272, 0.0
        %498 = vadd.xlane.f32.xlu0 %v497
        %v499 = vpop.xlane.xlu0 %498
        %v500 = vsel %vm352, %v273, 0.0
        %501 = vadd.xlane.f32.xlu0 %v500
        %v502 = vpop.xlane.xlu0 %501
        %v503 = vsel %vm352, %v274, 0.0
        %504 = vadd.xlane.f32.xlu0 %v503
        %v505 = vpop.xlane.xlu0 %504
        %v506 = vsel %vm352, %v275, 0.0
        %507 = vadd.xlane.f32.xlu0 %v506
        %v508 = vpop.xlane.xlu0 %507
        %v509 = vsel %vm352, %v276, 0.0
        %510 = vadd.xlane.f32.xlu0 %v509
        %v511 = vpop.xlane.xlu0 %510
        %v512 = vsel %vm352, %v277, 0.0
        %513 = vadd.xlane.f32.xlu0 %v512
        %v514 = vpop.xlane.xlu0 %513
        %v515 = vsel %vm352, %v278, 0.0
        %516 = vadd.xlane.f32.xlu0 %v515
        %v517 = vpop.xlane.xlu0 %516
        %v518 = vsel %vm352, %v279, 0.0
        %519 = vadd.xlane.f32.xlu0 %v518
        %v520 = vpop.xlane.xlu0 %519
        %v521 = vsel %vm352, %v280, 0.0
        %522 = vadd.xlane.f32.xlu0 %v521
        %v523 = vpop.xlane.xlu0 %522
        %v524 = vsel %vm352, %v281, 0.0
        %525 = vadd.xlane.f32.xlu0 %v524
        %v526 = vpop.xlane.xlu0 %525
        %v527 = vsel %vm352, %v282, 0.0
        %528 = vadd.xlane.f32.xlu0 %v527
        %v529 = vpop.xlane.xlu0 %528
        %v530 = vsel %vm352, %v283, 0.0
        %531 = vadd.xlane.f32.xlu0 %v530
        %v532 = vpop.xlane.xlu0 %531
        %v533 = vsel %vm352, %v284, 0.0
        %534 = vadd.xlane.f32.xlu0 %v533
        %v535 = vpop.xlane.xlu0 %534
        %v536 = vsel %vm352, %v285, 0.0
        %537 = vadd.xlane.f32.xlu0 %v536
        %v538 = vpop.xlane.xlu0 %537
        %v539 = vsel %vm352, %v286, 0.0
        %540 = vadd.xlane.f32.xlu0 %v539
        %v541 = vpop.xlane.xlu0 %540
        %v542 = vsel %vm352, %v287, 0.0
        %543 = vadd.xlane.f32.xlu0 %v542
        %v544 = vpop.xlane.xlu0 %543
        %v545 = vsel %vm352, %v288, 0.0
        %546 = vadd.xlane.f32.xlu0 %v545
        %v547 = vpop.xlane.xlu0 %546
        %v548 = vsel %vm352, %v289, 0.0
        %549 = vadd.xlane.f32.xlu0 %v548
        %v550 = vpop.xlane.xlu0 %549
        %v551 = vsel %vm352, %v290, 0.0
        %552 = vadd.xlane.f32.xlu0 %v551
        %v553 = vpop.xlane.xlu0 %552
        %v554 = vsel %vm352, %v291, 0.0
        %555 = vadd.xlane.f32.xlu0 %v554
        %v556 = vpop.xlane.xlu0 %555
        %v557 = vsel %vm352, %v292, 0.0
        %558 = vadd.xlane.f32.xlu0 %v557
        %v559 = vpop.xlane.xlu0 %558
        %v560 = vsel %vm352, %v293, 0.0
        %561 = vadd.xlane.f32.xlu0 %v560
        %v562 = vpop.xlane.xlu0 %561
        %v563 = vsel %vm352, %v294, 0.0
        %564 = vadd.xlane.f32.xlu0 %v563
        %v565 = vpop.xlane.xlu0 %564
        %v566 = vsel %vm352, %v295, 0.0
        %567 = vadd.xlane.f32.xlu0 %v566
        %v568 = vpop.xlane.xlu0 %567
        %v569 = vsel %vm352, %v296, 0.0
        %570 = vadd.xlane.f32.xlu0 %v569
        %v571 = vpop.xlane.xlu0 %570
        %v572 = vsel %vm352, %v297, 0.0
        %573 = vadd.xlane.f32.xlu0 %v572
        %v574 = vpop.xlane.xlu0 %573
        %v575 = vsel %vm352, %v298, 0.0
        %576 = vadd.xlane.f32.xlu0 %v575
        %v577 = vpop.xlane.xlu0 %576
        %v578 = vsel %vm352, %v299, 0.0
        %579 = vadd.xlane.f32.xlu0 %v578
        %v580 = vpop.xlane.xlu0 %579
        %v581 = vsel %vm352, %v300, 0.0
        %582 = vadd.xlane.f32.xlu0 %v581
        %v583 = vpop.xlane.xlu0 %582
        %v584 = vsel %vm352, %v301, 0.0
        %585 = vadd.xlane.f32.xlu0 %v584
        %v586 = vpop.xlane.xlu0 %585
        %v587 = vsel %vm352, %v302, 0.0
        %588 = vadd.xlane.f32.xlu0 %v587
        %v589 = vpop.xlane.xlu0 %588
        %v590 = vsel %vm352, %v303, 0.0
        %591 = vadd.xlane.f32.xlu0 %v590
        %v592 = vpop.xlane.xlu0 %591
        %v593 = vsel %vm352, %v304, 0.0
        %594 = vadd.xlane.f32.xlu0 %v593
        %v595 = vpop.xlane.xlu0 %594
        %v596 = vsel %vm352, %v305, 0.0
        %597 = vadd.xlane.f32.xlu0 %v596
        %v598 = vpop.xlane.xlu0 %597
        %v599 = vsel %vm352, %v306, 0.0
        %600 = vadd.xlane.f32.xlu0 %v599
        %v601 = vpop.xlane.xlu0 %600
        %v602 = vsel %vm352, %v307, 0.0
        %603 = vadd.xlane.f32.xlu0 %v602
        %v604 = vpop.xlane.xlu0 %603
        %v605 = vsel %vm352, %v308, 0.0
        %606 = vadd.xlane.f32.xlu0 %v605
        %v607 = vpop.xlane.xlu0 %606
        %v608 = vsel %vm352, %v309, 0.0
        %609 = vadd.xlane.f32.xlu0 %v608
        %v610 = vpop.xlane.xlu0 %609
        %v611 = vsel %vm352, %v310, 0.0
        %612 = vadd.xlane.f32.xlu0 %v611
        %v613 = vpop.xlane.xlu0 %612
        %v614 = vsel %vm352, %v311, 0.0
        %615 = vadd.xlane.f32.xlu0 %v614
        %v616 = vpop.xlane.xlu0 %615
        %v617 = vsel %vm352, %v312, 0.0
        %618 = vadd.xlane.f32.xlu0 %v617
        %v619 = vpop.xlane.xlu0 %618
        %v620 = vsel %vm352, %v313, 0.0
        %621 = vadd.xlane.f32.xlu0 %v620
        %v622 = vpop.xlane.xlu0 %621
        %v623 = vsel %vm352, %v314, 0.0
        %624 = vadd.xlane.f32.xlu0 %v623
        %v625 = vpop.xlane.xlu0 %624
        %v626 = vsel %vm352, %v315, 0.0
        %627 = vadd.xlane.f32.xlu0 %v626
        %v628 = vpop.xlane.xlu0 %627
        %v629 = vsel %vm352, %v316, 0.0
        %630 = vadd.xlane.f32.xlu0 %v629
        %v631 = vpop.xlane.xlu0 %630
        %v632 = vsel %vm352, %v317, 0.0
        %633 = vadd.xlane.f32.xlu0 %v632
        %v634 = vpop.xlane.xlu0 %633
        %v635 = vsel %vm352, %v318, 0.0
        %636 = vadd.xlane.f32.xlu0 %v635
        %v637 = vpop.xlane.xlu0 %636
        %v638 = vsel %vm352, %v319, 0.0
        %639 = vadd.xlane.f32.xlu0 %v638
        %v640 = vpop.xlane.xlu0 %639
        %v641 = vsel %vm352, %v320, 0.0
        %642 = vadd.xlane.f32.xlu0 %v641
        %v643 = vpop.xlane.xlu0 %642
        %v644 = vsel %vm352, %v321, 0.0
        %645 = vadd.xlane.f32.xlu0 %v644
        %v646 = vpop.xlane.xlu0 %645
        %v647 = vsel %vm352, %v322, 0.0
        %648 = vadd.xlane.f32.xlu0 %v647
        %v649 = vpop.xlane.xlu0 %648
        %v650 = vsel %vm352, %v323, 0.0
        %651 = vadd.xlane.f32.xlu0 %v650
        %v652 = vpop.xlane.xlu0 %651
        %v653 = vsel %vm352, %v324, 0.0
        %654 = vadd.xlane.f32.xlu0 %v653
        %v655 = vpop.xlane.xlu0 %654
        %v656 = vsel %vm352, %v325, 0.0
        %657 = vadd.xlane.f32.xlu0 %v656
        %v658 = vpop.xlane.xlu0 %657
        %v659 = vsel %vm352, %v326, 0.0
        %660 = vadd.xlane.f32.xlu0 %v659
        %v661 = vpop.xlane.xlu0 %660
        %v662 = vsel %vm352, %v327, 0.0
        %663 = vadd.xlane.f32.xlu0 %v662
        %v664 = vpop.xlane.xlu0 %663
        %v665 = vsel %vm352, %v328, 0.0
        %666 = vadd.xlane.f32.xlu0 %v665
        %v667 = vpop.xlane.xlu0 %666
        %v668 = vsel %vm352, %v329, 0.0
        %669 = vadd.xlane.f32.xlu0 %v668
        %v670 = vpop.xlane.xlu0 %669
        %v671 = vsel %vm352, %v330, 0.0
        %672 = vadd.xlane.f32.xlu0 %v671
        %v673 = vpop.xlane.xlu0 %672
        %v674 = vsel %vm352, %v331, 0.0
        %675 = vadd.xlane.f32.xlu0 %v674
        %v676 = vpop.xlane.xlu0 %675
        %v677 = vsel %vm352, %v332, 0.0
        %678 = vadd.xlane.f32.xlu0 %v677
        %v679 = vpop.xlane.xlu0 %678
        %v680 = vsel %vm352, %v333, 0.0
        %681 = vadd.xlane.f32.xlu0 %v680
        %v682 = vpop.xlane.xlu0 %681
        %v683 = vsel %vm352, %v334, 0.0
        %684 = vadd.xlane.f32.xlu0 %v683
        %v685 = vpop.xlane.xlu0 %684
        %v686 = vsel %vm352, %v335, 0.0
        %687 = vadd.xlane.f32.xlu0 %v686
        %v688 = vpop.xlane.xlu0 %687
        %v689 = vsel %vm352, %v336, 0.0
        %690 = vadd.xlane.f32.xlu0 %v689
        %v691 = vpop.xlane.xlu0 %690
        %v692 = vsel %vm352, %v337, 0.0
        %693 = vadd.xlane.f32.xlu0 %v692
        %v694 = vpop.xlane.xlu0 %693
        %v695 = vsel %vm352, %v338, 0.0
        %696 = vadd.xlane.f32.xlu0 %v695
        %v697 = vpop.xlane.xlu0 %696
        %v698 = vsel %vm352, %v339, 0.0
        %699 = vadd.xlane.f32.xlu0 %v698
        %v700 = vpop.xlane.xlu0 %699
        %v701 = vsel %vm352, %v340, 0.0
        %702 = vadd.xlane.f32.xlu0 %v701
        %v703 = vpop.xlane.xlu0 %702
        %v704 = vsel %vm352, %v341, 0.0
        %705 = vadd.xlane.f32.xlu0 %v704
        %v706 = vpop.xlane.xlu0 %705
        %v707 = vsel %vm352, %v342, 0.0
        %708 = vadd.xlane.f32.xlu0 %v707
        %v709 = vpop.xlane.xlu0 %708
        %v710 = vsel %vm352, %v343, 0.0
        %711 = vadd.xlane.f32.xlu0 %v710
        %v712 = vpop.xlane.xlu0 %711
        %v713 = vsel %vm352, %v344, 0.0
        %714 = vadd.xlane.f32.xlu0 %v713
        %v715 = vpop.xlane.xlu0 %714
        %v716 = vsel %vm352, %v345, 0.0
        %717 = vadd.xlane.f32.xlu0 %v716
        %v718 = vpop.xlane.xlu0 %717
        %v719 = vsel %vm352, %v346, 0.0
        %720 = vadd.xlane.f32.xlu0 %v719
        %v721 = vpop.xlane.xlu0 %720
        %v722 = vsel %vm352, %v347, 0.0
        %723 = vadd.xlane.f32.xlu0 %v722
        %v724 = vpop.xlane.xlu0 %723
        %v725 = vsel %vm352, %v348, 0.0
        %726 = vadd.xlane.f32.xlu0 %v725
        %v727 = vpop.xlane.xlu0 %726
        %v728 = vsel %vm352, %v349, 0.0
        %729 = vadd.xlane.f32.xlu0 %v728
        %v730 = vpop.xlane.xlu0 %729
        %v731 = vsel %vm352, %v350, 0.0
        %732 = vadd.xlane.f32.xlu0 %v731
        %v733 = vpop.xlane.xlu0 %732
        %v734 = vsel %vm352, %v351, 0.0
        %735 = vadd.xlane.f32.xlu0 %v734
        %v736 = vpop.xlane.xlu0 %735
        %v737 = vrcp.pop 64.0
        %v738 = vmul.f32 64.0, %v737
        %v739 = vsub.f32 1.0, %v738
        %v740 = vmul.f32 %v737, %v739
        %v741 = vadd.f32 %v737, %v740
        %vm742 = vweird.f32 %v737
        %v743 = vsel %vm742, %v737, %v741
        %v744 = vmul.f32 %v355, %v743
        %v745 = vmul.f32 %v358, %v743
        %v746 = vmul.f32 %v361, %v743
        %v747 = vmul.f32 %v364, %v743
        %v748 = vmul.f32 %v367, %v743
        %v749 = vmul.f32 %v370, %v743
        %v750 = vmul.f32 %v373, %v743
        %v751 = vmul.f32 %v376, %v743
        %v752 = vmul.f32 %v379, %v743
        %v753 = vmul.f32 %v382, %v743
        %v754 = vmul.f32 %v385, %v743
        %v755 = vmul.f32 %v388, %v743
        %v756 = vmul.f32 %v391, %v743
        %v757 = vmul.f32 %v394, %v743
        %v758 = vmul.f32 %v397, %v743
        %v759 = vmul.f32 %v400, %v743
        %v760 = vmul.f32 %v403, %v743
        %v761 = vmul.f32 %v406, %v743
        %v762 = vmul.f32 %v409, %v743
        %v763 = vmul.f32 %v412, %v743
        %v764 = vmul.f32 %v415, %v743
        %v765 = vmul.f32 %v418, %v743
        %v766 = vmul.f32 %v421, %v743
        %v767 = vmul.f32 %v424, %v743
        %v768 = vmul.f32 %v427, %v743
        %v769 = vmul.f32 %v430, %v743
        %v770 = vmul.f32 %v433, %v743
        %v771 = vmul.f32 %v436, %v743
        %v772 = vmul.f32 %v439, %v743
        %v773 = vmul.f32 %v442, %v743
        %v774 = vmul.f32 %v445, %v743
        %v775 = vmul.f32 %v448, %v743
        %v776 = vmul.f32 %v451, %v743
        %v777 = vmul.f32 %v454, %v743
        %v778 = vmul.f32 %v457, %v743
        %v779 = vmul.f32 %v460, %v743
        %v780 = vmul.f32 %v463, %v743
        %v781 = vmul.f32 %v466, %v743
        %v782 = vmul.f32 %v469, %v743
        %v783 = vmul.f32 %v472, %v743
        %v784 = vmul.f32 %v475, %v743
        %v785 = vmul.f32 %v478, %v743
        %v786 = vmul.f32 %v481, %v743
        %v787 = vmul.f32 %v484, %v743
        %v788 = vmul.f32 %v487, %v743
        %v789 = vmul.f32 %v490, %v743
        %v790 = vmul.f32 %v493, %v743
        %v791 = vmul.f32 %v496, %v743
        %v792 = vmul.f32 %v499, %v743
        %v793 = vmul.f32 %v502, %v743
        %v794 = vmul.f32 %v505, %v743
        %v795 = vmul.f32 %v508, %v743
        %v796 = vmul.f32 %v511, %v743
        %v797 = vmul.f32 %v514, %v743
        %v798 = vmul.f32 %v517, %v743
        %v799 = vmul.f32 %v520, %v743
        %v800 = vmul.f32 %v523, %v743
        %v801 = vmul.f32 %v526, %v743
        %v802 = vmul.f32 %v529, %v743
        %v803 = vmul.f32 %v532, %v743
        %v804 = vmul.f32 %v535, %v743
        %v805 = vmul.f32 %v538, %v743
        %v806 = vmul.f32 %v541, %v743
        %v807 = vmul.f32 %v544, %v743
        %v808 = vmul.f32 %v547, %v743
        %v809 = vmul.f32 %v550, %v743
        %v810 = vmul.f32 %v553, %v743
        %v811 = vmul.f32 %v556, %v743
        %v812 = vmul.f32 %v559, %v743
        %v813 = vmul.f32 %v562, %v743
        %v814 = vmul.f32 %v565, %v743
        %v815 = vmul.f32 %v568, %v743
        %v816 = vmul.f32 %v571, %v743
        %v817 = vmul.f32 %v574, %v743
        %v818 = vmul.f32 %v577, %v743
        %v819 = vmul.f32 %v580, %v743
        %v820 = vmul.f32 %v583, %v743
        %v821 = vmul.f32 %v586, %v743
        %v822 = vmul.f32 %v589, %v743
        %v823 = vmul.f32 %v592, %v743
        %v824 = vmul.f32 %v595, %v743
        %v825 = vmul.f32 %v598, %v743
        %v826 = vmul.f32 %v601, %v743
        %v827 = vmul.f32 %v604, %v743
        %v828 = vmul.f32 %v607, %v743
        %v829 = vmul.f32 %v610, %v743
        %v830 = vmul.f32 %v613, %v743
        %v831 = vmul.f32 %v616, %v743
        %v832 = vmul.f32 %v619, %v743
        %v833 = vmul.f32 %v622, %v743
        %v834 = vmul.f32 %v625, %v743
        %v835 = vmul.f32 %v628, %v743
        %v836 = vmul.f32 %v631, %v743
        %v837 = vmul.f32 %v634, %v743
        %v838 = vmul.f32 %v637, %v743
        %v839 = vmul.f32 %v640, %v743
        %v840 = vmul.f32 %v643, %v743
        %v841 = vmul.f32 %v646, %v743
        %v842 = vmul.f32 %v649, %v743
        %v843 = vmul.f32 %v652, %v743
        %v844 = vmul.f32 %v655, %v743
        %v845 = vmul.f32 %v658, %v743
        %v846 = vmul.f32 %v661, %v743
        %v847 = vmul.f32 %v664, %v743
        %v848 = vmul.f32 %v667, %v743
        %v849 = vmul.f32 %v670, %v743
        %v850 = vmul.f32 %v673, %v743
        %v851 = vmul.f32 %v676, %v743
        %v852 = vmul.f32 %v679, %v743
        %v853 = vmul.f32 %v682, %v743
        %v854 = vmul.f32 %v685, %v743
        %v855 = vmul.f32 %v688, %v743
        %v856 = vmul.f32 %v691, %v743
        %v857 = vmul.f32 %v694, %v743
        %v858 = vmul.f32 %v697, %v743
        %v859 = vmul.f32 %v700, %v743
        %v860 = vmul.f32 %v703, %v743
        %v861 = vmul.f32 %v706, %v743
        %v862 = vmul.f32 %v709, %v743
        %v863 = vmul.f32 %v712, %v743
        %v864 = vmul.f32 %v715, %v743
        %v865 = vmul.f32 %v718, %v743
        %v866 = vmul.f32 %v721, %v743
        %v867 = vmul.f32 %v724, %v743
        %v868 = vmul.f32 %v727, %v743
        %v869 = vmul.f32 %v730, %v743
        %v870 = vmul.f32 %v733, %v743
        %v871 = vmul.f32 %v736, %v743
        %v872 = vsub.f32 %v224, %v744
        %v873 = vsub.f32 %v225, %v745
        %v874 = vsub.f32 %v226, %v746
        %v875 = vsub.f32 %v227, %v747
        %v876 = vsub.f32 %v228, %v748
        %v877 = vsub.f32 %v229, %v749
        %v878 = vsub.f32 %v230, %v750
        %v879 = vsub.f32 %v231, %v751
        %v880 = vsub.f32 %v232, %v752
        %v881 = vsub.f32 %v233, %v753
        %v882 = vsub.f32 %v234, %v754
        %v883 = vsub.f32 %v235, %v755
        %v884 = vsub.f32 %v236, %v756
        %v885 = vsub.f32 %v237, %v757
        %v886 = vsub.f32 %v238, %v758
        %v887 = vsub.f32 %v239, %v759
        %v888 = vsub.f32 %v240, %v760
        %v889 = vsub.f32 %v241, %v761
        %v890 = vsub.f32 %v242, %v762
        %v891 = vsub.f32 %v243, %v763
        %v892 = vsub.f32 %v244, %v764
        %v893 = vsub.f32 %v245, %v765
        %v894 = vsub.f32 %v246, %v766
        %v895 = vsub.f32 %v247, %v767
        %v896 = vsub.f32 %v248, %v768
        %v897 = vsub.f32 %v249, %v769
        %v898 = vsub.f32 %v250, %v770
        %v899 = vsub.f32 %v251, %v771
        %v900 = vsub.f32 %v252, %v772
        %v901 = vsub.f32 %v253, %v773
        %v902 = vsub.f32 %v254, %v774
        %v903 = vsub.f32 %v255, %v775
        %v904 = vsub.f32 %v256, %v776
        %v905 = vsub.f32 %v257, %v777
        %v906 = vsub.f32 %v258, %v778
        %v907 = vsub.f32 %v259, %v779
        %v908 = vsub.f32 %v260, %v780
        %v909 = vsub.f32 %v261, %v781
        %v910 = vsub.f32 %v262, %v782
        %v911 = vsub.f32 %v263, %v783
        %v912 = vsub.f32 %v264, %v784
        %v913 = vsub.f32 %v265, %v785
        %v914 = vsub.f32 %v266, %v786
        %v915 = vsub.f32 %v267, %v787
        %v916 = vsub.f32 %v268, %v788
        %v917 = vsub.f32 %v269, %v789
        %v918 = vsub.f32 %v270, %v790
        %v919 = vsub.f32 %v271, %v791
        %v920 = vsub.f32 %v272, %v792
        %v921 = vsub.f32 %v273, %v793
        %v922 = vsub.f32 %v274, %v794
        %v923 = vsub.f32 %v275, %v795
        %v924 = vsub.f32 %v276, %v796
        %v925 = vsub.f32 %v277, %v797
        %v926 = vsub.f32 %v278, %v798
        %v927 = vsub.f32 %v279, %v799
        %v928 = vsub.f32 %v280, %v800
        %v929 = vsub.f32 %v281, %v801
        %v930 = vsub.f32 %v282, %v802
        %v931 = vsub.f32 %v283, %v803
        %v932 = vsub.f32 %v284, %v804
        %v933 = vsub.f32 %v285, %v805
        %v934 = vsub.f32 %v286, %v806
        %v935 = vsub.f32 %v287, %v807
        %v936 = vsub.f32 %v288, %v808
        %v937 = vsub.f32 %v289, %v809
        %v938 = vsub.f32 %v290, %v810
        %v939 = vsub.f32 %v291, %v811
        %v940 = vsub.f32 %v292, %v812
        %v941 = vsub.f32 %v293, %v813
        %v942 = vsub.f32 %v294, %v814
        %v943 = vsub.f32 %v295, %v815
        %v944 = vsub.f32 %v296, %v816
        %v945 = vsub.f32 %v297, %v817
        %v946 = vsub.f32 %v298, %v818
        %v947 = vsub.f32 %v299, %v819
        %v948 = vsub.f32 %v300, %v820
        %v949 = vsub.f32 %v301, %v821
        %v950 = vsub.f32 %v302, %v822
        %v951 = vsub.f32 %v303, %v823
        %v952 = vsub.f32 %v304, %v824
        %v953 = vsub.f32 %v305, %v825
        %v954 = vsub.f32 %v306, %v826
        %v955 = vsub.f32 %v307, %v827
        %v956 = vsub.f32 %v308, %v828
        %v957 = vsub.f32 %v309, %v829
        %v958 = vsub.f32 %v310, %v830
        %v959 = vsub.f32 %v311, %v831
        %v960 = vsub.f32 %v312, %v832
        %v961 = vsub.f32 %v313, %v833
        %v962 = vsub.f32 %v314, %v834
        %v963 = vsub.f32 %v315, %v835
        %v964 = vsub.f32 %v316, %v836
        %v965 = vsub.f32 %v317, %v837
        %v966 = vsub.f32 %v318, %v838
        %v967 = vsub.f32 %v319, %v839
        %v968 = vsub.f32 %v320, %v840
        %v969 = vsub.f32 %v321, %v841
        %v970 = vsub.f32 %v322, %v842
        %v971 = vsub.f32 %v323, %v843
        %v972 = vsub.f32 %v324, %v844
        %v973 = vsub.f32 %v325, %v845
        %v974 = vsub.f32 %v326, %v846
        %v975 = vsub.f32 %v327, %v847
        %v976 = vsub.f32 %v328, %v848
        %v977 = vsub.f32 %v329, %v849
        %v978 = vsub.f32 %v330, %v850
        %v979 = vsub.f32 %v331, %v851
        %v980 = vsub.f32 %v332, %v852
        %v981 = vsub.f32 %v333, %v853
        %v982 = vsub.f32 %v334, %v854
        %v983 = vsub.f32 %v335, %v855
        %v984 = vsub.f32 %v336, %v856
        %v985 = vsub.f32 %v337, %v857
        %v986 = vsub.f32 %v338, %v858
        %v987 = vsub.f32 %v339, %v859
        %v988 = vsub.f32 %v340, %v860
        %v989 = vsub.f32 %v341, %v861
        %v990 = vsub.f32 %v342, %v862
        %v991 = vsub.f32 %v343, %v863
        %v992 = vsub.f32 %v344, %v864
        %v993 = vsub.f32 %v345, %v865
        %v994 = vsub.f32 %v346, %v866
        %v995 = vsub.f32 %v347, %v867
        %v996 = vsub.f32 %v348, %v868
        %v997 = vsub.f32 %v349, %v869
        %v998 = vsub.f32 %v350, %v870
        %v999 = vsub.f32 %v351, %v871
        %v1000 = vmul.f32 %v872, %v872
        %v1001 = vmul.f32 %v873, %v873
        %v1002 = vmul.f32 %v874, %v874
        %v1003 = vmul.f32 %v875, %v875
        %v1004 = vmul.f32 %v876, %v876
        %v1005 = vmul.f32 %v877, %v877
        %v1006 = vmul.f32 %v878, %v878
        %v1007 = vmul.f32 %v879, %v879
        %v1008 = vmul.f32 %v880, %v880
        %v1009 = vmul.f32 %v881, %v881
        %v1010 = vmul.f32 %v882, %v882
        %v1011 = vmul.f32 %v883, %v883
        %v1012 = vmul.f32 %v884, %v884
        %v1013 = vmul.f32 %v885, %v885
        %v1014 = vmul.f32 %v886, %v886
        %v1015 = vmul.f32 %v887, %v887
        %v1016 = vmul.f32 %v888, %v888
        %v1017 = vmul.f32 %v889, %v889
        %v1018 = vmul.f32 %v890, %v890
        %v1019 = vmul.f32 %v891, %v891
        %v1020 = vmul.f32 %v892, %v892
        %v1021 = vmul.f32 %v893, %v893
        %v1022 = vmul.f32 %v894, %v894
        %v1023 = vmul.f32 %v895, %v895
        %v1024 = vmul.f32 %v896, %v896
        %v1025 = vmul.f32 %v897, %v897
        %v1026 = vmul.f32 %v898, %v898
        %v1027 = vmul.f32 %v899, %v899
        %v1028 = vmul.f32 %v900, %v900
        %v1029 = vmul.f32 %v901, %v901
        %v1030 = vmul.f32 %v902, %v902
        %v1031 = vmul.f32 %v903, %v903
        %v1032 = vmul.f32 %v904, %v904
        %v1033 = vmul.f32 %v905, %v905
        %v1034 = vmul.f32 %v906, %v906
        %v1035 = vmul.f32 %v907, %v907
        %v1036 = vmul.f32 %v908, %v908
        %v1037 = vmul.f32 %v909, %v909
        %v1038 = vmul.f32 %v910, %v910
        %v1039 = vmul.f32 %v911, %v911
        %v1040 = vmul.f32 %v912, %v912
        %v1041 = vmul.f32 %v913, %v913
        %v1042 = vmul.f32 %v914, %v914
        %v1043 = vmul.f32 %v915, %v915
        %v1044 = vmul.f32 %v916, %v916
        %v1045 = vmul.f32 %v917, %v917
        %v1046 = vmul.f32 %v918, %v918
        %v1047 = vmul.f32 %v919, %v919
        %v1048 = vmul.f32 %v920, %v920
        %v1049 = vmul.f32 %v921, %v921
        %v1050 = vmul.f32 %v922, %v922
        %v1051 = vmul.f32 %v923, %v923
        %v1052 = vmul.f32 %v924, %v924
        %v1053 = vmul.f32 %v925, %v925
        %v1054 = vmul.f32 %v926, %v926
        %v1055 = vmul.f32 %v927, %v927
        %v1056 = vmul.f32 %v928, %v928
        %v1057 = vmul.f32 %v929, %v929
        %v1058 = vmul.f32 %v930, %v930
        %v1059 = vmul.f32 %v931, %v931
        %v1060 = vmul.f32 %v932, %v932
        %v1061 = vmul.f32 %v933, %v933
        %v1062 = vmul.f32 %v934, %v934
        %v1063 = vmul.f32 %v935, %v935
        %v1064 = vmul.f32 %v936, %v936
        %v1065 = vmul.f32 %v937, %v937
        %v1066 = vmul.f32 %v938, %v938
        %v1067 = vmul.f32 %v939, %v939
        %v1068 = vmul.f32 %v940, %v940
        %v1069 = vmul.f32 %v941, %v941
        %v1070 = vmul.f32 %v942, %v942
        %v1071 = vmul.f32 %v943, %v943
        %v1072 = vmul.f32 %v944, %v944
        %v1073 = vmul.f32 %v945, %v945
        %v1074 = vmul.f32 %v946, %v946
        %v1075 = vmul.f32 %v947, %v947
        %v1076 = vmul.f32 %v948, %v948
        %v1077 = vmul.f32 %v949, %v949
        %v1078 = vmul.f32 %v950, %v950
        %v1079 = vmul.f32 %v951, %v951
        %v1080 = vmul.f32 %v952, %v952
        %v1081 = vmul.f32 %v953, %v953
        %v1082 = vmul.f32 %v954, %v954
        %v1083 = vmul.f32 %v955, %v955
        %v1084 = vmul.f32 %v956, %v956
        %v1085 = vmul.f32 %v957, %v957
        %v1086 = vmul.f32 %v958, %v958
        %v1087 = vmul.f32 %v959, %v959
        %v1088 = vmul.f32 %v960, %v960
        %v1089 = vmul.f32 %v961, %v961
        %v1090 = vmul.f32 %v962, %v962
        %v1091 = vmul.f32 %v963, %v963
        %v1092 = vmul.f32 %v964, %v964
        %v1093 = vmul.f32 %v965, %v965
        %v1094 = vmul.f32 %v966, %v966
        %v1095 = vmul.f32 %v967, %v967
        %v1096 = vmul.f32 %v968, %v968
        %v1097 = vmul.f32 %v969, %v969
        %v1098 = vmul.f32 %v970, %v970
        %v1099 = vmul.f32 %v971, %v971
        %v1100 = vmul.f32 %v972, %v972
        %v1101 = vmul.f32 %v973, %v973
        %v1102 = vmul.f32 %v974, %v974
        %v1103 = vmul.f32 %v975, %v975
        %v1104 = vmul.f32 %v976, %v976
        %v1105 = vmul.f32 %v977, %v977
        %v1106 = vmul.f32 %v978, %v978
        %v1107 = vmul.f32 %v979, %v979
        %v1108 = vmul.f32 %v980, %v980
        %v1109 = vmul.f32 %v981, %v981
        %v1110 = vmul.f32 %v982, %v982
        %v1111 = vmul.f32 %v983, %v983
        %v1112 = vmul.f32 %v984, %v984
        %v1113 = vmul.f32 %v985, %v985
        %v1114 = vmul.f32 %v986, %v986
        %v1115 = vmul.f32 %v987, %v987
        %v1116 = vmul.f32 %v988, %v988
        %v1117 = vmul.f32 %v989, %v989
        %v1118 = vmul.f32 %v990, %v990
        %v1119 = vmul.f32 %v991, %v991
        %v1120 = vmul.f32 %v992, %v992
        %v1121 = vmul.f32 %v993, %v993
        %v1122 = vmul.f32 %v994, %v994
        %v1123 = vmul.f32 %v995, %v995
        %v1124 = vmul.f32 %v996, %v996
        %v1125 = vmul.f32 %v997, %v997
        %v1126 = vmul.f32 %v998, %v998
        %v1127 = vmul.f32 %v999, %v999
        %v1128 = vsel %vm352, %v1000, 0.0
        %1129 = vadd.xlane.f32.xlu0 %v1128
        %v1130 = vpop.xlane.xlu0 %1129
        %v1131 = vsel %vm352, %v1001, 0.0
        %1132 = vadd.xlane.f32.xlu0 %v1131
        %v1133 = vpop.xlane.xlu0 %1132
        %v1134 = vsel %vm352, %v1002, 0.0
        %1135 = vadd.xlane.f32.xlu0 %v1134
        %v1136 = vpop.xlane.xlu0 %1135
        %v1137 = vsel %vm352, %v1003, 0.0
        %1138 = vadd.xlane.f32.xlu0 %v1137
        %v1139 = vpop.xlane.xlu0 %1138
        %v1140 = vsel %vm352, %v1004, 0.0
        %1141 = vadd.xlane.f32.xlu0 %v1140
        %v1142 = vpop.xlane.xlu0 %1141
        %v1143 = vsel %vm352, %v1005, 0.0
        %1144 = vadd.xlane.f32.xlu0 %v1143
        %v1145 = vpop.xlane.xlu0 %1144
        %v1146 = vsel %vm352, %v1006, 0.0
        %1147 = vadd.xlane.f32.xlu0 %v1146
        %v1148 = vpop.xlane.xlu0 %1147
        %v1149 = vsel %vm352, %v1007, 0.0
        %1150 = vadd.xlane.f32.xlu0 %v1149
        %v1151 = vpop.xlane.xlu0 %1150
        %v1152 = vsel %vm352, %v1008, 0.0
        %1153 = vadd.xlane.f32.xlu0 %v1152
        %v1154 = vpop.xlane.xlu0 %1153
        %v1155 = vsel %vm352, %v1009, 0.0
        %1156 = vadd.xlane.f32.xlu0 %v1155
        %v1157 = vpop.xlane.xlu0 %1156
        %v1158 = vsel %vm352, %v1010, 0.0
        %1159 = vadd.xlane.f32.xlu0 %v1158
        %v1160 = vpop.xlane.xlu0 %1159
        %v1161 = vsel %vm352, %v1011, 0.0
        %1162 = vadd.xlane.f32.xlu0 %v1161
        %v1163 = vpop.xlane.xlu0 %1162
        %v1164 = vsel %vm352, %v1012, 0.0
        %1165 = vadd.xlane.f32.xlu0 %v1164
        %v1166 = vpop.xlane.xlu0 %1165
        %v1167 = vsel %vm352, %v1013, 0.0
        %1168 = vadd.xlane.f32.xlu0 %v1167
        %v1169 = vpop.xlane.xlu0 %1168
        %v1170 = vsel %vm352, %v1014, 0.0
        %1171 = vadd.xlane.f32.xlu0 %v1170
        %v1172 = vpop.xlane.xlu0 %1171
        %v1173 = vsel %vm352, %v1015, 0.0
        %1174 = vadd.xlane.f32.xlu0 %v1173
        %v1175 = vpop.xlane.xlu0 %1174
        %v1176 = vsel %vm352, %v1016, 0.0
        %1177 = vadd.xlane.f32.xlu0 %v1176
        %v1178 = vpop.xlane.xlu0 %1177
        %v1179 = vsel %vm352, %v1017, 0.0
        %1180 = vadd.xlane.f32.xlu0 %v1179
        %v1181 = vpop.xlane.xlu0 %1180
        %v1182 = vsel %vm352, %v1018, 0.0
        %1183 = vadd.xlane.f32.xlu0 %v1182
        %v1184 = vpop.xlane.xlu0 %1183
        %v1185 = vsel %vm352, %v1019, 0.0
        %1186 = vadd.xlane.f32.xlu0 %v1185
        %v1187 = vpop.xlane.xlu0 %1186
        %v1188 = vsel %vm352, %v1020, 0.0
        %1189 = vadd.xlane.f32.xlu0 %v1188
        %v1190 = vpop.xlane.xlu0 %1189
        %v1191 = vsel %vm352, %v1021, 0.0
        %1192 = vadd.xlane.f32.xlu0 %v1191
        %v1193 = vpop.xlane.xlu0 %1192
        %v1194 = vsel %vm352, %v1022, 0.0
        %1195 = vadd.xlane.f32.xlu0 %v1194
        %v1196 = vpop.xlane.xlu0 %1195
        %v1197 = vsel %vm352, %v1023, 0.0
        %1198 = vadd.xlane.f32.xlu0 %v1197
        %v1199 = vpop.xlane.xlu0 %1198
        %v1200 = vsel %vm352, %v1024, 0.0
        %1201 = vadd.xlane.f32.xlu0 %v1200
        %v1202 = vpop.xlane.xlu0 %1201
        %v1203 = vsel %vm352, %v1025, 0.0
        %1204 = vadd.xlane.f32.xlu0 %v1203
        %v1205 = vpop.xlane.xlu0 %1204
        %v1206 = vsel %vm352, %v1026, 0.0
        %1207 = vadd.xlane.f32.xlu0 %v1206
        %v1208 = vpop.xlane.xlu0 %1207
        %v1209 = vsel %vm352, %v1027, 0.0
        %1210 = vadd.xlane.f32.xlu0 %v1209
        %v1211 = vpop.xlane.xlu0 %1210
        %v1212 = vsel %vm352, %v1028, 0.0
        %1213 = vadd.xlane.f32.xlu0 %v1212
        %v1214 = vpop.xlane.xlu0 %1213
        %v1215 = vsel %vm352, %v1029, 0.0
        %1216 = vadd.xlane.f32.xlu0 %v1215
        %v1217 = vpop.xlane.xlu0 %1216
        %v1218 = vsel %vm352, %v1030, 0.0
        %1219 = vadd.xlane.f32.xlu0 %v1218
        %v1220 = vpop.xlane.xlu0 %1219
        %v1221 = vsel %vm352, %v1031, 0.0
        %1222 = vadd.xlane.f32.xlu0 %v1221
        %v1223 = vpop.xlane.xlu0 %1222
        %v1224 = vsel %vm352, %v1032, 0.0
        %1225 = vadd.xlane.f32.xlu0 %v1224
        %v1226 = vpop.xlane.xlu0 %1225
        %v1227 = vsel %vm352, %v1033, 0.0
        %1228 = vadd.xlane.f32.xlu0 %v1227
        %v1229 = vpop.xlane.xlu0 %1228
        %v1230 = vsel %vm352, %v1034, 0.0
        %1231 = vadd.xlane.f32.xlu0 %v1230
        %v1232 = vpop.xlane.xlu0 %1231
        %v1233 = vsel %vm352, %v1035, 0.0
        %1234 = vadd.xlane.f32.xlu0 %v1233
        %v1235 = vpop.xlane.xlu0 %1234
        %v1236 = vsel %vm352, %v1036, 0.0
        %1237 = vadd.xlane.f32.xlu0 %v1236
        %v1238 = vpop.xlane.xlu0 %1237
        %v1239 = vsel %vm352, %v1037, 0.0
        %1240 = vadd.xlane.f32.xlu0 %v1239
        %v1241 = vpop.xlane.xlu0 %1240
        %v1242 = vsel %vm352, %v1038, 0.0
        %1243 = vadd.xlane.f32.xlu0 %v1242
        %v1244 = vpop.xlane.xlu0 %1243
        %v1245 = vsel %vm352, %v1039, 0.0
        %1246 = vadd.xlane.f32.xlu0 %v1245
        %v1247 = vpop.xlane.xlu0 %1246
        %v1248 = vsel %vm352, %v1040, 0.0
        %1249 = vadd.xlane.f32.xlu0 %v1248
        %v1250 = vpop.xlane.xlu0 %1249
        %v1251 = vsel %vm352, %v1041, 0.0
        %1252 = vadd.xlane.f32.xlu0 %v1251
        %v1253 = vpop.xlane.xlu0 %1252
        %v1254 = vsel %vm352, %v1042, 0.0
        %1255 = vadd.xlane.f32.xlu0 %v1254
        %v1256 = vpop.xlane.xlu0 %1255
        %v1257 = vsel %vm352, %v1043, 0.0
        %1258 = vadd.xlane.f32.xlu0 %v1257
        %v1259 = vpop.xlane.xlu0 %1258
        %v1260 = vsel %vm352, %v1044, 0.0
        %1261 = vadd.xlane.f32.xlu0 %v1260
        %v1262 = vpop.xlane.xlu0 %1261
        %v1263 = vsel %vm352, %v1045, 0.0
        %1264 = vadd.xlane.f32.xlu0 %v1263
        %v1265 = vpop.xlane.xlu0 %1264
        %v1266 = vsel %vm352, %v1046, 0.0
        %1267 = vadd.xlane.f32.xlu0 %v1266
        %v1268 = vpop.xlane.xlu0 %1267
        %v1269 = vsel %vm352, %v1047, 0.0
        %1270 = vadd.xlane.f32.xlu0 %v1269
        %v1271 = vpop.xlane.xlu0 %1270
        %v1272 = vsel %vm352, %v1048, 0.0
        %1273 = vadd.xlane.f32.xlu0 %v1272
        %v1274 = vpop.xlane.xlu0 %1273
        %v1275 = vsel %vm352, %v1049, 0.0
        %1276 = vadd.xlane.f32.xlu0 %v1275
        %v1277 = vpop.xlane.xlu0 %1276
        %v1278 = vsel %vm352, %v1050, 0.0
        %1279 = vadd.xlane.f32.xlu0 %v1278
        %v1280 = vpop.xlane.xlu0 %1279
        %v1281 = vsel %vm352, %v1051, 0.0
        %1282 = vadd.xlane.f32.xlu0 %v1281
        %v1283 = vpop.xlane.xlu0 %1282
        %v1284 = vsel %vm352, %v1052, 0.0
        %1285 = vadd.xlane.f32.xlu0 %v1284
        %v1286 = vpop.xlane.xlu0 %1285
        %v1287 = vsel %vm352, %v1053, 0.0
        %1288 = vadd.xlane.f32.xlu0 %v1287
        %v1289 = vpop.xlane.xlu0 %1288
        %v1290 = vsel %vm352, %v1054, 0.0
        %1291 = vadd.xlane.f32.xlu0 %v1290
        %v1292 = vpop.xlane.xlu0 %1291
        %v1293 = vsel %vm352, %v1055, 0.0
        %1294 = vadd.xlane.f32.xlu0 %v1293
        %v1295 = vpop.xlane.xlu0 %1294
        %v1296 = vsel %vm352, %v1056, 0.0
        %1297 = vadd.xlane.f32.xlu0 %v1296
        %v1298 = vpop.xlane.xlu0 %1297
        %v1299 = vsel %vm352, %v1057, 0.0
        %1300 = vadd.xlane.f32.xlu0 %v1299
        %v1301 = vpop.xlane.xlu0 %1300
        %v1302 = vsel %vm352, %v1058, 0.0
        %1303 = vadd.xlane.f32.xlu0 %v1302
        %v1304 = vpop.xlane.xlu0 %1303
        %v1305 = vsel %vm352, %v1059, 0.0
        %1306 = vadd.xlane.f32.xlu0 %v1305
        %v1307 = vpop.xlane.xlu0 %1306
        %v1308 = vsel %vm352, %v1060, 0.0
        %1309 = vadd.xlane.f32.xlu0 %v1308
        %v1310 = vpop.xlane.xlu0 %1309
        %v1311 = vsel %vm352, %v1061, 0.0
        %1312 = vadd.xlane.f32.xlu0 %v1311
        %v1313 = vpop.xlane.xlu0 %1312
        %v1314 = vsel %vm352, %v1062, 0.0
        %1315 = vadd.xlane.f32.xlu0 %v1314
        %v1316 = vpop.xlane.xlu0 %1315
        %v1317 = vsel %vm352, %v1063, 0.0
        %1318 = vadd.xlane.f32.xlu0 %v1317
        %v1319 = vpop.xlane.xlu0 %1318
        %v1320 = vsel %vm352, %v1064, 0.0
        %1321 = vadd.xlane.f32.xlu0 %v1320
        %v1322 = vpop.xlane.xlu0 %1321
        %v1323 = vsel %vm352, %v1065, 0.0
        %1324 = vadd.xlane.f32.xlu0 %v1323
        %v1325 = vpop.xlane.xlu0 %1324
        %v1326 = vsel %vm352, %v1066, 0.0
        %1327 = vadd.xlane.f32.xlu0 %v1326
        %v1328 = vpop.xlane.xlu0 %1327
        %v1329 = vsel %vm352, %v1067, 0.0
        %1330 = vadd.xlane.f32.xlu0 %v1329
        %v1331 = vpop.xlane.xlu0 %1330
        %v1332 = vsel %vm352, %v1068, 0.0
        %1333 = vadd.xlane.f32.xlu0 %v1332
        %v1334 = vpop.xlane.xlu0 %1333
        %v1335 = vsel %vm352, %v1069, 0.0
        %1336 = vadd.xlane.f32.xlu0 %v1335
        %v1337 = vpop.xlane.xlu0 %1336
        %v1338 = vsel %vm352, %v1070, 0.0
        %1339 = vadd.xlane.f32.xlu0 %v1338
        %v1340 = vpop.xlane.xlu0 %1339
        %v1341 = vsel %vm352, %v1071, 0.0
        %1342 = vadd.xlane.f32.xlu0 %v1341
        %v1343 = vpop.xlane.xlu0 %1342
        %v1344 = vsel %vm352, %v1072, 0.0
        %1345 = vadd.xlane.f32.xlu0 %v1344
        %v1346 = vpop.xlane.xlu0 %1345
        %v1347 = vsel %vm352, %v1073, 0.0
        %1348 = vadd.xlane.f32.xlu0 %v1347
        %v1349 = vpop.xlane.xlu0 %1348
        %v1350 = vsel %vm352, %v1074, 0.0
        %1351 = vadd.xlane.f32.xlu0 %v1350
        %v1352 = vpop.xlane.xlu0 %1351
        %v1353 = vsel %vm352, %v1075, 0.0
        %1354 = vadd.xlane.f32.xlu0 %v1353
        %v1355 = vpop.xlane.xlu0 %1354
        %v1356 = vsel %vm352, %v1076, 0.0
        %1357 = vadd.xlane.f32.xlu0 %v1356
        %v1358 = vpop.xlane.xlu0 %1357
        %v1359 = vsel %vm352, %v1077, 0.0
        %1360 = vadd.xlane.f32.xlu0 %v1359
        %v1361 = vpop.xlane.xlu0 %1360
        %v1362 = vsel %vm352, %v1078, 0.0
        %1363 = vadd.xlane.f32.xlu0 %v1362
        %v1364 = vpop.xlane.xlu0 %1363
        %v1365 = vsel %vm352, %v1079, 0.0
        %1366 = vadd.xlane.f32.xlu0 %v1365
        %v1367 = vpop.xlane.xlu0 %1366
        %v1368 = vsel %vm352, %v1080, 0.0
        %1369 = vadd.xlane.f32.xlu0 %v1368
        %v1370 = vpop.xlane.xlu0 %1369
        %v1371 = vsel %vm352, %v1081, 0.0
        %1372 = vadd.xlane.f32.xlu0 %v1371
        %v1373 = vpop.xlane.xlu0 %1372
        %v1374 = vsel %vm352, %v1082, 0.0
        %1375 = vadd.xlane.f32.xlu0 %v1374
        %v1376 = vpop.xlane.xlu0 %1375
        %v1377 = vsel %vm352, %v1083, 0.0
        %1378 = vadd.xlane.f32.xlu0 %v1377
        %v1379 = vpop.xlane.xlu0 %1378
        %v1380 = vsel %vm352, %v1084, 0.0
        %1381 = vadd.xlane.f32.xlu0 %v1380
        %v1382 = vpop.xlane.xlu0 %1381
        %v1383 = vsel %vm352, %v1085, 0.0
        %1384 = vadd.xlane.f32.xlu0 %v1383
        %v1385 = vpop.xlane.xlu0 %1384
        %v1386 = vsel %vm352, %v1086, 0.0
        %1387 = vadd.xlane.f32.xlu0 %v1386
        %v1388 = vpop.xlane.xlu0 %1387
        %v1389 = vsel %vm352, %v1087, 0.0
        %1390 = vadd.xlane.f32.xlu0 %v1389
        %v1391 = vpop.xlane.xlu0 %1390
        %v1392 = vsel %vm352, %v1088, 0.0
        %1393 = vadd.xlane.f32.xlu0 %v1392
        %v1394 = vpop.xlane.xlu0 %1393
        %v1395 = vsel %vm352, %v1089, 0.0
        %1396 = vadd.xlane.f32.xlu0 %v1395
        %v1397 = vpop.xlane.xlu0 %1396
        %v1398 = vsel %vm352, %v1090, 0.0
        %1399 = vadd.xlane.f32.xlu0 %v1398
        %v1400 = vpop.xlane.xlu0 %1399
        %v1401 = vsel %vm352, %v1091, 0.0
        %1402 = vadd.xlane.f32.xlu0 %v1401
        %v1403 = vpop.xlane.xlu0 %1402
        %v1404 = vsel %vm352, %v1092, 0.0
        %1405 = vadd.xlane.f32.xlu0 %v1404
        %v1406 = vpop.xlane.xlu0 %1405
        %v1407 = vsel %vm352, %v1093, 0.0
        %1408 = vadd.xlane.f32.xlu0 %v1407
        %v1409 = vpop.xlane.xlu0 %1408
        %v1410 = vsel %vm352, %v1094, 0.0
        %1411 = vadd.xlane.f32.xlu0 %v1410
        %v1412 = vpop.xlane.xlu0 %1411
        %v1413 = vsel %vm352, %v1095, 0.0
        %1414 = vadd.xlane.f32.xlu0 %v1413
        %v1415 = vpop.xlane.xlu0 %1414
        %v1416 = vsel %vm352, %v1096, 0.0
        %1417 = vadd.xlane.f32.xlu0 %v1416
        %v1418 = vpop.xlane.xlu0 %1417
        %v1419 = vsel %vm352, %v1097, 0.0
        %1420 = vadd.xlane.f32.xlu0 %v1419
        %v1421 = vpop.xlane.xlu0 %1420
        %v1422 = vsel %vm352, %v1098, 0.0
        %1423 = vadd.xlane.f32.xlu0 %v1422
        %v1424 = vpop.xlane.xlu0 %1423
        %v1425 = vsel %vm352, %v1099, 0.0
        %1426 = vadd.xlane.f32.xlu0 %v1425
        %v1427 = vpop.xlane.xlu0 %1426
        %v1428 = vsel %vm352, %v1100, 0.0
        %1429 = vadd.xlane.f32.xlu0 %v1428
        %v1430 = vpop.xlane.xlu0 %1429
        %v1431 = vsel %vm352, %v1101, 0.0
        %1432 = vadd.xlane.f32.xlu0 %v1431
        %v1433 = vpop.xlane.xlu0 %1432
        %v1434 = vsel %vm352, %v1102, 0.0
        %1435 = vadd.xlane.f32.xlu0 %v1434
        %v1436 = vpop.xlane.xlu0 %1435
        %v1437 = vsel %vm352, %v1103, 0.0
        %1438 = vadd.xlane.f32.xlu0 %v1437
        %v1439 = vpop.xlane.xlu0 %1438
        %v1440 = vsel %vm352, %v1104, 0.0
        %1441 = vadd.xlane.f32.xlu0 %v1440
        %v1442 = vpop.xlane.xlu0 %1441
        %v1443 = vsel %vm352, %v1105, 0.0
        %1444 = vadd.xlane.f32.xlu0 %v1443
        %v1445 = vpop.xlane.xlu0 %1444
        %v1446 = vsel %vm352, %v1106, 0.0
        %1447 = vadd.xlane.f32.xlu0 %v1446
        %v1448 = vpop.xlane.xlu0 %1447
        %v1449 = vsel %vm352, %v1107, 0.0
        %1450 = vadd.xlane.f32.xlu0 %v1449
        %v1451 = vpop.xlane.xlu0 %1450
        %v1452 = vsel %vm352, %v1108, 0.0
        %1453 = vadd.xlane.f32.xlu0 %v1452
        %v1454 = vpop.xlane.xlu0 %1453
        %v1455 = vsel %vm352, %v1109, 0.0
        %1456 = vadd.xlane.f32.xlu0 %v1455
        %v1457 = vpop.xlane.xlu0 %1456
        %v1458 = vsel %vm352, %v1110, 0.0
        %1459 = vadd.xlane.f32.xlu0 %v1458
        %v1460 = vpop.xlane.xlu0 %1459
        %v1461 = vsel %vm352, %v1111, 0.0
        %1462 = vadd.xlane.f32.xlu0 %v1461
        %v1463 = vpop.xlane.xlu0 %1462
        %v1464 = vsel %vm352, %v1112, 0.0
        %1465 = vadd.xlane.f32.xlu0 %v1464
        %v1466 = vpop.xlane.xlu0 %1465
        %v1467 = vsel %vm352, %v1113, 0.0
        %1468 = vadd.xlane.f32.xlu0 %v1467
        %v1469 = vpop.xlane.xlu0 %1468
        %v1470 = vsel %vm352, %v1114, 0.0
        %1471 = vadd.xlane.f32.xlu0 %v1470
        %v1472 = vpop.xlane.xlu0 %1471
        %v1473 = vsel %vm352, %v1115, 0.0
        %1474 = vadd.xlane.f32.xlu0 %v1473
        %v1475 = vpop.xlane.xlu0 %1474
        %v1476 = vsel %vm352, %v1116, 0.0
        %1477 = vadd.xlane.f32.xlu0 %v1476
        %v1478 = vpop.xlane.xlu0 %1477
        %v1479 = vsel %vm352, %v1117, 0.0
        %1480 = vadd.xlane.f32.xlu0 %v1479
        %v1481 = vpop.xlane.xlu0 %1480
        %v1482 = vsel %vm352, %v1118, 0.0
        %1483 = vadd.xlane.f32.xlu0 %v1482
        %v1484 = vpop.xlane.xlu0 %1483
        %v1485 = vsel %vm352, %v1119, 0.0
        %1486 = vadd.xlane.f32.xlu0 %v1485
        %v1487 = vpop.xlane.xlu0 %1486
        %v1488 = vsel %vm352, %v1120, 0.0
        %1489 = vadd.xlane.f32.xlu0 %v1488
        %v1490 = vpop.xlane.xlu0 %1489
        %v1491 = vsel %vm352, %v1121, 0.0
        %1492 = vadd.xlane.f32.xlu0 %v1491
        %v1493 = vpop.xlane.xlu0 %1492
        %v1494 = vsel %vm352, %v1122, 0.0
        %1495 = vadd.xlane.f32.xlu0 %v1494
        %v1496 = vpop.xlane.xlu0 %1495
        %v1497 = vsel %vm352, %v1123, 0.0
        %1498 = vadd.xlane.f32.xlu0 %v1497
        %v1499 = vpop.xlane.xlu0 %1498
        %v1500 = vsel %vm352, %v1124, 0.0
        %1501 = vadd.xlane.f32.xlu0 %v1500
        %v1502 = vpop.xlane.xlu0 %1501
        %v1503 = vsel %vm352, %v1125, 0.0
        %1504 = vadd.xlane.f32.xlu0 %v1503
        %v1505 = vpop.xlane.xlu0 %1504
        %v1506 = vsel %vm352, %v1126, 0.0
        %1507 = vadd.xlane.f32.xlu0 %v1506
        %v1508 = vpop.xlane.xlu0 %1507
        %v1509 = vsel %vm352, %v1127, 0.0
        %1510 = vadd.xlane.f32.xlu0 %v1509
        %v1511 = vpop.xlane.xlu0 %1510
        %v1512 = vmul.f32 %v1130, %v743
        %v1513 = vmul.f32 %v1133, %v743
        %v1514 = vmul.f32 %v1136, %v743
        %v1515 = vmul.f32 %v1139, %v743
        %v1516 = vmul.f32 %v1142, %v743
        %v1517 = vmul.f32 %v1145, %v743
        %v1518 = vmul.f32 %v1148, %v743
        %v1519 = vmul.f32 %v1151, %v743
        %v1520 = vmul.f32 %v1154, %v743
        %v1521 = vmul.f32 %v1157, %v743
        %v1522 = vmul.f32 %v1160, %v743
        %v1523 = vmul.f32 %v1163, %v743
        %v1524 = vmul.f32 %v1166, %v743
        %v1525 = vmul.f32 %v1169, %v743
        %v1526 = vmul.f32 %v1172, %v743
        %v1527 = vmul.f32 %v1175, %v743
        %v1528 = vmul.f32 %v1178, %v743
        %v1529 = vmul.f32 %v1181, %v743
        %v1530 = vmul.f32 %v1184, %v743
        %v1531 = vmul.f32 %v1187, %v743
        %v1532 = vmul.f32 %v1190, %v743
        %v1533 = vmul.f32 %v1193, %v743
        %v1534 = vmul.f32 %v1196, %v743
        %v1535 = vmul.f32 %v1199, %v743
        %v1536 = vmul.f32 %v1202, %v743
        %v1537 = vmul.f32 %v1205, %v743
        %v1538 = vmul.f32 %v1208, %v743
        %v1539 = vmul.f32 %v1211, %v743
        %v1540 = vmul.f32 %v1214, %v743
        %v1541 = vmul.f32 %v1217, %v743
        %v1542 = vmul.f32 %v1220, %v743
        %v1543 = vmul.f32 %v1223, %v743
        %v1544 = vmul.f32 %v1226, %v743
        %v1545 = vmul.f32 %v1229, %v743
        %v1546 = vmul.f32 %v1232, %v743
        %v1547 = vmul.f32 %v1235, %v743
        %v1548 = vmul.f32 %v1238, %v743
        %v1549 = vmul.f32 %v1241, %v743
        %v1550 = vmul.f32 %v1244, %v743
        %v1551 = vmul.f32 %v1247, %v743
        %v1552 = vmul.f32 %v1250, %v743
        %v1553 = vmul.f32 %v1253, %v743
        %v1554 = vmul.f32 %v1256, %v743
        %v1555 = vmul.f32 %v1259, %v743
        %v1556 = vmul.f32 %v1262, %v743
        %v1557 = vmul.f32 %v1265, %v743
        %v1558 = vmul.f32 %v1268, %v743
        %v1559 = vmul.f32 %v1271, %v743
        %v1560 = vmul.f32 %v1274, %v743
        %v1561 = vmul.f32 %v1277, %v743
        %v1562 = vmul.f32 %v1280, %v743
        %v1563 = vmul.f32 %v1283, %v743
        %v1564 = vmul.f32 %v1286, %v743
        %v1565 = vmul.f32 %v1289, %v743
        %v1566 = vmul.f32 %v1292, %v743
        %v1567 = vmul.f32 %v1295, %v743
        %v1568 = vmul.f32 %v1298, %v743
        %v1569 = vmul.f32 %v1301, %v743
        %v1570 = vmul.f32 %v1304, %v743
        %v1571 = vmul.f32 %v1307, %v743
        %v1572 = vmul.f32 %v1310, %v743
        %v1573 = vmul.f32 %v1313, %v743
        %v1574 = vmul.f32 %v1316, %v743
        %v1575 = vmul.f32 %v1319, %v743
        %v1576 = vmul.f32 %v1322, %v743
        %v1577 = vmul.f32 %v1325, %v743
        %v1578 = vmul.f32 %v1328, %v743
        %v1579 = vmul.f32 %v1331, %v743
        %v1580 = vmul.f32 %v1334, %v743
        %v1581 = vmul.f32 %v1337, %v743
        %v1582 = vmul.f32 %v1340, %v743
        %v1583 = vmul.f32 %v1343, %v743
        %v1584 = vmul.f32 %v1346, %v743
        %v1585 = vmul.f32 %v1349, %v743
        %v1586 = vmul.f32 %v1352, %v743
        %v1587 = vmul.f32 %v1355, %v743
        %v1588 = vmul.f32 %v1358, %v743
        %v1589 = vmul.f32 %v1361, %v743
        %v1590 = vmul.f32 %v1364, %v743
        %v1591 = vmul.f32 %v1367, %v743
        %v1592 = vmul.f32 %v1370, %v743
        %v1593 = vmul.f32 %v1373, %v743
        %v1594 = vmul.f32 %v1376, %v743
        %v1595 = vmul.f32 %v1379, %v743
        %v1596 = vmul.f32 %v1382, %v743
        %v1597 = vmul.f32 %v1385, %v743
        %v1598 = vmul.f32 %v1388, %v743
        %v1599 = vmul.f32 %v1391, %v743
        %v1600 = vmul.f32 %v1394, %v743
        %v1601 = vmul.f32 %v1397, %v743
        %v1602 = vmul.f32 %v1400, %v743
        %v1603 = vmul.f32 %v1403, %v743
        %v1604 = vmul.f32 %v1406, %v743
        %v1605 = vmul.f32 %v1409, %v743
        %v1606 = vmul.f32 %v1412, %v743
        %v1607 = vmul.f32 %v1415, %v743
        %v1608 = vmul.f32 %v1418, %v743
        %v1609 = vmul.f32 %v1421, %v743
        %v1610 = vmul.f32 %v1424, %v743
        %v1611 = vmul.f32 %v1427, %v743
        %v1612 = vmul.f32 %v1430, %v743
        %v1613 = vmul.f32 %v1433, %v743
        %v1614 = vmul.f32 %v1436, %v743
        %v1615 = vmul.f32 %v1439, %v743
        %v1616 = vmul.f32 %v1442, %v743
        %v1617 = vmul.f32 %v1445, %v743
        %v1618 = vmul.f32 %v1448, %v743
        %v1619 = vmul.f32 %v1451, %v743
        %v1620 = vmul.f32 %v1454, %v743
        %v1621 = vmul.f32 %v1457, %v743
        %v1622 = vmul.f32 %v1460, %v743
        %v1623 = vmul.f32 %v1463, %v743
        %v1624 = vmul.f32 %v1466, %v743
        %v1625 = vmul.f32 %v1469, %v743
        %v1626 = vmul.f32 %v1472, %v743
        %v1627 = vmul.f32 %v1475, %v743
        %v1628 = vmul.f32 %v1478, %v743
        %v1629 = vmul.f32 %v1481, %v743
        %v1630 = vmul.f32 %v1484, %v743
        %v1631 = vmul.f32 %v1487, %v743
        %v1632 = vmul.f32 %v1490, %v743
        %v1633 = vmul.f32 %v1493, %v743
        %v1634 = vmul.f32 %v1496, %v743
        %v1635 = vmul.f32 %v1499, %v743
        %v1636 = vmul.f32 %v1502, %v743
        %v1637 = vmul.f32 %v1505, %v743
        %v1638 = vmul.f32 %v1508, %v743
        %v1639 = vmul.f32 %v1511, %v743
        %v1640 = vadd.f32 %v1512, 1e-05
        %v1641 = vadd.f32 %v1513, 1e-05
        %v1642 = vadd.f32 %v1514, 1e-05
        %v1643 = vadd.f32 %v1515, 1e-05
        %v1644 = vadd.f32 %v1516, 1e-05
        %v1645 = vadd.f32 %v1517, 1e-05
        %v1646 = vadd.f32 %v1518, 1e-05
        %v1647 = vadd.f32 %v1519, 1e-05
        %v1648 = vadd.f32 %v1520, 1e-05
        %v1649 = vadd.f32 %v1521, 1e-05
        %v1650 = vadd.f32 %v1522, 1e-05
        %v1651 = vadd.f32 %v1523, 1e-05
        %v1652 = vadd.f32 %v1524, 1e-05
        %v1653 = vadd.f32 %v1525, 1e-05
        %v1654 = vadd.f32 %v1526, 1e-05
        %v1655 = vadd.f32 %v1527, 1e-05
        %v1656 = vadd.f32 %v1528, 1e-05
        %v1657 = vadd.f32 %v1529, 1e-05
        %v1658 = vadd.f32 %v1530, 1e-05
        %v1659 = vadd.f32 %v1531, 1e-05
        %v1660 = vadd.f32 %v1532, 1e-05
        %v1661 = vadd.f32 %v1533, 1e-05
        %v1662 = vadd.f32 %v1534, 1e-05
        %v1663 = vadd.f32 %v1535, 1e-05
        %v1664 = vadd.f32 %v1536, 1e-05
        %v1665 = vadd.f32 %v1537, 1e-05
        %v1666 = vadd.f32 %v1538, 1e-05
        %v1667 = vadd.f32 %v1539, 1e-05
        %v1668 = vadd.f32 %v1540, 1e-05
        %v1669 = vadd.f32 %v1541, 1e-05
        %v1670 = vadd.f32 %v1542, 1e-05
        %v1671 = vadd.f32 %v1543, 1e-05
        %v1672 = vadd.f32 %v1544, 1e-05
        %v1673 = vadd.f32 %v1545, 1e-05
        %v1674 = vadd.f32 %v1546, 1e-05
        %v1675 = vadd.f32 %v1547, 1e-05
        %v1676 = vadd.f32 %v1548, 1e-05
        %v1677 = vadd.f32 %v1549, 1e-05
        %v1678 = vadd.f32 %v1550, 1e-05
        %v1679 = vadd.f32 %v1551, 1e-05
        %v1680 = vadd.f32 %v1552, 1e-05
        %v1681 = vadd.f32 %v1553, 1e-05
        %v1682 = vadd.f32 %v1554, 1e-05
        %v1683 = vadd.f32 %v1555, 1e-05
        %v1684 = vadd.f32 %v1556, 1e-05
        %v1685 = vadd.f32 %v1557, 1e-05
        %v1686 = vadd.f32 %v1558, 1e-05
        %v1687 = vadd.f32 %v1559, 1e-05
        %v1688 = vadd.f32 %v1560, 1e-05
        %v1689 = vadd.f32 %v1561, 1e-05
        %v1690 = vadd.f32 %v1562, 1e-05
        %v1691 = vadd.f32 %v1563, 1e-05
        %v1692 = vadd.f32 %v1564, 1e-05
        %v1693 = vadd.f32 %v1565, 1e-05
        %v1694 = vadd.f32 %v1566, 1e-05
        %v1695 = vadd.f32 %v1567, 1e-05
        %v1696 = vadd.f32 %v1568, 1e-05
        %v1697 = vadd.f32 %v1569, 1e-05
        %v1698 = vadd.f32 %v1570, 1e-05
        %v1699 = vadd.f32 %v1571, 1e-05
        %v1700 = vadd.f32 %v1572, 1e-05
        %v1701 = vadd.f32 %v1573, 1e-05
        %v1702 = vadd.f32 %v1574, 1e-05
        %v1703 = vadd.f32 %v1575, 1e-05
        %v1704 = vadd.f32 %v1576, 1e-05
        %v1705 = vadd.f32 %v1577, 1e-05
        %v1706 = vadd.f32 %v1578, 1e-05
        %v1707 = vadd.f32 %v1579, 1e-05
        %v1708 = vadd.f32 %v1580, 1e-05
        %v1709 = vadd.f32 %v1581, 1e-05
        %v1710 = vadd.f32 %v1582, 1e-05
        %v1711 = vadd.f32 %v1583, 1e-05
        %v1712 = vadd.f32 %v1584, 1e-05
        %v1713 = vadd.f32 %v1585, 1e-05
        %v1714 = vadd.f32 %v1586, 1e-05
        %v1715 = vadd.f32 %v1587, 1e-05
        %v1716 = vadd.f32 %v1588, 1e-05
        %v1717 = vadd.f32 %v1589, 1e-05
        %v1718 = vadd.f32 %v1590, 1e-05
        %v1719 = vadd.f32 %v1591, 1e-05
        %v1720 = vadd.f32 %v1592, 1e-05
        %v1721 = vadd.f32 %v1593, 1e-05
        %v1722 = vadd.f32 %v1594, 1e-05
        %v1723 = vadd.f32 %v1595, 1e-05
        %v1724 = vadd.f32 %v1596, 1e-05
        %v1725 = vadd.f32 %v1597, 1e-05
        %v1726 = vadd.f32 %v1598, 1e-05
        %v1727 = vadd.f32 %v1599, 1e-05
        %v1728 = vadd.f32 %v1600, 1e-05
        %v1729 = vadd.f32 %v1601, 1e-05
        %v1730 = vadd.f32 %v1602, 1e-05
        %v1731 = vadd.f32 %v1603, 1e-05
        %v1732 = vadd.f32 %v1604, 1e-05
        %v1733 = vadd.f32 %v1605, 1e-05
        %v1734 = vadd.f32 %v1606, 1e-05
        %v1735 = vadd.f32 %v1607, 1e-05
        %v1736 = vadd.f32 %v1608, 1e-05
        %v1737 = vadd.f32 %v1609, 1e-05
        %v1738 = vadd.f32 %v1610, 1e-05
        %v1739 = vadd.f32 %v1611, 1e-05
        %v1740 = vadd.f32 %v1612, 1e-05
        %v1741 = vadd.f32 %v1613, 1e-05
        %v1742 = vadd.f32 %v1614, 1e-05
        %v1743 = vadd.f32 %v1615, 1e-05
        %v1744 = vadd.f32 %v1616, 1e-05
        %v1745 = vadd.f32 %v1617, 1e-05
        %v1746 = vadd.f32 %v1618, 1e-05
        %v1747 = vadd.f32 %v1619, 1e-05
        %v1748 = vadd.f32 %v1620, 1e-05
        %v1749 = vadd.f32 %v1621, 1e-05
        %v1750 = vadd.f32 %v1622, 1e-05
        %v1751 = vadd.f32 %v1623, 1e-05
        %v1752 = vadd.f32 %v1624, 1e-05
        %v1753 = vadd.f32 %v1625, 1e-05
        %v1754 = vadd.f32 %v1626, 1e-05
        %v1755 = vadd.f32 %v1627, 1e-05
        %v1756 = vadd.f32 %v1628, 1e-05
        %v1757 = vadd.f32 %v1629, 1e-05
        %v1758 = vadd.f32 %v1630, 1e-05
        %v1759 = vadd.f32 %v1631, 1e-05
        %v1760 = vadd.f32 %v1632, 1e-05
        %v1761 = vadd.f32 %v1633, 1e-05
        %v1762 = vadd.f32 %v1634, 1e-05
        %v1763 = vadd.f32 %v1635, 1e-05
        %v1764 = vadd.f32 %v1636, 1e-05
        %v1765 = vadd.f32 %v1637, 1e-05
        %v1766 = vadd.f32 %v1638, 1e-05
        %v1767 = vadd.f32 %v1639, 1e-05
        %v1768 = vrsqrt.pop %v1640
        %v1769 = vmul.f32 %v1768, %v1640
        %v1770 = vmul.f32 %v1769, %v1768
        %v1771 = vmul.f32 0.5, %v1770
        %v1772 = vsub.f32 1.5, %v1771
        %v1773 = vmul.f32 %v1768, %v1772
        %vm1774 = vweird.f32 %v1640
        %vm1775 = vweird.f32 %v1768
        %vm1776 = vmor %vm1774, %vm1775
        %v1777 = vsel %vm1776, %v1768, %v1773
        %v1778 = vrsqrt.pop %v1641
        %v1779 = vmul.f32 %v1778, %v1641
        %v1780 = vmul.f32 %v1779, %v1778
        %v1781 = vmul.f32 0.5, %v1780
        %v1782 = vsub.f32 1.5, %v1781
        %v1783 = vmul.f32 %v1778, %v1782
        %vm1784 = vweird.f32 %v1641
        %vm1785 = vweird.f32 %v1778
        %vm1786 = vmor %vm1784, %vm1785
        %v1787 = vsel %vm1786, %v1778, %v1783
        %v1788 = vrsqrt.pop %v1642
        %v1789 = vmul.f32 %v1788, %v1642
        %v1790 = vmul.f32 %v1789, %v1788
        %v1791 = vmul.f32 0.5, %v1790
        %v1792 = vsub.f32 1.5, %v1791
        %v1793 = vmul.f32 %v1788, %v1792
        %vm1794 = vweird.f32 %v1642
        %vm1795 = vweird.f32 %v1788
        %vm1796 = vmor %vm1794, %vm1795
        %v1797 = vsel %vm1796, %v1788, %v1793
        %v1798 = vrsqrt.pop %v1643
        %v1799 = vmul.f32 %v1798, %v1643
        %v1800 = vmul.f32 %v1799, %v1798
        %v1801 = vmul.f32 0.5, %v1800
        %v1802 = vsub.f32 1.5, %v1801
        %v1803 = vmul.f32 %v1798, %v1802
        %vm1804 = vweird.f32 %v1643
        %vm1805 = vweird.f32 %v1798
        %vm1806 = vmor %vm1804, %vm1805
        %v1807 = vsel %vm1806, %v1798, %v1803
        %v1808 = vrsqrt.pop %v1644
        %v1809 = vmul.f32 %v1808, %v1644
        %v1810 = vmul.f32 %v1809, %v1808
        %v1811 = vmul.f32 0.5, %v1810
        %v1812 = vsub.f32 1.5, %v1811
        %v1813 = vmul.f32 %v1808, %v1812
        %vm1814 = vweird.f32 %v1644
        %vm1815 = vweird.f32 %v1808
        %vm1816 = vmor %vm1814, %vm1815
        %v1817 = vsel %vm1816, %v1808, %v1813
        %v1818 = vrsqrt.pop %v1645
        %v1819 = vmul.f32 %v1818, %v1645
        %v1820 = vmul.f32 %v1819, %v1818
        %v1821 = vmul.f32 0.5, %v1820
        %v1822 = vsub.f32 1.5, %v1821
        %v1823 = vmul.f32 %v1818, %v1822
        %vm1824 = vweird.f32 %v1645
        %vm1825 = vweird.f32 %v1818
        %vm1826 = vmor %vm1824, %vm1825
        %v1827 = vsel %vm1826, %v1818, %v1823
        %v1828 = vrsqrt.pop %v1646
        %v1829 = vmul.f32 %v1828, %v1646
        %v1830 = vmul.f32 %v1829, %v1828
        %v1831 = vmul.f32 0.5, %v1830
        %v1832 = vsub.f32 1.5, %v1831
        %v1833 = vmul.f32 %v1828, %v1832
        %vm1834 = vweird.f32 %v1646
        %vm1835 = vweird.f32 %v1828
        %vm1836 = vmor %vm1834, %vm1835
        %v1837 = vsel %vm1836, %v1828, %v1833
        %v1838 = vrsqrt.pop %v1647
        %v1839 = vmul.f32 %v1838, %v1647
        %v1840 = vmul.f32 %v1839, %v1838
        %v1841 = vmul.f32 0.5, %v1840
        %v1842 = vsub.f32 1.5, %v1841
        %v1843 = vmul.f32 %v1838, %v1842
        %vm1844 = vweird.f32 %v1647
        %vm1845 = vweird.f32 %v1838
        %vm1846 = vmor %vm1844, %vm1845
        %v1847 = vsel %vm1846, %v1838, %v1843
        %v1848 = vrsqrt.pop %v1648
        %v1849 = vmul.f32 %v1848, %v1648
        %v1850 = vmul.f32 %v1849, %v1848
        %v1851 = vmul.f32 0.5, %v1850
        %v1852 = vsub.f32 1.5, %v1851
        %v1853 = vmul.f32 %v1848, %v1852
        %vm1854 = vweird.f32 %v1648
        %vm1855 = vweird.f32 %v1848
        %vm1856 = vmor %vm1854, %vm1855
        %v1857 = vsel %vm1856, %v1848, %v1853
        %v1858 = vrsqrt.pop %v1649
        %v1859 = vmul.f32 %v1858, %v1649
        %v1860 = vmul.f32 %v1859, %v1858
        %v1861 = vmul.f32 0.5, %v1860
        %v1862 = vsub.f32 1.5, %v1861
        %v1863 = vmul.f32 %v1858, %v1862
        %vm1864 = vweird.f32 %v1649
        %vm1865 = vweird.f32 %v1858
        %vm1866 = vmor %vm1864, %vm1865
        %v1867 = vsel %vm1866, %v1858, %v1863
        %v1868 = vrsqrt.pop %v1650
        %v1869 = vmul.f32 %v1868, %v1650
        %v1870 = vmul.f32 %v1869, %v1868
        %v1871 = vmul.f32 0.5, %v1870
        %v1872 = vsub.f32 1.5, %v1871
        %v1873 = vmul.f32 %v1868, %v1872
        %vm1874 = vweird.f32 %v1650
        %vm1875 = vweird.f32 %v1868
        %vm1876 = vmor %vm1874, %vm1875
        %v1877 = vsel %vm1876, %v1868, %v1873
        %v1878 = vrsqrt.pop %v1651
        %v1879 = vmul.f32 %v1878, %v1651
        %v1880 = vmul.f32 %v1879, %v1878
        %v1881 = vmul.f32 0.5, %v1880
        %v1882 = vsub.f32 1.5, %v1881
        %v1883 = vmul.f32 %v1878, %v1882
        %vm1884 = vweird.f32 %v1651
        %vm1885 = vweird.f32 %v1878
        %vm1886 = vmor %vm1884, %vm1885
        %v1887 = vsel %vm1886, %v1878, %v1883
        %v1888 = vrsqrt.pop %v1652
        %v1889 = vmul.f32 %v1888, %v1652
        %v1890 = vmul.f32 %v1889, %v1888
        %v1891 = vmul.f32 0.5, %v1890
        %v1892 = vsub.f32 1.5, %v1891
        %v1893 = vmul.f32 %v1888, %v1892
        %vm1894 = vweird.f32 %v1652
        %vm1895 = vweird.f32 %v1888
        %vm1896 = vmor %vm1894, %vm1895
        %v1897 = vsel %vm1896, %v1888, %v1893
        %v1898 = vrsqrt.pop %v1653
        %v1899 = vmul.f32 %v1898, %v1653
        %v1900 = vmul.f32 %v1899, %v1898
        %v1901 = vmul.f32 0.5, %v1900
        %v1902 = vsub.f32 1.5, %v1901
        %v1903 = vmul.f32 %v1898, %v1902
        %vm1904 = vweird.f32 %v1653
        %vm1905 = vweird.f32 %v1898
        %vm1906 = vmor %vm1904, %vm1905
        %v1907 = vsel %vm1906, %v1898, %v1903
        %v1908 = vrsqrt.pop %v1654
        %v1909 = vmul.f32 %v1908, %v1654
        %v1910 = vmul.f32 %v1909, %v1908
        %v1911 = vmul.f32 0.5, %v1910
        %v1912 = vsub.f32 1.5, %v1911
        %v1913 = vmul.f32 %v1908, %v1912
        %vm1914 = vweird.f32 %v1654
        %vm1915 = vweird.f32 %v1908
        %vm1916 = vmor %vm1914, %vm1915
        %v1917 = vsel %vm1916, %v1908, %v1913
        %v1918 = vrsqrt.pop %v1655
        %v1919 = vmul.f32 %v1918, %v1655
        %v1920 = vmul.f32 %v1919, %v1918
        %v1921 = vmul.f32 0.5, %v1920
        %v1922 = vsub.f32 1.5, %v1921
        %v1923 = vmul.f32 %v1918, %v1922
        %vm1924 = vweird.f32 %v1655
        %vm1925 = vweird.f32 %v1918
        %vm1926 = vmor %vm1924, %vm1925
        %v1927 = vsel %vm1926, %v1918, %v1923
        %v1928 = vrsqrt.pop %v1656
        %v1929 = vmul.f32 %v1928, %v1656
        %v1930 = vmul.f32 %v1929, %v1928
        %v1931 = vmul.f32 0.5, %v1930
        %v1932 = vsub.f32 1.5, %v1931
        %v1933 = vmul.f32 %v1928, %v1932
        %vm1934 = vweird.f32 %v1656
        %vm1935 = vweird.f32 %v1928
        %vm1936 = vmor %vm1934, %vm1935
        %v1937 = vsel %vm1936, %v1928, %v1933
        %v1938 = vrsqrt.pop %v1657
        %v1939 = vmul.f32 %v1938, %v1657
        %v1940 = vmul.f32 %v1939, %v1938
        %v1941 = vmul.f32 0.5, %v1940
        %v1942 = vsub.f32 1.5, %v1941
        %v1943 = vmul.f32 %v1938, %v1942
        %vm1944 = vweird.f32 %v1657
        %vm1945 = vweird.f32 %v1938
        %vm1946 = vmor %vm1944, %vm1945
        %v1947 = vsel %vm1946, %v1938, %v1943
        %v1948 = vrsqrt.pop %v1658
        %v1949 = vmul.f32 %v1948, %v1658
        %v1950 = vmul.f32 %v1949, %v1948
        %v1951 = vmul.f32 0.5, %v1950
        %v1952 = vsub.f32 1.5, %v1951
        %v1953 = vmul.f32 %v1948, %v1952
        %vm1954 = vweird.f32 %v1658
        %vm1955 = vweird.f32 %v1948
        %vm1956 = vmor %vm1954, %vm1955
        %v1957 = vsel %vm1956, %v1948, %v1953
        %v1958 = vrsqrt.pop %v1659
        %v1959 = vmul.f32 %v1958, %v1659
        %v1960 = vmul.f32 %v1959, %v1958
        %v1961 = vmul.f32 0.5, %v1960
        %v1962 = vsub.f32 1.5, %v1961
        %v1963 = vmul.f32 %v1958, %v1962
        %vm1964 = vweird.f32 %v1659
        %vm1965 = vweird.f32 %v1958
        %vm1966 = vmor %vm1964, %vm1965
        %v1967 = vsel %vm1966, %v1958, %v1963
        %v1968 = vrsqrt.pop %v1660
        %v1969 = vmul.f32 %v1968, %v1660
        %v1970 = vmul.f32 %v1969, %v1968
        %v1971 = vmul.f32 0.5, %v1970
        %v1972 = vsub.f32 1.5, %v1971
        %v1973 = vmul.f32 %v1968, %v1972
        %vm1974 = vweird.f32 %v1660
        %vm1975 = vweird.f32 %v1968
        %vm1976 = vmor %vm1974, %vm1975
        %v1977 = vsel %vm1976, %v1968, %v1973
        %v1978 = vrsqrt.pop %v1661
        %v1979 = vmul.f32 %v1978, %v1661
        %v1980 = vmul.f32 %v1979, %v1978
        %v1981 = vmul.f32 0.5, %v1980
        %v1982 = vsub.f32 1.5, %v1981
        %v1983 = vmul.f32 %v1978, %v1982
        %vm1984 = vweird.f32 %v1661
        %vm1985 = vweird.f32 %v1978
        %vm1986 = vmor %vm1984, %vm1985
        %v1987 = vsel %vm1986, %v1978, %v1983
        %v1988 = vrsqrt.pop %v1662
        %v1989 = vmul.f32 %v1988, %v1662
        %v1990 = vmul.f32 %v1989, %v1988
        %v1991 = vmul.f32 0.5, %v1990
        %v1992 = vsub.f32 1.5, %v1991
        %v1993 = vmul.f32 %v1988, %v1992
        %vm1994 = vweird.f32 %v1662
        %vm1995 = vweird.f32 %v1988
        %vm1996 = vmor %vm1994, %vm1995
        %v1997 = vsel %vm1996, %v1988, %v1993
        %v1998 = vrsqrt.pop %v1663
        %v1999 = vmul.f32 %v1998, %v1663
        %v2000 = vmul.f32 %v1999, %v1998
        %v2001 = vmul.f32 0.5, %v2000
        %v2002 = vsub.f32 1.5, %v2001
        %v2003 = vmul.f32 %v1998, %v2002
        %vm2004 = vweird.f32 %v1663
        %vm2005 = vweird.f32 %v1998
        %vm2006 = vmor %vm2004, %vm2005
        %v2007 = vsel %vm2006, %v1998, %v2003
        %v2008 = vrsqrt.pop %v1664
        %v2009 = vmul.f32 %v2008, %v1664
        %v2010 = vmul.f32 %v2009, %v2008
        %v2011 = vmul.f32 0.5, %v2010
        %v2012 = vsub.f32 1.5, %v2011
        %v2013 = vmul.f32 %v2008, %v2012
        %vm2014 = vweird.f32 %v1664
        %vm2015 = vweird.f32 %v2008
        %vm2016 = vmor %vm2014, %vm2015
        %v2017 = vsel %vm2016, %v2008, %v2013
        %v2018 = vrsqrt.pop %v1665
        %v2019 = vmul.f32 %v2018, %v1665
        %v2020 = vmul.f32 %v2019, %v2018
        %v2021 = vmul.f32 0.5, %v2020
        %v2022 = vsub.f32 1.5, %v2021
        %v2023 = vmul.f32 %v2018, %v2022
        %vm2024 = vweird.f32 %v1665
        %vm2025 = vweird.f32 %v2018
        %vm2026 = vmor %vm2024, %vm2025
        %v2027 = vsel %vm2026, %v2018, %v2023
        %v2028 = vrsqrt.pop %v1666
        %v2029 = vmul.f32 %v2028, %v1666
        %v2030 = vmul.f32 %v2029, %v2028
        %v2031 = vmul.f32 0.5, %v2030
        %v2032 = vsub.f32 1.5, %v2031
        %v2033 = vmul.f32 %v2028, %v2032
        %vm2034 = vweird.f32 %v1666
        %vm2035 = vweird.f32 %v2028
        %vm2036 = vmor %vm2034, %vm2035
        %v2037 = vsel %vm2036, %v2028, %v2033
        %v2038 = vrsqrt.pop %v1667
        %v2039 = vmul.f32 %v2038, %v1667
        %v2040 = vmul.f32 %v2039, %v2038
        %v2041 = vmul.f32 0.5, %v2040
        %v2042 = vsub.f32 1.5, %v2041
        %v2043 = vmul.f32 %v2038, %v2042
        %vm2044 = vweird.f32 %v1667
        %vm2045 = vweird.f32 %v2038
        %vm2046 = vmor %vm2044, %vm2045
        %v2047 = vsel %vm2046, %v2038, %v2043
        %v2048 = vrsqrt.pop %v1668
        %v2049 = vmul.f32 %v2048, %v1668
        %v2050 = vmul.f32 %v2049, %v2048
        %v2051 = vmul.f32 0.5, %v2050
        %v2052 = vsub.f32 1.5, %v2051
        %v2053 = vmul.f32 %v2048, %v2052
        %vm2054 = vweird.f32 %v1668
        %vm2055 = vweird.f32 %v2048
        %vm2056 = vmor %vm2054, %vm2055
        %v2057 = vsel %vm2056, %v2048, %v2053
        %v2058 = vrsqrt.pop %v1669
        %v2059 = vmul.f32 %v2058, %v1669
        %v2060 = vmul.f32 %v2059, %v2058
        %v2061 = vmul.f32 0.5, %v2060
        %v2062 = vsub.f32 1.5, %v2061
        %v2063 = vmul.f32 %v2058, %v2062
        %vm2064 = vweird.f32 %v1669
        %vm2065 = vweird.f32 %v2058
        %vm2066 = vmor %vm2064, %vm2065
        %v2067 = vsel %vm2066, %v2058, %v2063
        %v2068 = vrsqrt.pop %v1670
        %v2069 = vmul.f32 %v2068, %v1670
        %v2070 = vmul.f32 %v2069, %v2068
        %v2071 = vmul.f32 0.5, %v2070
        %v2072 = vsub.f32 1.5, %v2071
        %v2073 = vmul.f32 %v2068, %v2072
        %vm2074 = vweird.f32 %v1670
        %vm2075 = vweird.f32 %v2068
        %vm2076 = vmor %vm2074, %vm2075
        %v2077 = vsel %vm2076, %v2068, %v2073
        %v2078 = vrsqrt.pop %v1671
        %v2079 = vmul.f32 %v2078, %v1671
        %v2080 = vmul.f32 %v2079, %v2078
        %v2081 = vmul.f32 0.5, %v2080
        %v2082 = vsub.f32 1.5, %v2081
        %v2083 = vmul.f32 %v2078, %v2082
        %vm2084 = vweird.f32 %v1671
        %vm2085 = vweird.f32 %v2078
        %vm2086 = vmor %vm2084, %vm2085
        %v2087 = vsel %vm2086, %v2078, %v2083
        %v2088 = vrsqrt.pop %v1672
        %v2089 = vmul.f32 %v2088, %v1672
        %v2090 = vmul.f32 %v2089, %v2088
        %v2091 = vmul.f32 0.5, %v2090
        %v2092 = vsub.f32 1.5, %v2091
        %v2093 = vmul.f32 %v2088, %v2092
        %vm2094 = vweird.f32 %v1672
        %vm2095 = vweird.f32 %v2088
        %vm2096 = vmor %vm2094, %vm2095
        %v2097 = vsel %vm2096, %v2088, %v2093
        %v2098 = vrsqrt.pop %v1673
        %v2099 = vmul.f32 %v2098, %v1673
        %v2100 = vmul.f32 %v2099, %v2098
        %v2101 = vmul.f32 0.5, %v2100
        %v2102 = vsub.f32 1.5, %v2101
        %v2103 = vmul.f32 %v2098, %v2102
        %vm2104 = vweird.f32 %v1673
        %vm2105 = vweird.f32 %v2098
        %vm2106 = vmor %vm2104, %vm2105
        %v2107 = vsel %vm2106, %v2098, %v2103
        %v2108 = vrsqrt.pop %v1674
        %v2109 = vmul.f32 %v2108, %v1674
        %v2110 = vmul.f32 %v2109, %v2108
        %v2111 = vmul.f32 0.5, %v2110
        %v2112 = vsub.f32 1.5, %v2111
        %v2113 = vmul.f32 %v2108, %v2112
        %vm2114 = vweird.f32 %v1674
        %vm2115 = vweird.f32 %v2108
        %vm2116 = vmor %vm2114, %vm2115
        %v2117 = vsel %vm2116, %v2108, %v2113
        %v2118 = vrsqrt.pop %v1675
        %v2119 = vmul.f32 %v2118, %v1675
        %v2120 = vmul.f32 %v2119, %v2118
        %v2121 = vmul.f32 0.5, %v2120
        %v2122 = vsub.f32 1.5, %v2121
        %v2123 = vmul.f32 %v2118, %v2122
        %vm2124 = vweird.f32 %v1675
        %vm2125 = vweird.f32 %v2118
        %vm2126 = vmor %vm2124, %vm2125
        %v2127 = vsel %vm2126, %v2118, %v2123
        %v2128 = vrsqrt.pop %v1676
        %v2129 = vmul.f32 %v2128, %v1676
        %v2130 = vmul.f32 %v2129, %v2128
        %v2131 = vmul.f32 0.5, %v2130
        %v2132 = vsub.f32 1.5, %v2131
        %v2133 = vmul.f32 %v2128, %v2132
        %vm2134 = vweird.f32 %v1676
        %vm2135 = vweird.f32 %v2128
        %vm2136 = vmor %vm2134, %vm2135
        %v2137 = vsel %vm2136, %v2128, %v2133
        %v2138 = vrsqrt.pop %v1677
        %v2139 = vmul.f32 %v2138, %v1677
        %v2140 = vmul.f32 %v2139, %v2138
        %v2141 = vmul.f32 0.5, %v2140
        %v2142 = vsub.f32 1.5, %v2141
        %v2143 = vmul.f32 %v2138, %v2142
        %vm2144 = vweird.f32 %v1677
        %vm2145 = vweird.f32 %v2138
        %vm2146 = vmor %vm2144, %vm2145
        %v2147 = vsel %vm2146, %v2138, %v2143
        %v2148 = vrsqrt.pop %v1678
        %v2149 = vmul.f32 %v2148, %v1678
        %v2150 = vmul.f32 %v2149, %v2148
        %v2151 = vmul.f32 0.5, %v2150
        %v2152 = vsub.f32 1.5, %v2151
        %v2153 = vmul.f32 %v2148, %v2152
        %vm2154 = vweird.f32 %v1678
        %vm2155 = vweird.f32 %v2148
        %vm2156 = vmor %vm2154, %vm2155
        %v2157 = vsel %vm2156, %v2148, %v2153
        %v2158 = vrsqrt.pop %v1679
        %v2159 = vmul.f32 %v2158, %v1679
        %v2160 = vmul.f32 %v2159, %v2158
        %v2161 = vmul.f32 0.5, %v2160
        %v2162 = vsub.f32 1.5, %v2161
        %v2163 = vmul.f32 %v2158, %v2162
        %vm2164 = vweird.f32 %v1679
        %vm2165 = vweird.f32 %v2158
        %vm2166 = vmor %vm2164, %vm2165
        %v2167 = vsel %vm2166, %v2158, %v2163
        %v2168 = vrsqrt.pop %v1680
        %v2169 = vmul.f32 %v2168, %v1680
        %v2170 = vmul.f32 %v2169, %v2168
        %v2171 = vmul.f32 0.5, %v2170
        %v2172 = vsub.f32 1.5, %v2171
        %v2173 = vmul.f32 %v2168, %v2172
        %vm2174 = vweird.f32 %v1680
        %vm2175 = vweird.f32 %v2168
        %vm2176 = vmor %vm2174, %vm2175
        %v2177 = vsel %vm2176, %v2168, %v2173
        %v2178 = vrsqrt.pop %v1681
        %v2179 = vmul.f32 %v2178, %v1681
        %v2180 = vmul.f32 %v2179, %v2178
        %v2181 = vmul.f32 0.5, %v2180
        %v2182 = vsub.f32 1.5, %v2181
        %v2183 = vmul.f32 %v2178, %v2182
        %vm2184 = vweird.f32 %v1681
        %vm2185 = vweird.f32 %v2178
        %vm2186 = vmor %vm2184, %vm2185
        %v2187 = vsel %vm2186, %v2178, %v2183
        %v2188 = vrsqrt.pop %v1682
        %v2189 = vmul.f32 %v2188, %v1682
        %v2190 = vmul.f32 %v2189, %v2188
        %v2191 = vmul.f32 0.5, %v2190
        %v2192 = vsub.f32 1.5, %v2191
        %v2193 = vmul.f32 %v2188, %v2192
        %vm2194 = vweird.f32 %v1682
        %vm2195 = vweird.f32 %v2188
        %vm2196 = vmor %vm2194, %vm2195
        %v2197 = vsel %vm2196, %v2188, %v2193
        %v2198 = vrsqrt.pop %v1683
        %v2199 = vmul.f32 %v2198, %v1683
        %v2200 = vmul.f32 %v2199, %v2198
        %v2201 = vmul.f32 0.5, %v2200
        %v2202 = vsub.f32 1.5, %v2201
        %v2203 = vmul.f32 %v2198, %v2202
        %vm2204 = vweird.f32 %v1683
        %vm2205 = vweird.f32 %v2198
        %vm2206 = vmor %vm2204, %vm2205
        %v2207 = vsel %vm2206, %v2198, %v2203
        %v2208 = vrsqrt.pop %v1684
        %v2209 = vmul.f32 %v2208, %v1684
        %v2210 = vmul.f32 %v2209, %v2208
        %v2211 = vmul.f32 0.5, %v2210
        %v2212 = vsub.f32 1.5, %v2211
        %v2213 = vmul.f32 %v2208, %v2212
        %vm2214 = vweird.f32 %v1684
        %vm2215 = vweird.f32 %v2208
        %vm2216 = vmor %vm2214, %vm2215
        %v2217 = vsel %vm2216, %v2208, %v2213
        %v2218 = vrsqrt.pop %v1685
        %v2219 = vmul.f32 %v2218, %v1685
        %v2220 = vmul.f32 %v2219, %v2218
        %v2221 = vmul.f32 0.5, %v2220
        %v2222 = vsub.f32 1.5, %v2221
        %v2223 = vmul.f32 %v2218, %v2222
        %vm2224 = vweird.f32 %v1685
        %vm2225 = vweird.f32 %v2218
        %vm2226 = vmor %vm2224, %vm2225
        %v2227 = vsel %vm2226, %v2218, %v2223
        %v2228 = vrsqrt.pop %v1686
        %v2229 = vmul.f32 %v2228, %v1686
        %v2230 = vmul.f32 %v2229, %v2228
        %v2231 = vmul.f32 0.5, %v2230
        %v2232 = vsub.f32 1.5, %v2231
        %v2233 = vmul.f32 %v2228, %v2232
        %vm2234 = vweird.f32 %v1686
        %vm2235 = vweird.f32 %v2228
        %vm2236 = vmor %vm2234, %vm2235
        %v2237 = vsel %vm2236, %v2228, %v2233
        %v2238 = vrsqrt.pop %v1687
        %v2239 = vmul.f32 %v2238, %v1687
        %v2240 = vmul.f32 %v2239, %v2238
        %v2241 = vmul.f32 0.5, %v2240
        %v2242 = vsub.f32 1.5, %v2241
        %v2243 = vmul.f32 %v2238, %v2242
        %vm2244 = vweird.f32 %v1687
        %vm2245 = vweird.f32 %v2238
        %vm2246 = vmor %vm2244, %vm2245
        %v2247 = vsel %vm2246, %v2238, %v2243
        %v2248 = vrsqrt.pop %v1688
        %v2249 = vmul.f32 %v2248, %v1688
        %v2250 = vmul.f32 %v2249, %v2248
        %v2251 = vmul.f32 0.5, %v2250
        %v2252 = vsub.f32 1.5, %v2251
        %v2253 = vmul.f32 %v2248, %v2252
        %vm2254 = vweird.f32 %v1688
        %vm2255 = vweird.f32 %v2248
        %vm2256 = vmor %vm2254, %vm2255
        %v2257 = vsel %vm2256, %v2248, %v2253
        %v2258 = vrsqrt.pop %v1689
        %v2259 = vmul.f32 %v2258, %v1689
        %v2260 = vmul.f32 %v2259, %v2258
        %v2261 = vmul.f32 0.5, %v2260
        %v2262 = vsub.f32 1.5, %v2261
        %v2263 = vmul.f32 %v2258, %v2262
        %vm2264 = vweird.f32 %v1689
        %vm2265 = vweird.f32 %v2258
        %vm2266 = vmor %vm2264, %vm2265
        %v2267 = vsel %vm2266, %v2258, %v2263
        %v2268 = vrsqrt.pop %v1690
        %v2269 = vmul.f32 %v2268, %v1690
        %v2270 = vmul.f32 %v2269, %v2268
        %v2271 = vmul.f32 0.5, %v2270
        %v2272 = vsub.f32 1.5, %v2271
        %v2273 = vmul.f32 %v2268, %v2272
        %vm2274 = vweird.f32 %v1690
        %vm2275 = vweird.f32 %v2268
        %vm2276 = vmor %vm2274, %vm2275
        %v2277 = vsel %vm2276, %v2268, %v2273
        %v2278 = vrsqrt.pop %v1691
        %v2279 = vmul.f32 %v2278, %v1691
        %v2280 = vmul.f32 %v2279, %v2278
        %v2281 = vmul.f32 0.5, %v2280
        %v2282 = vsub.f32 1.5, %v2281
        %v2283 = vmul.f32 %v2278, %v2282
        %vm2284 = vweird.f32 %v1691
        %vm2285 = vweird.f32 %v2278
        %vm2286 = vmor %vm2284, %vm2285
        %v2287 = vsel %vm2286, %v2278, %v2283
        %v2288 = vrsqrt.pop %v1692
        %v2289 = vmul.f32 %v2288, %v1692
        %v2290 = vmul.f32 %v2289, %v2288
        %v2291 = vmul.f32 0.5, %v2290
        %v2292 = vsub.f32 1.5, %v2291
        %v2293 = vmul.f32 %v2288, %v2292
        %vm2294 = vweird.f32 %v1692
        %vm2295 = vweird.f32 %v2288
        %vm2296 = vmor %vm2294, %vm2295
        %v2297 = vsel %vm2296, %v2288, %v2293
        %v2298 = vrsqrt.pop %v1693
        %v2299 = vmul.f32 %v2298, %v1693
        %v2300 = vmul.f32 %v2299, %v2298
        %v2301 = vmul.f32 0.5, %v2300
        %v2302 = vsub.f32 1.5, %v2301
        %v2303 = vmul.f32 %v2298, %v2302
        %vm2304 = vweird.f32 %v1693
        %vm2305 = vweird.f32 %v2298
        %vm2306 = vmor %vm2304, %vm2305
        %v2307 = vsel %vm2306, %v2298, %v2303
        %v2308 = vrsqrt.pop %v1694
        %v2309 = vmul.f32 %v2308, %v1694
        %v2310 = vmul.f32 %v2309, %v2308
        %v2311 = vmul.f32 0.5, %v2310
        %v2312 = vsub.f32 1.5, %v2311
        %v2313 = vmul.f32 %v2308, %v2312
        %vm2314 = vweird.f32 %v1694
        %vm2315 = vweird.f32 %v2308
        %vm2316 = vmor %vm2314, %vm2315
        %v2317 = vsel %vm2316, %v2308, %v2313
        %v2318 = vrsqrt.pop %v1695
        %v2319 = vmul.f32 %v2318, %v1695
        %v2320 = vmul.f32 %v2319, %v2318
        %v2321 = vmul.f32 0.5, %v2320
        %v2322 = vsub.f32 1.5, %v2321
        %v2323 = vmul.f32 %v2318, %v2322
        %vm2324 = vweird.f32 %v1695
        %vm2325 = vweird.f32 %v2318
        %vm2326 = vmor %vm2324, %vm2325
        %v2327 = vsel %vm2326, %v2318, %v2323
        %v2328 = vrsqrt.pop %v1696
        %v2329 = vmul.f32 %v2328, %v1696
        %v2330 = vmul.f32 %v2329, %v2328
        %v2331 = vmul.f32 0.5, %v2330
        %v2332 = vsub.f32 1.5, %v2331
        %v2333 = vmul.f32 %v2328, %v2332
        %vm2334 = vweird.f32 %v1696
        %vm2335 = vweird.f32 %v2328
        %vm2336 = vmor %vm2334, %vm2335
        %v2337 = vsel %vm2336, %v2328, %v2333
        %v2338 = vrsqrt.pop %v1697
        %v2339 = vmul.f32 %v2338, %v1697
        %v2340 = vmul.f32 %v2339, %v2338
        %v2341 = vmul.f32 0.5, %v2340
        %v2342 = vsub.f32 1.5, %v2341
        %v2343 = vmul.f32 %v2338, %v2342
        %vm2344 = vweird.f32 %v1697
        %vm2345 = vweird.f32 %v2338
        %vm2346 = vmor %vm2344, %vm2345
        %v2347 = vsel %vm2346, %v2338, %v2343
        %v2348 = vrsqrt.pop %v1698
        %v2349 = vmul.f32 %v2348, %v1698
        %v2350 = vmul.f32 %v2349, %v2348
        %v2351 = vmul.f32 0.5, %v2350
        %v2352 = vsub.f32 1.5, %v2351
        %v2353 = vmul.f32 %v2348, %v2352
        %vm2354 = vweird.f32 %v1698
        %vm2355 = vweird.f32 %v2348
        %vm2356 = vmor %vm2354, %vm2355
        %v2357 = vsel %vm2356, %v2348, %v2353
        %v2358 = vrsqrt.pop %v1699
        %v2359 = vmul.f32 %v2358, %v1699
        %v2360 = vmul.f32 %v2359, %v2358
        %v2361 = vmul.f32 0.5, %v2360
        %v2362 = vsub.f32 1.5, %v2361
        %v2363 = vmul.f32 %v2358, %v2362
        %vm2364 = vweird.f32 %v1699
        %vm2365 = vweird.f32 %v2358
        %vm2366 = vmor %vm2364, %vm2365
        %v2367 = vsel %vm2366, %v2358, %v2363
        %v2368 = vrsqrt.pop %v1700
        %v2369 = vmul.f32 %v2368, %v1700
        %v2370 = vmul.f32 %v2369, %v2368
        %v2371 = vmul.f32 0.5, %v2370
        %v2372 = vsub.f32 1.5, %v2371
        %v2373 = vmul.f32 %v2368, %v2372
        %vm2374 = vweird.f32 %v1700
        %vm2375 = vweird.f32 %v2368
        %vm2376 = vmor %vm2374, %vm2375
        %v2377 = vsel %vm2376, %v2368, %v2373
        %v2378 = vrsqrt.pop %v1701
        %v2379 = vmul.f32 %v2378, %v1701
        %v2380 = vmul.f32 %v2379, %v2378
        %v2381 = vmul.f32 0.5, %v2380
        %v2382 = vsub.f32 1.5, %v2381
        %v2383 = vmul.f32 %v2378, %v2382
        %vm2384 = vweird.f32 %v1701
        %vm2385 = vweird.f32 %v2378
        %vm2386 = vmor %vm2384, %vm2385
        %v2387 = vsel %vm2386, %v2378, %v2383
        %v2388 = vrsqrt.pop %v1702
        %v2389 = vmul.f32 %v2388, %v1702
        %v2390 = vmul.f32 %v2389, %v2388
        %v2391 = vmul.f32 0.5, %v2390
        %v2392 = vsub.f32 1.5, %v2391
        %v2393 = vmul.f32 %v2388, %v2392
        %vm2394 = vweird.f32 %v1702
        %vm2395 = vweird.f32 %v2388
        %vm2396 = vmor %vm2394, %vm2395
        %v2397 = vsel %vm2396, %v2388, %v2393
        %v2398 = vrsqrt.pop %v1703
        %v2399 = vmul.f32 %v2398, %v1703
        %v2400 = vmul.f32 %v2399, %v2398
        %v2401 = vmul.f32 0.5, %v2400
        %v2402 = vsub.f32 1.5, %v2401
        %v2403 = vmul.f32 %v2398, %v2402
        %vm2404 = vweird.f32 %v1703
        %vm2405 = vweird.f32 %v2398
        %vm2406 = vmor %vm2404, %vm2405
        %v2407 = vsel %vm2406, %v2398, %v2403
        %v2408 = vrsqrt.pop %v1704
        %v2409 = vmul.f32 %v2408, %v1704
        %v2410 = vmul.f32 %v2409, %v2408
        %v2411 = vmul.f32 0.5, %v2410
        %v2412 = vsub.f32 1.5, %v2411
        %v2413 = vmul.f32 %v2408, %v2412
        %vm2414 = vweird.f32 %v1704
        %vm2415 = vweird.f32 %v2408
        %vm2416 = vmor %vm2414, %vm2415
        %v2417 = vsel %vm2416, %v2408, %v2413
        %v2418 = vrsqrt.pop %v1705
        %v2419 = vmul.f32 %v2418, %v1705
        %v2420 = vmul.f32 %v2419, %v2418
        %v2421 = vmul.f32 0.5, %v2420
        %v2422 = vsub.f32 1.5, %v2421
        %v2423 = vmul.f32 %v2418, %v2422
        %vm2424 = vweird.f32 %v1705
        %vm2425 = vweird.f32 %v2418
        %vm2426 = vmor %vm2424, %vm2425
        %v2427 = vsel %vm2426, %v2418, %v2423
        %v2428 = vrsqrt.pop %v1706
        %v2429 = vmul.f32 %v2428, %v1706
        %v2430 = vmul.f32 %v2429, %v2428
        %v2431 = vmul.f32 0.5, %v2430
        %v2432 = vsub.f32 1.5, %v2431
        %v2433 = vmul.f32 %v2428, %v2432
        %vm2434 = vweird.f32 %v1706
        %vm2435 = vweird.f32 %v2428
        %vm2436 = vmor %vm2434, %vm2435
        %v2437 = vsel %vm2436, %v2428, %v2433
        %v2438 = vrsqrt.pop %v1707
        %v2439 = vmul.f32 %v2438, %v1707
        %v2440 = vmul.f32 %v2439, %v2438
        %v2441 = vmul.f32 0.5, %v2440
        %v2442 = vsub.f32 1.5, %v2441
        %v2443 = vmul.f32 %v2438, %v2442
        %vm2444 = vweird.f32 %v1707
        %vm2445 = vweird.f32 %v2438
        %vm2446 = vmor %vm2444, %vm2445
        %v2447 = vsel %vm2446, %v2438, %v2443
        %v2448 = vrsqrt.pop %v1708
        %v2449 = vmul.f32 %v2448, %v1708
        %v2450 = vmul.f32 %v2449, %v2448
        %v2451 = vmul.f32 0.5, %v2450
        %v2452 = vsub.f32 1.5, %v2451
        %v2453 = vmul.f32 %v2448, %v2452
        %vm2454 = vweird.f32 %v1708
        %vm2455 = vweird.f32 %v2448
        %vm2456 = vmor %vm2454, %vm2455
        %v2457 = vsel %vm2456, %v2448, %v2453
        %v2458 = vrsqrt.pop %v1709
        %v2459 = vmul.f32 %v2458, %v1709
        %v2460 = vmul.f32 %v2459, %v2458
        %v2461 = vmul.f32 0.5, %v2460
        %v2462 = vsub.f32 1.5, %v2461
        %v2463 = vmul.f32 %v2458, %v2462
        %vm2464 = vweird.f32 %v1709
        %vm2465 = vweird.f32 %v2458
        %vm2466 = vmor %vm2464, %vm2465
        %v2467 = vsel %vm2466, %v2458, %v2463
        %v2468 = vrsqrt.pop %v1710
        %v2469 = vmul.f32 %v2468, %v1710
        %v2470 = vmul.f32 %v2469, %v2468
        %v2471 = vmul.f32 0.5, %v2470
        %v2472 = vsub.f32 1.5, %v2471
        %v2473 = vmul.f32 %v2468, %v2472
        %vm2474 = vweird.f32 %v1710
        %vm2475 = vweird.f32 %v2468
        %vm2476 = vmor %vm2474, %vm2475
        %v2477 = vsel %vm2476, %v2468, %v2473
        %v2478 = vrsqrt.pop %v1711
        %v2479 = vmul.f32 %v2478, %v1711
        %v2480 = vmul.f32 %v2479, %v2478
        %v2481 = vmul.f32 0.5, %v2480
        %v2482 = vsub.f32 1.5, %v2481
        %v2483 = vmul.f32 %v2478, %v2482
        %vm2484 = vweird.f32 %v1711
        %vm2485 = vweird.f32 %v2478
        %vm2486 = vmor %vm2484, %vm2485
        %v2487 = vsel %vm2486, %v2478, %v2483
        %v2488 = vrsqrt.pop %v1712
        %v2489 = vmul.f32 %v2488, %v1712
        %v2490 = vmul.f32 %v2489, %v2488
        %v2491 = vmul.f32 0.5, %v2490
        %v2492 = vsub.f32 1.5, %v2491
        %v2493 = vmul.f32 %v2488, %v2492
        %vm2494 = vweird.f32 %v1712
        %vm2495 = vweird.f32 %v2488
        %vm2496 = vmor %vm2494, %vm2495
        %v2497 = vsel %vm2496, %v2488, %v2493
        %v2498 = vrsqrt.pop %v1713
        %v2499 = vmul.f32 %v2498, %v1713
        %v2500 = vmul.f32 %v2499, %v2498
        %v2501 = vmul.f32 0.5, %v2500
        %v2502 = vsub.f32 1.5, %v2501
        %v2503 = vmul.f32 %v2498, %v2502
        %vm2504 = vweird.f32 %v1713
        %vm2505 = vweird.f32 %v2498
        %vm2506 = vmor %vm2504, %vm2505
        %v2507 = vsel %vm2506, %v2498, %v2503
        %v2508 = vrsqrt.pop %v1714
        %v2509 = vmul.f32 %v2508, %v1714
        %v2510 = vmul.f32 %v2509, %v2508
        %v2511 = vmul.f32 0.5, %v2510
        %v2512 = vsub.f32 1.5, %v2511
        %v2513 = vmul.f32 %v2508, %v2512
        %vm2514 = vweird.f32 %v1714
        %vm2515 = vweird.f32 %v2508
        %vm2516 = vmor %vm2514, %vm2515
        %v2517 = vsel %vm2516, %v2508, %v2513
        %v2518 = vrsqrt.pop %v1715
        %v2519 = vmul.f32 %v2518, %v1715
        %v2520 = vmul.f32 %v2519, %v2518
        %v2521 = vmul.f32 0.5, %v2520
        %v2522 = vsub.f32 1.5, %v2521
        %v2523 = vmul.f32 %v2518, %v2522
        %vm2524 = vweird.f32 %v1715
        %vm2525 = vweird.f32 %v2518
        %vm2526 = vmor %vm2524, %vm2525
        %v2527 = vsel %vm2526, %v2518, %v2523
        %v2528 = vrsqrt.pop %v1716
        %v2529 = vmul.f32 %v2528, %v1716
        %v2530 = vmul.f32 %v2529, %v2528
        %v2531 = vmul.f32 0.5, %v2530
        %v2532 = vsub.f32 1.5, %v2531
        %v2533 = vmul.f32 %v2528, %v2532
        %vm2534 = vweird.f32 %v1716
        %vm2535 = vweird.f32 %v2528
        %vm2536 = vmor %vm2534, %vm2535
        %v2537 = vsel %vm2536, %v2528, %v2533
        %v2538 = vrsqrt.pop %v1717
        %v2539 = vmul.f32 %v2538, %v1717
        %v2540 = vmul.f32 %v2539, %v2538
        %v2541 = vmul.f32 0.5, %v2540
        %v2542 = vsub.f32 1.5, %v2541
        %v2543 = vmul.f32 %v2538, %v2542
        %vm2544 = vweird.f32 %v1717
        %vm2545 = vweird.f32 %v2538
        %vm2546 = vmor %vm2544, %vm2545
        %v2547 = vsel %vm2546, %v2538, %v2543
        %v2548 = vrsqrt.pop %v1718
        %v2549 = vmul.f32 %v2548, %v1718
        %v2550 = vmul.f32 %v2549, %v2548
        %v2551 = vmul.f32 0.5, %v2550
        %v2552 = vsub.f32 1.5, %v2551
        %v2553 = vmul.f32 %v2548, %v2552
        %vm2554 = vweird.f32 %v1718
        %vm2555 = vweird.f32 %v2548
        %vm2556 = vmor %vm2554, %vm2555
        %v2557 = vsel %vm2556, %v2548, %v2553
        %v2558 = vrsqrt.pop %v1719
        %v2559 = vmul.f32 %v2558, %v1719
        %v2560 = vmul.f32 %v2559, %v2558
        %v2561 = vmul.f32 0.5, %v2560
        %v2562 = vsub.f32 1.5, %v2561
        %v2563 = vmul.f32 %v2558, %v2562
        %vm2564 = vweird.f32 %v1719
        %vm2565 = vweird.f32 %v2558
        %vm2566 = vmor %vm2564, %vm2565
        %v2567 = vsel %vm2566, %v2558, %v2563
        %v2568 = vrsqrt.pop %v1720
        %v2569 = vmul.f32 %v2568, %v1720
        %v2570 = vmul.f32 %v2569, %v2568
        %v2571 = vmul.f32 0.5, %v2570
        %v2572 = vsub.f32 1.5, %v2571
        %v2573 = vmul.f32 %v2568, %v2572
        %vm2574 = vweird.f32 %v1720
        %vm2575 = vweird.f32 %v2568
        %vm2576 = vmor %vm2574, %vm2575
        %v2577 = vsel %vm2576, %v2568, %v2573
        %v2578 = vrsqrt.pop %v1721
        %v2579 = vmul.f32 %v2578, %v1721
        %v2580 = vmul.f32 %v2579, %v2578
        %v2581 = vmul.f32 0.5, %v2580
        %v2582 = vsub.f32 1.5, %v2581
        %v2583 = vmul.f32 %v2578, %v2582
        %vm2584 = vweird.f32 %v1721
        %vm2585 = vweird.f32 %v2578
        %vm2586 = vmor %vm2584, %vm2585
        %v2587 = vsel %vm2586, %v2578, %v2583
        %v2588 = vrsqrt.pop %v1722
        %v2589 = vmul.f32 %v2588, %v1722
        %v2590 = vmul.f32 %v2589, %v2588
        %v2591 = vmul.f32 0.5, %v2590
        %v2592 = vsub.f32 1.5, %v2591
        %v2593 = vmul.f32 %v2588, %v2592
        %vm2594 = vweird.f32 %v1722
        %vm2595 = vweird.f32 %v2588
        %vm2596 = vmor %vm2594, %vm2595
        %v2597 = vsel %vm2596, %v2588, %v2593
        %v2598 = vrsqrt.pop %v1723
        %v2599 = vmul.f32 %v2598, %v1723
        %v2600 = vmul.f32 %v2599, %v2598
        %v2601 = vmul.f32 0.5, %v2600
        %v2602 = vsub.f32 1.5, %v2601
        %v2603 = vmul.f32 %v2598, %v2602
        %vm2604 = vweird.f32 %v1723
        %vm2605 = vweird.f32 %v2598
        %vm2606 = vmor %vm2604, %vm2605
        %v2607 = vsel %vm2606, %v2598, %v2603
        %v2608 = vrsqrt.pop %v1724
        %v2609 = vmul.f32 %v2608, %v1724
        %v2610 = vmul.f32 %v2609, %v2608
        %v2611 = vmul.f32 0.5, %v2610
        %v2612 = vsub.f32 1.5, %v2611
        %v2613 = vmul.f32 %v2608, %v2612
        %vm2614 = vweird.f32 %v1724
        %vm2615 = vweird.f32 %v2608
        %vm2616 = vmor %vm2614, %vm2615
        %v2617 = vsel %vm2616, %v2608, %v2613
        %v2618 = vrsqrt.pop %v1725
        %v2619 = vmul.f32 %v2618, %v1725
        %v2620 = vmul.f32 %v2619, %v2618
        %v2621 = vmul.f32 0.5, %v2620
        %v2622 = vsub.f32 1.5, %v2621
        %v2623 = vmul.f32 %v2618, %v2622
        %vm2624 = vweird.f32 %v1725
        %vm2625 = vweird.f32 %v2618
        %vm2626 = vmor %vm2624, %vm2625
        %v2627 = vsel %vm2626, %v2618, %v2623
        %v2628 = vrsqrt.pop %v1726
        %v2629 = vmul.f32 %v2628, %v1726
        %v2630 = vmul.f32 %v2629, %v2628
        %v2631 = vmul.f32 0.5, %v2630
        %v2632 = vsub.f32 1.5, %v2631
        %v2633 = vmul.f32 %v2628, %v2632
        %vm2634 = vweird.f32 %v1726
        %vm2635 = vweird.f32 %v2628
        %vm2636 = vmor %vm2634, %vm2635
        %v2637 = vsel %vm2636, %v2628, %v2633
        %v2638 = vrsqrt.pop %v1727
        %v2639 = vmul.f32 %v2638, %v1727
        %v2640 = vmul.f32 %v2639, %v2638
        %v2641 = vmul.f32 0.5, %v2640
        %v2642 = vsub.f32 1.5, %v2641
        %v2643 = vmul.f32 %v2638, %v2642
        %vm2644 = vweird.f32 %v1727
        %vm2645 = vweird.f32 %v2638
        %vm2646 = vmor %vm2644, %vm2645
        %v2647 = vsel %vm2646, %v2638, %v2643
        %v2648 = vrsqrt.pop %v1728
        %v2649 = vmul.f32 %v2648, %v1728
        %v2650 = vmul.f32 %v2649, %v2648
        %v2651 = vmul.f32 0.5, %v2650
        %v2652 = vsub.f32 1.5, %v2651
        %v2653 = vmul.f32 %v2648, %v2652
        %vm2654 = vweird.f32 %v1728
        %vm2655 = vweird.f32 %v2648
        %vm2656 = vmor %vm2654, %vm2655
        %v2657 = vsel %vm2656, %v2648, %v2653
        %v2658 = vrsqrt.pop %v1729
        %v2659 = vmul.f32 %v2658, %v1729
        %v2660 = vmul.f32 %v2659, %v2658
        %v2661 = vmul.f32 0.5, %v2660
        %v2662 = vsub.f32 1.5, %v2661
        %v2663 = vmul.f32 %v2658, %v2662
        %vm2664 = vweird.f32 %v1729
        %vm2665 = vweird.f32 %v2658
        %vm2666 = vmor %vm2664, %vm2665
        %v2667 = vsel %vm2666, %v2658, %v2663
        %v2668 = vrsqrt.pop %v1730
        %v2669 = vmul.f32 %v2668, %v1730
        %v2670 = vmul.f32 %v2669, %v2668
        %v2671 = vmul.f32 0.5, %v2670
        %v2672 = vsub.f32 1.5, %v2671
        %v2673 = vmul.f32 %v2668, %v2672
        %vm2674 = vweird.f32 %v1730
        %vm2675 = vweird.f32 %v2668
        %vm2676 = vmor %vm2674, %vm2675
        %v2677 = vsel %vm2676, %v2668, %v2673
        %v2678 = vrsqrt.pop %v1731
        %v2679 = vmul.f32 %v2678, %v1731
        %v2680 = vmul.f32 %v2679, %v2678
        %v2681 = vmul.f32 0.5, %v2680
        %v2682 = vsub.f32 1.5, %v2681
        %v2683 = vmul.f32 %v2678, %v2682
        %vm2684 = vweird.f32 %v1731
        %vm2685 = vweird.f32 %v2678
        %vm2686 = vmor %vm2684, %vm2685
        %v2687 = vsel %vm2686, %v2678, %v2683
        %v2688 = vrsqrt.pop %v1732
        %v2689 = vmul.f32 %v2688, %v1732
        %v2690 = vmul.f32 %v2689, %v2688
        %v2691 = vmul.f32 0.5, %v2690
        %v2692 = vsub.f32 1.5, %v2691
        %v2693 = vmul.f32 %v2688, %v2692
        %vm2694 = vweird.f32 %v1732
        %vm2695 = vweird.f32 %v2688
        %vm2696 = vmor %vm2694, %vm2695
        %v2697 = vsel %vm2696, %v2688, %v2693
        %v2698 = vrsqrt.pop %v1733
        %v2699 = vmul.f32 %v2698, %v1733
        %v2700 = vmul.f32 %v2699, %v2698
        %v2701 = vmul.f32 0.5, %v2700
        %v2702 = vsub.f32 1.5, %v2701
        %v2703 = vmul.f32 %v2698, %v2702
        %vm2704 = vweird.f32 %v1733
        %vm2705 = vweird.f32 %v2698
        %vm2706 = vmor %vm2704, %vm2705
        %v2707 = vsel %vm2706, %v2698, %v2703
        %v2708 = vrsqrt.pop %v1734
        %v2709 = vmul.f32 %v2708, %v1734
        %v2710 = vmul.f32 %v2709, %v2708
        %v2711 = vmul.f32 0.5, %v2710
        %v2712 = vsub.f32 1.5, %v2711
        %v2713 = vmul.f32 %v2708, %v2712
        %vm2714 = vweird.f32 %v1734
        %vm2715 = vweird.f32 %v2708
        %vm2716 = vmor %vm2714, %vm2715
        %v2717 = vsel %vm2716, %v2708, %v2713
        %v2718 = vrsqrt.pop %v1735
        %v2719 = vmul.f32 %v2718, %v1735
        %v2720 = vmul.f32 %v2719, %v2718
        %v2721 = vmul.f32 0.5, %v2720
        %v2722 = vsub.f32 1.5, %v2721
        %v2723 = vmul.f32 %v2718, %v2722
        %vm2724 = vweird.f32 %v1735
        %vm2725 = vweird.f32 %v2718
        %vm2726 = vmor %vm2724, %vm2725
        %v2727 = vsel %vm2726, %v2718, %v2723
        %v2728 = vrsqrt.pop %v1736
        %v2729 = vmul.f32 %v2728, %v1736
        %v2730 = vmul.f32 %v2729, %v2728
        %v2731 = vmul.f32 0.5, %v2730
        %v2732 = vsub.f32 1.5, %v2731
        %v2733 = vmul.f32 %v2728, %v2732
        %vm2734 = vweird.f32 %v1736
        %vm2735 = vweird.f32 %v2728
        %vm2736 = vmor %vm2734, %vm2735
        %v2737 = vsel %vm2736, %v2728, %v2733
        %v2738 = vrsqrt.pop %v1737
        %v2739 = vmul.f32 %v2738, %v1737
        %v2740 = vmul.f32 %v2739, %v2738
        %v2741 = vmul.f32 0.5, %v2740
        %v2742 = vsub.f32 1.5, %v2741
        %v2743 = vmul.f32 %v2738, %v2742
        %vm2744 = vweird.f32 %v1737
        %vm2745 = vweird.f32 %v2738
        %vm2746 = vmor %vm2744, %vm2745
        %v2747 = vsel %vm2746, %v2738, %v2743
        %v2748 = vrsqrt.pop %v1738
        %v2749 = vmul.f32 %v2748, %v1738
        %v2750 = vmul.f32 %v2749, %v2748
        %v2751 = vmul.f32 0.5, %v2750
        %v2752 = vsub.f32 1.5, %v2751
        %v2753 = vmul.f32 %v2748, %v2752
        %vm2754 = vweird.f32 %v1738
        %vm2755 = vweird.f32 %v2748
        %vm2756 = vmor %vm2754, %vm2755
        %v2757 = vsel %vm2756, %v2748, %v2753
        %v2758 = vrsqrt.pop %v1739
        %v2759 = vmul.f32 %v2758, %v1739
        %v2760 = vmul.f32 %v2759, %v2758
        %v2761 = vmul.f32 0.5, %v2760
        %v2762 = vsub.f32 1.5, %v2761
        %v2763 = vmul.f32 %v2758, %v2762
        %vm2764 = vweird.f32 %v1739
        %vm2765 = vweird.f32 %v2758
        %vm2766 = vmor %vm2764, %vm2765
        %v2767 = vsel %vm2766, %v2758, %v2763
        %v2768 = vrsqrt.pop %v1740
        %v2769 = vmul.f32 %v2768, %v1740
        %v2770 = vmul.f32 %v2769, %v2768
        %v2771 = vmul.f32 0.5, %v2770
        %v2772 = vsub.f32 1.5, %v2771
        %v2773 = vmul.f32 %v2768, %v2772
        %vm2774 = vweird.f32 %v1740
        %vm2775 = vweird.f32 %v2768
        %vm2776 = vmor %vm2774, %vm2775
        %v2777 = vsel %vm2776, %v2768, %v2773
        %v2778 = vrsqrt.pop %v1741
        %v2779 = vmul.f32 %v2778, %v1741
        %v2780 = vmul.f32 %v2779, %v2778
        %v2781 = vmul.f32 0.5, %v2780
        %v2782 = vsub.f32 1.5, %v2781
        %v2783 = vmul.f32 %v2778, %v2782
        %vm2784 = vweird.f32 %v1741
        %vm2785 = vweird.f32 %v2778
        %vm2786 = vmor %vm2784, %vm2785
        %v2787 = vsel %vm2786, %v2778, %v2783
        %v2788 = vrsqrt.pop %v1742
        %v2789 = vmul.f32 %v2788, %v1742
        %v2790 = vmul.f32 %v2789, %v2788
        %v2791 = vmul.f32 0.5, %v2790
        %v2792 = vsub.f32 1.5, %v2791
        %v2793 = vmul.f32 %v2788, %v2792
        %vm2794 = vweird.f32 %v1742
        %vm2795 = vweird.f32 %v2788
        %vm2796 = vmor %vm2794, %vm2795
        %v2797 = vsel %vm2796, %v2788, %v2793
        %v2798 = vrsqrt.pop %v1743
        %v2799 = vmul.f32 %v2798, %v1743
        %v2800 = vmul.f32 %v2799, %v2798
        %v2801 = vmul.f32 0.5, %v2800
        %v2802 = vsub.f32 1.5, %v2801
        %v2803 = vmul.f32 %v2798, %v2802
        %vm2804 = vweird.f32 %v1743
        %vm2805 = vweird.f32 %v2798
        %vm2806 = vmor %vm2804, %vm2805
        %v2807 = vsel %vm2806, %v2798, %v2803
        %v2808 = vrsqrt.pop %v1744
        %v2809 = vmul.f32 %v2808, %v1744
        %v2810 = vmul.f32 %v2809, %v2808
        %v2811 = vmul.f32 0.5, %v2810
        %v2812 = vsub.f32 1.5, %v2811
        %v2813 = vmul.f32 %v2808, %v2812
        %vm2814 = vweird.f32 %v1744
        %vm2815 = vweird.f32 %v2808
        %vm2816 = vmor %vm2814, %vm2815
        %v2817 = vsel %vm2816, %v2808, %v2813
        %v2818 = vrsqrt.pop %v1745
        %v2819 = vmul.f32 %v2818, %v1745
        %v2820 = vmul.f32 %v2819, %v2818
        %v2821 = vmul.f32 0.5, %v2820
        %v2822 = vsub.f32 1.5, %v2821
        %v2823 = vmul.f32 %v2818, %v2822
        %vm2824 = vweird.f32 %v1745
        %vm2825 = vweird.f32 %v2818
        %vm2826 = vmor %vm2824, %vm2825
        %v2827 = vsel %vm2826, %v2818, %v2823
        %v2828 = vrsqrt.pop %v1746
        %v2829 = vmul.f32 %v2828, %v1746
        %v2830 = vmul.f32 %v2829, %v2828
        %v2831 = vmul.f32 0.5, %v2830
        %v2832 = vsub.f32 1.5, %v2831
        %v2833 = vmul.f32 %v2828, %v2832
        %vm2834 = vweird.f32 %v1746
        %vm2835 = vweird.f32 %v2828
        %vm2836 = vmor %vm2834, %vm2835
        %v2837 = vsel %vm2836, %v2828, %v2833
        %v2838 = vrsqrt.pop %v1747
        %v2839 = vmul.f32 %v2838, %v1747
        %v2840 = vmul.f32 %v2839, %v2838
        %v2841 = vmul.f32 0.5, %v2840
        %v2842 = vsub.f32 1.5, %v2841
        %v2843 = vmul.f32 %v2838, %v2842
        %vm2844 = vweird.f32 %v1747
        %vm2845 = vweird.f32 %v2838
        %vm2846 = vmor %vm2844, %vm2845
        %v2847 = vsel %vm2846, %v2838, %v2843
        %v2848 = vrsqrt.pop %v1748
        %v2849 = vmul.f32 %v2848, %v1748
        %v2850 = vmul.f32 %v2849, %v2848
        %v2851 = vmul.f32 0.5, %v2850
        %v2852 = vsub.f32 1.5, %v2851
        %v2853 = vmul.f32 %v2848, %v2852
        %vm2854 = vweird.f32 %v1748
        %vm2855 = vweird.f32 %v2848
        %vm2856 = vmor %vm2854, %vm2855
        %v2857 = vsel %vm2856, %v2848, %v2853
        %v2858 = vrsqrt.pop %v1749
        %v2859 = vmul.f32 %v2858, %v1749
        %v2860 = vmul.f32 %v2859, %v2858
        %v2861 = vmul.f32 0.5, %v2860
        %v2862 = vsub.f32 1.5, %v2861
        %v2863 = vmul.f32 %v2858, %v2862
        %vm2864 = vweird.f32 %v1749
        %vm2865 = vweird.f32 %v2858
        %vm2866 = vmor %vm2864, %vm2865
        %v2867 = vsel %vm2866, %v2858, %v2863
        %v2868 = vrsqrt.pop %v1750
        %v2869 = vmul.f32 %v2868, %v1750
        %v2870 = vmul.f32 %v2869, %v2868
        %v2871 = vmul.f32 0.5, %v2870
        %v2872 = vsub.f32 1.5, %v2871
        %v2873 = vmul.f32 %v2868, %v2872
        %vm2874 = vweird.f32 %v1750
        %vm2875 = vweird.f32 %v2868
        %vm2876 = vmor %vm2874, %vm2875
        %v2877 = vsel %vm2876, %v2868, %v2873
        %v2878 = vrsqrt.pop %v1751
        %v2879 = vmul.f32 %v2878, %v1751
        %v2880 = vmul.f32 %v2879, %v2878
        %v2881 = vmul.f32 0.5, %v2880
        %v2882 = vsub.f32 1.5, %v2881
        %v2883 = vmul.f32 %v2878, %v2882
        %vm2884 = vweird.f32 %v1751
        %vm2885 = vweird.f32 %v2878
        %vm2886 = vmor %vm2884, %vm2885
        %v2887 = vsel %vm2886, %v2878, %v2883
        %v2888 = vrsqrt.pop %v1752
        %v2889 = vmul.f32 %v2888, %v1752
        %v2890 = vmul.f32 %v2889, %v2888
        %v2891 = vmul.f32 0.5, %v2890
        %v2892 = vsub.f32 1.5, %v2891
        %v2893 = vmul.f32 %v2888, %v2892
        %vm2894 = vweird.f32 %v1752
        %vm2895 = vweird.f32 %v2888
        %vm2896 = vmor %vm2894, %vm2895
        %v2897 = vsel %vm2896, %v2888, %v2893
        %v2898 = vrsqrt.pop %v1753
        %v2899 = vmul.f32 %v2898, %v1753
        %v2900 = vmul.f32 %v2899, %v2898
        %v2901 = vmul.f32 0.5, %v2900
        %v2902 = vsub.f32 1.5, %v2901
        %v2903 = vmul.f32 %v2898, %v2902
        %vm2904 = vweird.f32 %v1753
        %vm2905 = vweird.f32 %v2898
        %vm2906 = vmor %vm2904, %vm2905
        %v2907 = vsel %vm2906, %v2898, %v2903
        %v2908 = vrsqrt.pop %v1754
        %v2909 = vmul.f32 %v2908, %v1754
        %v2910 = vmul.f32 %v2909, %v2908
        %v2911 = vmul.f32 0.5, %v2910
        %v2912 = vsub.f32 1.5, %v2911
        %v2913 = vmul.f32 %v2908, %v2912
        %vm2914 = vweird.f32 %v1754
        %vm2915 = vweird.f32 %v2908
        %vm2916 = vmor %vm2914, %vm2915
        %v2917 = vsel %vm2916, %v2908, %v2913
        %v2918 = vrsqrt.pop %v1755
        %v2919 = vmul.f32 %v2918, %v1755
        %v2920 = vmul.f32 %v2919, %v2918
        %v2921 = vmul.f32 0.5, %v2920
        %v2922 = vsub.f32 1.5, %v2921
        %v2923 = vmul.f32 %v2918, %v2922
        %vm2924 = vweird.f32 %v1755
        %vm2925 = vweird.f32 %v2918
        %vm2926 = vmor %vm2924, %vm2925
        %v2927 = vsel %vm2926, %v2918, %v2923
        %v2928 = vrsqrt.pop %v1756
        %v2929 = vmul.f32 %v2928, %v1756
        %v2930 = vmul.f32 %v2929, %v2928
        %v2931 = vmul.f32 0.5, %v2930
        %v2932 = vsub.f32 1.5, %v2931
        %v2933 = vmul.f32 %v2928, %v2932
        %vm2934 = vweird.f32 %v1756
        %vm2935 = vweird.f32 %v2928
        %vm2936 = vmor %vm2934, %vm2935
        %v2937 = vsel %vm2936, %v2928, %v2933
        %v2938 = vrsqrt.pop %v1757
        %v2939 = vmul.f32 %v2938, %v1757
        %v2940 = vmul.f32 %v2939, %v2938
        %v2941 = vmul.f32 0.5, %v2940
        %v2942 = vsub.f32 1.5, %v2941
        %v2943 = vmul.f32 %v2938, %v2942
        %vm2944 = vweird.f32 %v1757
        %vm2945 = vweird.f32 %v2938
        %vm2946 = vmor %vm2944, %vm2945
        %v2947 = vsel %vm2946, %v2938, %v2943
        %v2948 = vrsqrt.pop %v1758
        %v2949 = vmul.f32 %v2948, %v1758
        %v2950 = vmul.f32 %v2949, %v2948
        %v2951 = vmul.f32 0.5, %v2950
        %v2952 = vsub.f32 1.5, %v2951
        %v2953 = vmul.f32 %v2948, %v2952
        %vm2954 = vweird.f32 %v1758
        %vm2955 = vweird.f32 %v2948
        %vm2956 = vmor %vm2954, %vm2955
        %v2957 = vsel %vm2956, %v2948, %v2953
        %v2958 = vrsqrt.pop %v1759
        %v2959 = vmul.f32 %v2958, %v1759
        %v2960 = vmul.f32 %v2959, %v2958
        %v2961 = vmul.f32 0.5, %v2960
        %v2962 = vsub.f32 1.5, %v2961
        %v2963 = vmul.f32 %v2958, %v2962
        %vm2964 = vweird.f32 %v1759
        %vm2965 = vweird.f32 %v2958
        %vm2966 = vmor %vm2964, %vm2965
        %v2967 = vsel %vm2966, %v2958, %v2963
        %v2968 = vrsqrt.pop %v1760
        %v2969 = vmul.f32 %v2968, %v1760
        %v2970 = vmul.f32 %v2969, %v2968
        %v2971 = vmul.f32 0.5, %v2970
        %v2972 = vsub.f32 1.5, %v2971
        %v2973 = vmul.f32 %v2968, %v2972
        %vm2974 = vweird.f32 %v1760
        %vm2975 = vweird.f32 %v2968
        %vm2976 = vmor %vm2974, %vm2975
        %v2977 = vsel %vm2976, %v2968, %v2973
        %v2978 = vrsqrt.pop %v1761
        %v2979 = vmul.f32 %v2978, %v1761
        %v2980 = vmul.f32 %v2979, %v2978
        %v2981 = vmul.f32 0.5, %v2980
        %v2982 = vsub.f32 1.5, %v2981
        %v2983 = vmul.f32 %v2978, %v2982
        %vm2984 = vweird.f32 %v1761
        %vm2985 = vweird.f32 %v2978
        %vm2986 = vmor %vm2984, %vm2985
        %v2987 = vsel %vm2986, %v2978, %v2983
        %v2988 = vrsqrt.pop %v1762
        %v2989 = vmul.f32 %v2988, %v1762
        %v2990 = vmul.f32 %v2989, %v2988
        %v2991 = vmul.f32 0.5, %v2990
        %v2992 = vsub.f32 1.5, %v2991
        %v2993 = vmul.f32 %v2988, %v2992
        %vm2994 = vweird.f32 %v1762
        %vm2995 = vweird.f32 %v2988
        %vm2996 = vmor %vm2994, %vm2995
        %v2997 = vsel %vm2996, %v2988, %v2993
        %v2998 = vrsqrt.pop %v1763
        %v2999 = vmul.f32 %v2998, %v1763
        %v3000 = vmul.f32 %v2999, %v2998
        %v3001 = vmul.f32 0.5, %v3000
        %v3002 = vsub.f32 1.5, %v3001
        %v3003 = vmul.f32 %v2998, %v3002
        %vm3004 = vweird.f32 %v1763
        %vm3005 = vweird.f32 %v2998
        %vm3006 = vmor %vm3004, %vm3005
        %v3007 = vsel %vm3006, %v2998, %v3003
        %v3008 = vrsqrt.pop %v1764
        %v3009 = vmul.f32 %v3008, %v1764
        %v3010 = vmul.f32 %v3009, %v3008
        %v3011 = vmul.f32 0.5, %v3010
        %v3012 = vsub.f32 1.5, %v3011
        %v3013 = vmul.f32 %v3008, %v3012
        %vm3014 = vweird.f32 %v1764
        %vm3015 = vweird.f32 %v3008
        %vm3016 = vmor %vm3014, %vm3015
        %v3017 = vsel %vm3016, %v3008, %v3013
        %v3018 = vrsqrt.pop %v1765
        %v3019 = vmul.f32 %v3018, %v1765
        %v3020 = vmul.f32 %v3019, %v3018
        %v3021 = vmul.f32 0.5, %v3020
        %v3022 = vsub.f32 1.5, %v3021
        %v3023 = vmul.f32 %v3018, %v3022
        %vm3024 = vweird.f32 %v1765
        %vm3025 = vweird.f32 %v3018
        %vm3026 = vmor %vm3024, %vm3025
        %v3027 = vsel %vm3026, %v3018, %v3023
        %v3028 = vrsqrt.pop %v1766
        %v3029 = vmul.f32 %v3028, %v1766
        %v3030 = vmul.f32 %v3029, %v3028
        %v3031 = vmul.f32 0.5, %v3030
        %v3032 = vsub.f32 1.5, %v3031
        %v3033 = vmul.f32 %v3028, %v3032
        %vm3034 = vweird.f32 %v1766
        %vm3035 = vweird.f32 %v3028
        %vm3036 = vmor %vm3034, %vm3035
        %v3037 = vsel %vm3036, %v3028, %v3033
        %v3038 = vrsqrt.pop %v1767
        %v3039 = vmul.f32 %v3038, %v1767
        %v3040 = vmul.f32 %v3039, %v3038
        %v3041 = vmul.f32 0.5, %v3040
        %v3042 = vsub.f32 1.5, %v3041
        %v3043 = vmul.f32 %v3038, %v3042
        %vm3044 = vweird.f32 %v1767
        %vm3045 = vweird.f32 %v3038
        %vm3046 = vmor %vm3044, %vm3045
        %v3047 = vsel %vm3046, %v3038, %v3043
        %v3048 = vmul.f32 %v872, %v1777
        %v3049 = vmul.f32 %v873, %v1787
        %v3050 = vmul.f32 %v874, %v1797
        %v3051 = vmul.f32 %v875, %v1807
        %v3052 = vmul.f32 %v876, %v1817
        %v3053 = vmul.f32 %v877, %v1827
        %v3054 = vmul.f32 %v878, %v1837
        %v3055 = vmul.f32 %v879, %v1847
        %v3056 = vmul.f32 %v880, %v1857
        %v3057 = vmul.f32 %v881, %v1867
        %v3058 = vmul.f32 %v882, %v1877
        %v3059 = vmul.f32 %v883, %v1887
        %v3060 = vmul.f32 %v884, %v1897
        %v3061 = vmul.f32 %v885, %v1907
        %v3062 = vmul.f32 %v886, %v1917
        %v3063 = vmul.f32 %v887, %v1927
        %v3064 = vmul.f32 %v888, %v1937
        %v3065 = vmul.f32 %v889, %v1947
        %v3066 = vmul.f32 %v890, %v1957
        %v3067 = vmul.f32 %v891, %v1967
        %v3068 = vmul.f32 %v892, %v1977
        %v3069 = vmul.f32 %v893, %v1987
        %v3070 = vmul.f32 %v894, %v1997
        %v3071 = vmul.f32 %v895, %v2007
        %v3072 = vmul.f32 %v896, %v2017
        %v3073 = vmul.f32 %v897, %v2027
        %v3074 = vmul.f32 %v898, %v2037
        %v3075 = vmul.f32 %v899, %v2047
        %v3076 = vmul.f32 %v900, %v2057
        %v3077 = vmul.f32 %v901, %v2067
        %v3078 = vmul.f32 %v902, %v2077
        %v3079 = vmul.f32 %v903, %v2087
        %v3080 = vmul.f32 %v904, %v2097
        %v3081 = vmul.f32 %v905, %v2107
        %v3082 = vmul.f32 %v906, %v2117
        %v3083 = vmul.f32 %v907, %v2127
        %v3084 = vmul.f32 %v908, %v2137
        %v3085 = vmul.f32 %v909, %v2147
        %v3086 = vmul.f32 %v910, %v2157
        %v3087 = vmul.f32 %v911, %v2167
        %v3088 = vmul.f32 %v912, %v2177
        %v3089 = vmul.f32 %v913, %v2187
        %v3090 = vmul.f32 %v914, %v2197
        %v3091 = vmul.f32 %v915, %v2207
        %v3092 = vmul.f32 %v916, %v2217
        %v3093 = vmul.f32 %v917, %v2227
        %v3094 = vmul.f32 %v918, %v2237
        %v3095 = vmul.f32 %v919, %v2247
        %v3096 = vmul.f32 %v920, %v2257
        %v3097 = vmul.f32 %v921, %v2267
        %v3098 = vmul.f32 %v922, %v2277
        %v3099 = vmul.f32 %v923, %v2287
        %v3100 = vmul.f32 %v924, %v2297
        %v3101 = vmul.f32 %v925, %v2307
        %v3102 = vmul.f32 %v926, %v2317
        %v3103 = vmul.f32 %v927, %v2327
        %v3104 = vmul.f32 %v928, %v2337
        %v3105 = vmul.f32 %v929, %v2347
        %v3106 = vmul.f32 %v930, %v2357
        %v3107 = vmul.f32 %v931, %v2367
        %v3108 = vmul.f32 %v932, %v2377
        %v3109 = vmul.f32 %v933, %v2387
        %v3110 = vmul.f32 %v934, %v2397
        %v3111 = vmul.f32 %v935, %v2407
        %v3112 = vmul.f32 %v936, %v2417
        %v3113 = vmul.f32 %v937, %v2427
        %v3114 = vmul.f32 %v938, %v2437
        %v3115 = vmul.f32 %v939, %v2447
        %v3116 = vmul.f32 %v940, %v2457
        %v3117 = vmul.f32 %v941, %v2467
        %v3118 = vmul.f32 %v942, %v2477
        %v3119 = vmul.f32 %v943, %v2487
        %v3120 = vmul.f32 %v944, %v2497
        %v3121 = vmul.f32 %v945, %v2507
        %v3122 = vmul.f32 %v946, %v2517
        %v3123 = vmul.f32 %v947, %v2527
        %v3124 = vmul.f32 %v948, %v2537
        %v3125 = vmul.f32 %v949, %v2547
        %v3126 = vmul.f32 %v950, %v2557
        %v3127 = vmul.f32 %v951, %v2567
        %v3128 = vmul.f32 %v952, %v2577
        %v3129 = vmul.f32 %v953, %v2587
        %v3130 = vmul.f32 %v954, %v2597
        %v3131 = vmul.f32 %v955, %v2607
        %v3132 = vmul.f32 %v956, %v2617
        %v3133 = vmul.f32 %v957, %v2627
        %v3134 = vmul.f32 %v958, %v2637
        %v3135 = vmul.f32 %v959, %v2647
        %v3136 = vmul.f32 %v960, %v2657
        %v3137 = vmul.f32 %v961, %v2667
        %v3138 = vmul.f32 %v962, %v2677
        %v3139 = vmul.f32 %v963, %v2687
        %v3140 = vmul.f32 %v964, %v2697
        %v3141 = vmul.f32 %v965, %v2707
        %v3142 = vmul.f32 %v966, %v2717
        %v3143 = vmul.f32 %v967, %v2727
        %v3144 = vmul.f32 %v968, %v2737
        %v3145 = vmul.f32 %v969, %v2747
        %v3146 = vmul.f32 %v970, %v2757
        %v3147 = vmul.f32 %v971, %v2767
        %v3148 = vmul.f32 %v972, %v2777
        %v3149 = vmul.f32 %v973, %v2787
        %v3150 = vmul.f32 %v974, %v2797
        %v3151 = vmul.f32 %v975, %v2807
        %v3152 = vmul.f32 %v976, %v2817
        %v3153 = vmul.f32 %v977, %v2827
        %v3154 = vmul.f32 %v978, %v2837
        %v3155 = vmul.f32 %v979, %v2847
        %v3156 = vmul.f32 %v980, %v2857
        %v3157 = vmul.f32 %v981, %v2867
        %v3158 = vmul.f32 %v982, %v2877
        %v3159 = vmul.f32 %v983, %v2887
        %v3160 = vmul.f32 %v984, %v2897
        %v3161 = vmul.f32 %v985, %v2907
        %v3162 = vmul.f32 %v986, %v2917
        %v3163 = vmul.f32 %v987, %v2927
        %v3164 = vmul.f32 %v988, %v2937
        %v3165 = vmul.f32 %v989, %v2947
        %v3166 = vmul.f32 %v990, %v2957
        %v3167 = vmul.f32 %v991, %v2967
        %v3168 = vmul.f32 %v992, %v2977
        %v3169 = vmul.f32 %v993, %v2987
        %v3170 = vmul.f32 %v994, %v2997
        %v3171 = vmul.f32 %v995, %v3007
        %v3172 = vmul.f32 %v996, %v3017
        %v3173 = vmul.f32 %v997, %v3027
        %v3174 = vmul.f32 %v998, %v3037
        %v3175 = vmul.f32 %v999, %v3047
        %v3176 = vld [vmem:[#allocation4] sm:$0x1]
        %v3178 = vperm.slane %v3176, 0
        %v3180 = vmul.f32 %v3048, %v3178
        %v3181 = vmul.f32 %v3049, %v3178
        %v3182 = vmul.f32 %v3050, %v3178
        %v3183 = vmul.f32 %v3051, %v3178
        %v3184 = vmul.f32 %v3052, %v3178
        %v3185 = vmul.f32 %v3053, %v3178
        %v3186 = vmul.f32 %v3054, %v3178
        %v3187 = vmul.f32 %v3055, %v3178
        %v3188 = vmul.f32 %v3056, %v3178
        %v3189 = vmul.f32 %v3057, %v3178
        %v3190 = vmul.f32 %v3058, %v3178
        %v3191 = vmul.f32 %v3059, %v3178
        %v3192 = vmul.f32 %v3060, %v3178
        %v3193 = vmul.f32 %v3061, %v3178
        %v3194 = vmul.f32 %v3062, %v3178
        %v3195 = vmul.f32 %v3063, %v3178
        %v3196 = vmul.f32 %v3064, %v3178
        %v3197 = vmul.f32 %v3065, %v3178
        %v3198 = vmul.f32 %v3066, %v3178
        %v3199 = vmul.f32 %v3067, %v3178
        %v3200 = vmul.f32 %v3068, %v3178
        %v3201 = vmul.f32 %v3069, %v3178
        %v3202 = vmul.f32 %v3070, %v3178
        %v3203 = vmul.f32 %v3071, %v3178
        %v3204 = vmul.f32 %v3072, %v3178
        %v3205 = vmul.f32 %v3073, %v3178
        %v3206 = vmul.f32 %v3074, %v3178
        %v3207 = vmul.f32 %v3075, %v3178
        %v3208 = vmul.f32 %v3076, %v3178
        %v3209 = vmul.f32 %v3077, %v3178
        %v3210 = vmul.f32 %v3078, %v3178
        %v3211 = vmul.f32 %v3079, %v3178
        %v3212 = vmul.f32 %v3080, %v3178
        %v3213 = vmul.f32 %v3081, %v3178
        %v3214 = vmul.f32 %v3082, %v3178
        %v3215 = vmul.f32 %v3083, %v3178
        %v3216 = vmul.f32 %v3084, %v3178
        %v3217 = vmul.f32 %v3085, %v3178
        %v3218 = vmul.f32 %v3086, %v3178
        %v3219 = vmul.f32 %v3087, %v3178
        %v3220 = vmul.f32 %v3088, %v3178
        %v3221 = vmul.f32 %v3089, %v3178
        %v3222 = vmul.f32 %v3090, %v3178
        %v3223 = vmul.f32 %v3091, %v3178
        %v3224 = vmul.f32 %v3092, %v3178
        %v3225 = vmul.f32 %v3093, %v3178
        %v3226 = vmul.f32 %v3094, %v3178
        %v3227 = vmul.f32 %v3095, %v3178
        %v3228 = vmul.f32 %v3096, %v3178
        %v3229 = vmul.f32 %v3097, %v3178
        %v3230 = vmul.f32 %v3098, %v3178
        %v3231 = vmul.f32 %v3099, %v3178
        %v3232 = vmul.f32 %v3100, %v3178
        %v3233 = vmul.f32 %v3101, %v3178
        %v3234 = vmul.f32 %v3102, %v3178
        %v3235 = vmul.f32 %v3103, %v3178
        %v3236 = vmul.f32 %v3104, %v3178
        %v3237 = vmul.f32 %v3105, %v3178
        %v3238 = vmul.f32 %v3106, %v3178
        %v3239 = vmul.f32 %v3107, %v3178
        %v3240 = vmul.f32 %v3108, %v3178
        %v3241 = vmul.f32 %v3109, %v3178
        %v3242 = vmul.f32 %v3110, %v3178
        %v3243 = vmul.f32 %v3111, %v3178
        %v3244 = vmul.f32 %v3112, %v3178
        %v3245 = vmul.f32 %v3113, %v3178
        %v3246 = vmul.f32 %v3114, %v3178
        %v3247 = vmul.f32 %v3115, %v3178
        %v3248 = vmul.f32 %v3116, %v3178
        %v3249 = vmul.f32 %v3117, %v3178
        %v3250 = vmul.f32 %v3118, %v3178
        %v3251 = vmul.f32 %v3119, %v3178
        %v3252 = vmul.f32 %v3120, %v3178
        %v3253 = vmul.f32 %v3121, %v3178
        %v3254 = vmul.f32 %v3122, %v3178
        %v3255 = vmul.f32 %v3123, %v3178
        %v3256 = vmul.f32 %v3124, %v3178
        %v3257 = vmul.f32 %v3125, %v3178
        %v3258 = vmul.f32 %v3126, %v3178
        %v3259 = vmul.f32 %v3127, %v3178
        %v3260 = vmul.f32 %v3128, %v3178
        %v3261 = vmul.f32 %v3129, %v3178
        %v3262 = vmul.f32 %v3130, %v3178
        %v3263 = vmul.f32 %v3131, %v3178
        %v3264 = vmul.f32 %v3132, %v3178
        %v3265 = vmul.f32 %v3133, %v3178
        %v3266 = vmul.f32 %v3134, %v3178
        %v3267 = vmul.f32 %v3135, %v3178
        %v3268 = vmul.f32 %v3136, %v3178
        %v3269 = vmul.f32 %v3137, %v3178
        %v3270 = vmul.f32 %v3138, %v3178
        %v3271 = vmul.f32 %v3139, %v3178
        %v3272 = vmul.f32 %v3140, %v3178
        %v3273 = vmul.f32 %v3141, %v3178
        %v3274 = vmul.f32 %v3142, %v3178
        %v3275 = vmul.f32 %v3143, %v3178
        %v3276 = vmul.f32 %v3144, %v3178
        %v3277 = vmul.f32 %v3145, %v3178
        %v3278 = vmul.f32 %v3146, %v3178
        %v3279 = vmul.f32 %v3147, %v3178
        %v3280 = vmul.f32 %v3148, %v3178
        %v3281 = vmul.f32 %v3149, %v3178
        %v3282 = vmul.f32 %v3150, %v3178
        %v3283 = vmul.f32 %v3151, %v3178
        %v3284 = vmul.f32 %v3152, %v3178
        %v3285 = vmul.f32 %v3153, %v3178
        %v3286 = vmul.f32 %v3154, %v3178
        %v3287 = vmul.f32 %v3155, %v3178
        %v3288 = vmul.f32 %v3156, %v3178
        %v3289 = vmul.f32 %v3157, %v3178
        %v3290 = vmul.f32 %v3158, %v3178
        %v3291 = vmul.f32 %v3159, %v3178
        %v3292 = vmul.f32 %v3160, %v3178
        %v3293 = vmul.f32 %v3161, %v3178
        %v3294 = vmul.f32 %v3162, %v3178
        %v3295 = vmul.f32 %v3163, %v3178
        %v3296 = vmul.f32 %v3164, %v3178
        %v3297 = vmul.f32 %v3165, %v3178
        %v3298 = vmul.f32 %v3166, %v3178
        %v3299 = vmul.f32 %v3167, %v3178
        %v3300 = vmul.f32 %v3168, %v3178
        %v3301 = vmul.f32 %v3169, %v3178
        %v3302 = vmul.f32 %v3170, %v3178
        %v3303 = vmul.f32 %v3171, %v3178
        %v3304 = vmul.f32 %v3172, %v3178
        %v3305 = vmul.f32 %v3173, %v3178
        %v3306 = vmul.f32 %v3174, %v3178
        %v3307 = vmul.f32 %v3175, %v3178
        %v3308 = vld [vmem:[#allocation6] sm:$0x1]
        %v3310 = vperm.slane %v3308, 0
        %v3312 = vadd.f32 %v3180, %v3310
        %v3313 = vadd.f32 %v3181, %v3310
        %v3314 = vadd.f32 %v3182, %v3310
        %v3315 = vadd.f32 %v3183, %v3310
        %v3316 = vadd.f32 %v3184, %v3310
        %v3317 = vadd.f32 %v3185, %v3310
        %v3318 = vadd.f32 %v3186, %v3310
        %v3319 = vadd.f32 %v3187, %v3310
        %v3320 = vadd.f32 %v3188, %v3310
        %v3321 = vadd.f32 %v3189, %v3310
        %v3322 = vadd.f32 %v3190, %v3310
        %v3323 = vadd.f32 %v3191, %v3310
        %v3324 = vadd.f32 %v3192, %v3310
        %v3325 = vadd.f32 %v3193, %v3310
        %v3326 = vadd.f32 %v3194, %v3310
        %v3327 = vadd.f32 %v3195, %v3310
        %v3328 = vadd.f32 %v3196, %v3310
        %v3329 = vadd.f32 %v3197, %v3310
        %v3330 = vadd.f32 %v3198, %v3310
        %v3331 = vadd.f32 %v3199, %v3310
        %v3332 = vadd.f32 %v3200, %v3310
        %v3333 = vadd.f32 %v3201, %v3310
        %v3334 = vadd.f32 %v3202, %v3310
        %v3335 = vadd.f32 %v3203, %v3310
        %v3336 = vadd.f32 %v3204, %v3310
        %v3337 = vadd.f32 %v3205, %v3310
        %v3338 = vadd.f32 %v3206, %v3310
        %v3339 = vadd.f32 %v3207, %v3310
        %v3340 = vadd.f32 %v3208, %v3310
        %v3341 = vadd.f32 %v3209, %v3310
        %v3342 = vadd.f32 %v3210, %v3310
        %v3343 = vadd.f32 %v3211, %v3310
        %v3344 = vadd.f32 %v3212, %v3310
        %v3345 = vadd.f32 %v3213, %v3310
        %v3346 = vadd.f32 %v3214, %v3310
        %v3347 = vadd.f32 %v3215, %v3310
        %v3348 = vadd.f32 %v3216, %v3310
        %v3349 = vadd.f32 %v3217, %v3310
        %v3350 = vadd.f32 %v3218, %v3310
        %v3351 = vadd.f32 %v3219, %v3310
        %v3352 = vadd.f32 %v3220, %v3310
        %v3353 = vadd.f32 %v3221, %v3310
        %v3354 = vadd.f32 %v3222, %v3310
        %v3355 = vadd.f32 %v3223, %v3310
        %v3356 = vadd.f32 %v3224, %v3310
        %v3357 = vadd.f32 %v3225, %v3310
        %v3358 = vadd.f32 %v3226, %v3310
        %v3359 = vadd.f32 %v3227, %v3310
        %v3360 = vadd.f32 %v3228, %v3310
        %v3361 = vadd.f32 %v3229, %v3310
        %v3362 = vadd.f32 %v3230, %v3310
        %v3363 = vadd.f32 %v3231, %v3310
        %v3364 = vadd.f32 %v3232, %v3310
        %v3365 = vadd.f32 %v3233, %v3310
        %v3366 = vadd.f32 %v3234, %v3310
        %v3367 = vadd.f32 %v3235, %v3310
        %v3368 = vadd.f32 %v3236, %v3310
        %v3369 = vadd.f32 %v3237, %v3310
        %v3370 = vadd.f32 %v3238, %v3310
        %v3371 = vadd.f32 %v3239, %v3310
        %v3372 = vadd.f32 %v3240, %v3310
        %v3373 = vadd.f32 %v3241, %v3310
        %v3374 = vadd.f32 %v3242, %v3310
        %v3375 = vadd.f32 %v3243, %v3310
        %v3376 = vadd.f32 %v3244, %v3310
        %v3377 = vadd.f32 %v3245, %v3310
        %v3378 = vadd.f32 %v3246, %v3310
        %v3379 = vadd.f32 %v3247, %v3310
        %v3380 = vadd.f32 %v3248, %v3310
        %v3381 = vadd.f32 %v3249, %v3310
        %v3382 = vadd.f32 %v3250, %v3310
        %v3383 = vadd.f32 %v3251, %v3310
        %v3384 = vadd.f32 %v3252, %v3310
        %v3385 = vadd.f32 %v3253, %v3310
        %v3386 = vadd.f32 %v3254, %v3310
        %v3387 = vadd.f32 %v3255, %v3310
        %v3388 = vadd.f32 %v3256, %v3310
        %v3389 = vadd.f32 %v3257, %v3310
        %v3390 = vadd.f32 %v3258, %v3310
        %v3391 = vadd.f32 %v3259, %v3310
        %v3392 = vadd.f32 %v3260, %v3310
        %v3393 = vadd.f32 %v3261, %v3310
        %v3394 = vadd.f32 %v3262, %v3310
        %v3395 = vadd.f32 %v3263, %v3310
        %v3396 = vadd.f32 %v3264, %v3310
        %v3397 = vadd.f32 %v3265, %v3310
        %v3398 = vadd.f32 %v3266, %v3310
        %v3399 = vadd.f32 %v3267, %v3310
        %v3400 = vadd.f32 %v3268, %v3310
        %v3401 = vadd.f32 %v3269, %v3310
        %v3402 = vadd.f32 %v3270, %v3310
        %v3403 = vadd.f32 %v3271, %v3310
        %v3404 = vadd.f32 %v3272, %v3310
        %v3405 = vadd.f32 %v3273, %v3310
        %v3406 = vadd.f32 %v3274, %v3310
        %v3407 = vadd.f32 %v3275, %v3310
        %v3408 = vadd.f32 %v3276, %v3310
        %v3409 = vadd.f32 %v3277, %v3310
        %v3410 = vadd.f32 %v3278, %v3310
        %v3411 = vadd.f32 %v3279, %v3310
        %v3412 = vadd.f32 %v3280, %v3310
        %v3413 = vadd.f32 %v3281, %v3310
        %v3414 = vadd.f32 %v3282, %v3310
        %v3415 = vadd.f32 %v3283, %v3310
        %v3416 = vadd.f32 %v3284, %v3310
        %v3417 = vadd.f32 %v3285, %v3310
        %v3418 = vadd.f32 %v3286, %v3310
        %v3419 = vadd.f32 %v3287, %v3310
        %v3420 = vadd.f32 %v3288, %v3310
        %v3421 = vadd.f32 %v3289, %v3310
        %v3422 = vadd.f32 %v3290, %v3310
        %v3423 = vadd.f32 %v3291, %v3310
        %v3424 = vadd.f32 %v3292, %v3310
        %v3425 = vadd.f32 %v3293, %v3310
        %v3426 = vadd.f32 %v3294, %v3310
        %v3427 = vadd.f32 %v3295, %v3310
        %v3428 = vadd.f32 %v3296, %v3310
        %v3429 = vadd.f32 %v3297, %v3310
        %v3430 = vadd.f32 %v3298, %v3310
        %v3431 = vadd.f32 %v3299, %v3310
        %v3432 = vadd.f32 %v3300, %v3310
        %v3433 = vadd.f32 %v3301, %v3310
        %v3434 = vadd.f32 %v3302, %v3310
        %v3435 = vadd.f32 %v3303, %v3310
        %v3436 = vadd.f32 %v3304, %v3310
        %v3437 = vadd.f32 %v3305, %v3310
        %v3438 = vadd.f32 %v3306, %v3310
        %v3439 = vadd.f32 %v3307, %v3310
        %3440 = vst.msk [vmem:[%s222] sm:$0xff] %vm352, %v3312
        %3441 = vst.msk [vmem:[%s222 + $0x8] sm:$0xff] %vm352, %v3313
        %3442 = vst.msk [vmem:[%s222 + $0x10] sm:$0xff] %vm352, %v3314
        %3443 = vst.msk [vmem:[%s222 + $0x18] sm:$0xff] %vm352, %v3315
        %3444 = vst.msk [vmem:[%s222 + $0x20] sm:$0xff] %vm352, %v3316
        %3445 = vst.msk [vmem:[%s222 + $0x28] sm:$0xff] %vm352, %v3317
        %3446 = vst.msk [vmem:[%s222 + $0x30] sm:$0xff] %vm352, %v3318
        %3447 = vst.msk [vmem:[%s222 + $0x38] sm:$0xff] %vm352, %v3319
        %3448 = vst.msk [vmem:[%s222 + $0x40] sm:$0xff] %vm352, %v3320
        %3449 = vst.msk [vmem:[%s222 + $0x48] sm:$0xff] %vm352, %v3321
        %3450 = vst.msk [vmem:[%s222 + $0x50] sm:$0xff] %vm352, %v3322
        %3451 = vst.msk [vmem:[%s222 + $0x58] sm:$0xff] %vm352, %v3323
        %3452 = vst.msk [vmem:[%s222 + $0x60] sm:$0xff] %vm352, %v3324
        %3453 = vst.msk [vmem:[%s222 + $0x68] sm:$0xff] %vm352, %v3325
        %3454 = vst.msk [vmem:[%s222 + $0x70] sm:$0xff] %vm352, %v3326
        %3455 = vst.msk [vmem:[%s222 + $0x78] sm:$0xff] %vm352, %v3327
        %3456 = vst.msk [vmem:[%s222 + $0x80] sm:$0xff] %vm352, %v3328
        %3457 = vst.msk [vmem:[%s222 + $0x88] sm:$0xff] %vm352, %v3329
        %3458 = vst.msk [vmem:[%s222 + $0x90] sm:$0xff] %vm352, %v3330
        %3459 = vst.msk [vmem:[%s222 + $0x98] sm:$0xff] %vm352, %v3331
        %3460 = vst.msk [vmem:[%s222 + $0xa0] sm:$0xff] %vm352, %v3332
        %3461 = vst.msk [vmem:[%s222 + $0xa8] sm:$0xff] %vm352, %v3333
        %3462 = vst.msk [vmem:[%s222 + $0xb0] sm:$0xff] %vm352, %v3334
        %3463 = vst.msk [vmem:[%s222 + $0xb8] sm:$0xff] %vm352, %v3335
        %3464 = vst.msk [vmem:[%s222 + $0xc0] sm:$0xff] %vm352, %v3336
        %3465 = vst.msk [vmem:[%s222 + $0xc8] sm:$0xff] %vm352, %v3337
        %3466 = vst.msk [vmem:[%s222 + $0xd0] sm:$0xff] %vm352, %v3338
        %3467 = vst.msk [vmem:[%s222 + $0xd8] sm:$0xff] %vm352, %v3339
        %3468 = vst.msk [vmem:[%s222 + $0xe0] sm:$0xff] %vm352, %v3340
        %3469 = vst.msk [vmem:[%s222 + $0xe8] sm:$0xff] %vm352, %v3341
        %3470 = vst.msk [vmem:[%s222 + $0xf0] sm:$0xff] %vm352, %v3342
        %3471 = vst.msk [vmem:[%s222 + $0xf8] sm:$0xff] %vm352, %v3343
        %3472 = vst.msk [vmem:[%s222 + $0x100] sm:$0xff] %vm352, %v3344
        %3473 = vst.msk [vmem:[%s222 + $0x108] sm:$0xff] %vm352, %v3345
        %3474 = vst.msk [vmem:[%s222 + $0x110] sm:$0xff] %vm352, %v3346
        %3475 = vst.msk [vmem:[%s222 + $0x118] sm:$0xff] %vm352, %v3347
        %3476 = vst.msk [vmem:[%s222 + $0x120] sm:$0xff] %vm352, %v3348
        %3477 = vst.msk [vmem:[%s222 + $0x128] sm:$0xff] %vm352, %v3349
        %3478 = vst.msk [vmem:[%s222 + $0x130] sm:$0xff] %vm352, %v3350
        %3479 = vst.msk [vmem:[%s222 + $0x138] sm:$0xff] %vm352, %v3351
        %3480 = vst.msk [vmem:[%s222 + $0x140] sm:$0xff] %vm352, %v3352
        %3481 = vst.msk [vmem:[%s222 + $0x148] sm:$0xff] %vm352, %v3353
        %3482 = vst.msk [vmem:[%s222 + $0x150] sm:$0xff] %vm352, %v3354
        %3483 = vst.msk [vmem:[%s222 + $0x158] sm:$0xff] %vm352, %v3355
        %3484 = vst.msk [vmem:[%s222 + $0x160] sm:$0xff] %vm352, %v3356
        %3485 = vst.msk [vmem:[%s222 + $0x168] sm:$0xff] %vm352, %v3357
        %3486 = vst.msk [vmem:[%s222 + $0x170] sm:$0xff] %vm352, %v3358
        %3487 = vst.msk [vmem:[%s222 + $0x178] sm:$0xff] %vm352, %v3359
        %3488 = vst.msk [vmem:[%s222 + $0x180] sm:$0xff] %vm352, %v3360
        %3489 = vst.msk [vmem:[%s222 + $0x188] sm:$0xff] %vm352, %v3361
        %3490 = vst.msk [vmem:[%s222 + $0x190] sm:$0xff] %vm352, %v3362
        %3491 = vst.msk [vmem:[%s222 + $0x198] sm:$0xff] %vm352, %v3363
        %3492 = vst.msk [vmem:[%s222 + $0x1a0] sm:$0xff] %vm352, %v3364
        %3493 = vst.msk [vmem:[%s222 + $0x1a8] sm:$0xff] %vm352, %v3365
        %3494 = vst.msk [vmem:[%s222 + $0x1b0] sm:$0xff] %vm352, %v3366
        %3495 = vst.msk [vmem:[%s222 + $0x1b8] sm:$0xff] %vm352, %v3367
        %3496 = vst.msk [vmem:[%s222 + $0x1c0] sm:$0xff] %vm352, %v3368
        %3497 = vst.msk [vmem:[%s222 + $0x1c8] sm:$0xff] %vm352, %v3369
        %3498 = vst.msk [vmem:[%s222 + $0x1d0] sm:$0xff] %vm352, %v3370
        %3499 = vst.msk [vmem:[%s222 + $0x1d8] sm:$0xff] %vm352, %v3371
        %3500 = vst.msk [vmem:[%s222 + $0x1e0] sm:$0xff] %vm352, %v3372
        %3501 = vst.msk [vmem:[%s222 + $0x1e8] sm:$0xff] %vm352, %v3373
        %3502 = vst.msk [vmem:[%s222 + $0x1f0] sm:$0xff] %vm352, %v3374
        %3503 = vst.msk [vmem:[%s222 + $0x1f8] sm:$0xff] %vm352, %v3375
        %3504 = vst.msk [vmem:[%s222 + $0x200] sm:$0xff] %vm352, %v3376
        %3505 = vst.msk [vmem:[%s222 + $0x208] sm:$0xff] %vm352, %v3377
        %3506 = vst.msk [vmem:[%s222 + $0x210] sm:$0xff] %vm352, %v3378
        %3507 = vst.msk [vmem:[%s222 + $0x218] sm:$0xff] %vm352, %v3379
        %3508 = vst.msk [vmem:[%s222 + $0x220] sm:$0xff] %vm352, %v3380
        %3509 = vst.msk [vmem:[%s222 + $0x228] sm:$0xff] %vm352, %v3381
        %3510 = vst.msk [vmem:[%s222 + $0x230] sm:$0xff] %vm352, %v3382
        %3511 = vst.msk [vmem:[%s222 + $0x238] sm:$0xff] %vm352, %v3383
        %3512 = vst.msk [vmem:[%s222 + $0x240] sm:$0xff] %vm352, %v3384
        %3513 = vst.msk [vmem:[%s222 + $0x248] sm:$0xff] %vm352, %v3385
        %3514 = vst.msk [vmem:[%s222 + $0x250] sm:$0xff] %vm352, %v3386
        %3515 = vst.msk [vmem:[%s222 + $0x258] sm:$0xff] %vm352, %v3387
        %3516 = vst.msk [vmem:[%s222 + $0x260] sm:$0xff] %vm352, %v3388
        %3517 = vst.msk [vmem:[%s222 + $0x268] sm:$0xff] %vm352, %v3389
        %3518 = vst.msk [vmem:[%s222 + $0x270] sm:$0xff] %vm352, %v3390
        %3519 = vst.msk [vmem:[%s222 + $0x278] sm:$0xff] %vm352, %v3391
        %3520 = vst.msk [vmem:[%s222 + $0x280] sm:$0xff] %vm352, %v3392
        %3521 = vst.msk [vmem:[%s222 + $0x288] sm:$0xff] %vm352, %v3393
        %3522 = vst.msk [vmem:[%s222 + $0x290] sm:$0xff] %vm352, %v3394
        %3523 = vst.msk [vmem:[%s222 + $0x298] sm:$0xff] %vm352, %v3395
        %3524 = vst.msk [vmem:[%s222 + $0x2a0] sm:$0xff] %vm352, %v3396
        %3525 = vst.msk [vmem:[%s222 + $0x2a8] sm:$0xff] %vm352, %v3397
        %3526 = vst.msk [vmem:[%s222 + $0x2b0] sm:$0xff] %vm352, %v3398
        %3527 = vst.msk [vmem:[%s222 + $0x2b8] sm:$0xff] %vm352, %v3399
        %3528 = vst.msk [vmem:[%s222 + $0x2c0] sm:$0xff] %vm352, %v3400
        %3529 = vst.msk [vmem:[%s222 + $0x2c8] sm:$0xff] %vm352, %v3401
        %3530 = vst.msk [vmem:[%s222 + $0x2d0] sm:$0xff] %vm352, %v3402
        %3531 = vst.msk [vmem:[%s222 + $0x2d8] sm:$0xff] %vm352, %v3403
        %3532 = vst.msk [vmem:[%s222 + $0x2e0] sm:$0xff] %vm352, %v3404
        %3533 = vst.msk [vmem:[%s222 + $0x2e8] sm:$0xff] %vm352, %v3405
        %3534 = vst.msk [vmem:[%s222 + $0x2f0] sm:$0xff] %vm352, %v3406
        %3535 = vst.msk [vmem:[%s222 + $0x2f8] sm:$0xff] %vm352, %v3407
        %3536 = vst.msk [vmem:[%s222 + $0x300] sm:$0xff] %vm352, %v3408
        %3537 = vst.msk [vmem:[%s222 + $0x308] sm:$0xff] %vm352, %v3409
        %3538 = vst.msk [vmem:[%s222 + $0x310] sm:$0xff] %vm352, %v3410
        %3539 = vst.msk [vmem:[%s222 + $0x318] sm:$0xff] %vm352, %v3411
        %3540 = vst.msk [vmem:[%s222 + $0x320] sm:$0xff] %vm352, %v3412
        %3541 = vst.msk [vmem:[%s222 + $0x328] sm:$0xff] %vm352, %v3413
        %3542 = vst.msk [vmem:[%s222 + $0x330] sm:$0xff] %vm352, %v3414
        %3543 = vst.msk [vmem:[%s222 + $0x338] sm:$0xff] %vm352, %v3415
        %3544 = vst.msk [vmem:[%s222 + $0x340] sm:$0xff] %vm352, %v3416
        %3545 = vst.msk [vmem:[%s222 + $0x348] sm:$0xff] %vm352, %v3417
        %3546 = vst.msk [vmem:[%s222 + $0x350] sm:$0xff] %vm352, %v3418
        %3547 = vst.msk [vmem:[%s222 + $0x358] sm:$0xff] %vm352, %v3419
        %3548 = vst.msk [vmem:[%s222 + $0x360] sm:$0xff] %vm352, %v3420
        %3549 = vst.msk [vmem:[%s222 + $0x368] sm:$0xff] %vm352, %v3421
        %3550 = vst.msk [vmem:[%s222 + $0x370] sm:$0xff] %vm352, %v3422
        %3551 = vst.msk [vmem:[%s222 + $0x378] sm:$0xff] %vm352, %v3423
        %3552 = vst.msk [vmem:[%s222 + $0x380] sm:$0xff] %vm352, %v3424
        %3553 = vst.msk [vmem:[%s222 + $0x388] sm:$0xff] %vm352, %v3425
        %3554 = vst.msk [vmem:[%s222 + $0x390] sm:$0xff] %vm352, %v3426
        %3555 = vst.msk [vmem:[%s222 + $0x398] sm:$0xff] %vm352, %v3427
        %3556 = vst.msk [vmem:[%s222 + $0x3a0] sm:$0xff] %vm352, %v3428
        %3557 = vst.msk [vmem:[%s222 + $0x3a8] sm:$0xff] %vm352, %v3429
        %3558 = vst.msk [vmem:[%s222 + $0x3b0] sm:$0xff] %vm352, %v3430
        %3559 = vst.msk [vmem:[%s222 + $0x3b8] sm:$0xff] %vm352, %v3431
        %3560 = vst.msk [vmem:[%s222 + $0x3c0] sm:$0xff] %vm352, %v3432
        %3561 = vst.msk [vmem:[%s222 + $0x3c8] sm:$0xff] %vm352, %v3433
        %3562 = vst.msk [vmem:[%s222 + $0x3d0] sm:$0xff] %vm352, %v3434
        %3563 = vst.msk [vmem:[%s222 + $0x3d8] sm:$0xff] %vm352, %v3435
        %3564 = vst.msk [vmem:[%s222 + $0x3e0] sm:$0xff] %vm352, %v3436
        %3565 = vst.msk [vmem:[%s222 + $0x3e8] sm:$0xff] %vm352, %v3437
        %3566 = vst.msk [vmem:[%s222 + $0x3f0] sm:$0xff] %vm352, %v3438
        %3567 = vst.msk [vmem:[%s222 + $0x3f8] sm:$0xff] %vm352, %v3439
        %s3568 = smul.u32 128, %s18
        %p3569 = scmp.lt.s32.totalorder %s3568, 255
        %s3570 = scalar_select %p3569, %s3568, 255
        %s3571 = smul.addr %s3570, 8
        %s3572 = scalar_lea.vmem %s3, %s3571
        // Predicated region
        $region45: #{word_aggregation_forward.2} parent=31 // pred_check
          %p3573 = pneg %p104
        $region46: #{word_aggregation_forward.2} parent=31 // pred_check_branch
          %3575 = sbr.rel (%p3573) target = $region48
        $region47: #{word_aggregation_forward.2} parent=31 // pred_region
          %s3576 = smul.u32 128, %s18
        $region48: #{word_aggregation_forward.2} parent=31 // pred_fallthru
          _
      $region32: #{word_aggregation_forward.2} parent=5 // pred_fallthru
        _
      %p3577 = scmp.le.s32.totalorder 2, %s13
      // Predicated region
      $region49: #{word_aggregation_forward.2} parent=5 // pred_check
        %p3578 = pneg %p3577
      $region50: #{word_aggregation_forward.2} parent=5 // pred_check_branch
        %3580 = sbr.rel (%p3578) target = $region52
      $region51: #{word_aggregation_forward.2} parent=5 // pred_region
        %s3581 = ssub.s32 %s13, 2
        // Predicated region
        $region53: #{word_aggregation_forward.2} parent=51 // pred_check
          %p3582 = pneg %p110
        $region54: #{word_aggregation_forward.2} parent=51 // pred_check_branch
          %3584 = sbr.rel (%p3582) target = $region56
        $region55: #{word_aggregation_forward.2} parent=51 // pred_region
          %s3585 = smul.u32 128, %s19
          %p3586 = scmp.lt.s32.totalorder %s3585, 255
          %s3587 = scalar_select %p3586, %s3585, 255
          %s3588 = smul.addr %s3587, 8
          %s3589 = scalar_lea.vmem %s3, %s3588
        $region56: #{word_aggregation_forward.2} parent=51 // pred_fallthru
          _
      $region52: #{word_aggregation_forward.2} parent=5 // pred_fallthru
        _
    $region6: #{word_aggregation_forward.2} parent=1 // loop_footer
      %s17 = sadd.s32 1, %s13
    $region7: #{word_aggregation_forward.2} parent=1 // loop_footer_branch
      %12 = sbr.rel target = $region3
    $region8: #{word_aggregation_forward.2} parent=1 // loop_exit
      _
    %3590 = vsyncpa [#allocation3], 1
    %s3591 = scalar_lea.sflag [#allocation3], 1
    %3592 = vsyncpa %s3591, 1
    %3593 = vsyncpa [#allocation5], 1

</llo_original>
